<compile_context>
chip_gen: v6e
topology: v6e:2x2x1
jax: 0.10.0
libtpu: 0.0.40
codegen_flags: <defaults>
</compile_context>

<pallas_src>
import math

import jax
import jax.numpy as jnp
from jax.experimental import pallas as pl
from jax.experimental.pallas import tpu as pltpu

# ---------------- small config (module defaults scaled down) ----------------
HIDDEN = 32          # config['hidden_size'] (default 512 -> 32 for this synthetic run)
TAGS = 6             # config['tag_num'] (default 6)
N_LAYERS = 2
N_HEADS = 4
HEAD_DIM = HIDDEN // N_HEADS
FFN = 4 * HIDDEN
VOCAB = 128
MAX_LEN = 16
SEQ = 8
BATCH = 2
LN_EPS = 1e-12
OUT_PAD = 128        # lane-dense padded width of the cls-head output
NEG_INF = -1e30


def _layernorm(x, gamma, beta):
    mu = jnp.mean(x, axis=-1, keepdims=True)
    var = jnp.mean((x - mu) ** 2, axis=-1, keepdims=True)
    return (x - mu) * jax.lax.rsqrt(var + LN_EPS) * gamma + beta


# ---------------- fused whole-forward Pallas kernel (single grid step) ----------------
def make_kernel(n_layers, batch, seq):
    bs = batch * seq

    def kernel(ids_ref, emb_ref, pos_ref, embln_ref, bias_ref, pool_ref, *rest):
        layer_refs = rest[: 6 * n_layers]
        wh1_ref, bh1_ref, wh2_ref, bh2_ref, out_ref = rest[6 * n_layers:]

        vocab, hidden = emb_ref.shape

        # ---- embedding: in-kernel gather (one-hot matmul on VMEM-resident table) ----
        ids = ids_ref[...]                                                  # (BS, 1) i32
        one_hot = (ids == jax.lax.broadcasted_iota(jnp.int32, (bs, vocab), 1)
                   ).astype(jnp.float32)                                    # (BS, V)
        tok = jnp.dot(one_hot, emb_ref[...], preferred_element_type=jnp.float32)
        h = _layernorm(tok + pos_ref[...], embln_ref[0], embln_ref[1])      # (BS, H)

        attn_bias = bias_ref[...]                                           # (BS, BS)

        # ---- encoder layers (all weights VMEM-resident) ----
        for li in range(n_layers):
            wpack, bpack, w1, b1, w2, vecs = layer_refs[6 * li: 6 * li + 6]
            x = h                                                           # (BS, H)

            # single packed matmul: [Q*1/sqrt(d) | K | V'_0 .. V'_{NH-1}] with Wo folded
            qkv = jnp.dot(x, wpack[...],
                          preferred_element_type=jnp.float32) + bpack[...]  # (BS, 2H+NH*H)
            q = qkv[:, :hidden]
            k = qkv[:, hidden:2 * hidden]

            attn = vecs[0]                                                  # b_o, (1, H)
            for hh in range(N_HEADS):
                q_h = q[:, hh * HEAD_DIM:(hh + 1) * HEAD_DIM]               # (BS, HD)
                k_h = k[:, hh * HEAD_DIM:(hh + 1) * HEAD_DIM]               # (BS, HD)
                v_h = qkv[:, 2 * hidden + hh * hidden:
                             2 * hidden + (hh + 1) * hidden]                # (BS, H)
                s = jnp.einsum("qd,kd->qk", q_h, k_h,
                               preferred_element_type=jnp.float32)          # (BS, BS)
                s = s + attn_bias                                           # block-diag mask
                s = s - jnp.max(s, axis=-1, keepdims=True)
                p = jnp.exp(s)
                p = p / jnp.sum(p, axis=-1, keepdims=True)
                attn = attn + jnp.dot(p, v_h, preferred_element_type=jnp.float32)

            h1 = _layernorm(x + attn, vecs[1], vecs[2])

            # FFN
            f = jnp.dot(h1, w1[...], preferred_element_type=jnp.float32) + b1[...]
            # TODO(synk): torch nn.GELU() default is the exact erf form; tanh approx is
            # used here for a guaranteed Mosaic lowering (tiny numeric drift).
            f = jax.nn.gelu(f, approximate=True)
            f = jnp.dot(f, w2[...], preferred_element_type=jnp.float32) + vecs[3]
            h = _layernorm(h1 + f, vecs[4], vecs[5])

        # ---- mean pool per batch element (pooling matmul) + cls head ----
        pooled = jnp.dot(pool_ref[...], h, preferred_element_type=jnp.float32)  # (B, H)
        z = jnp.dot(pooled, wh1_ref[...],
                    preferred_element_type=jnp.float32) + bh1_ref[...]
        z = jnp.maximum(z, 0.1 * z)                                         # LeakyReLU(0.1)
        out_ref[...] = jnp.dot(z, wh2_ref[...],
                               preferred_element_type=jnp.float32) + bh2_ref[...]

    return kernel


# ---------------- wrapper ----------------
def classifier_forward(x_tokens, params):
    B, S = x_tokens.shape
    n_layers = len(params["layers"])
    BS = B * S

    ids2 = x_tokens.astype(jnp.int32).reshape(BS, 1)                  # (BS, 1)
    pos_tiled = jnp.tile(params["pos_emb"][:S], (B, 1))               # (BS, H)

    # block-diagonal additive attention bias (0 within a batch element, -inf across)
    rb = jnp.arange(BS)[:, None] // S
    cb = jnp.arange(BS)[None, :] // S
    attn_bias = jnp.where(rb == cb, 0.0, NEG_INF).astype(jnp.float32)  # (BS, BS)
    # per-batch mean-pool matrix
    pool_mat = jnp.where(jnp.arange(B)[:, None] == cb[:1, :].repeat(B, 0) * 0 + cb,
                         1.0 / S, 0.0).astype(jnp.float32)             # (B, BS)

    inputs = [ids2, params["word_emb"], pos_tiled, params["emb_ln"], attn_bias, pool_mat]
    for layer in params["layers"]:
        inputs.extend(layer)
    inputs.extend(params["head"])

    def const_spec(p):
        nd = p.ndim
        return pl.BlockSpec(p.shape, lambda i, _nd=nd: (0,) * _nd)

    out_padded = pl.pallas_call(
        make_kernel(n_layers, B, S),
        out_shape=jax.ShapeDtypeStruct((B, OUT_PAD), jnp.float32),
        grid_spec=pltpu.PrefetchScalarGridSpec(
            num_scalar_prefetch=0,
            grid=(1,),                                   # single fused step, no pipelining
            in_specs=[const_spec(p) for p in inputs],
            out_specs=pl.BlockSpec((B, OUT_PAD), lambda i: (0, 0)),
        ),
        compiler_params=pltpu.CompilerParams(
            dimension_semantics=("arbitrary",)),
    )(*inputs)
    return out_padded[:, :TAGS]


# ---------------- deterministic parameter init (pre-packed for the kernel) ----------------
def init_params(key):
    scale_q = 1.0 / math.sqrt(HEAD_DIM)

    def dense(k, fan_in, fan_out):
        kw, kb = jax.random.split(k)
        w = jax.random.normal(kw, (fan_in, fan_out), jnp.float32) * 0.02
        b = jax.random.normal(kb, (fan_out,), jnp.float32) * 0.02
        return w, b

    keys = jax.random.split(key, 3 + N_LAYERS)
    params = {
        "word_emb": jax.random.normal(keys[0], (VOCAB, HIDDEN), jnp.float32) * 0.02,
        "pos_emb": jax.random.normal(keys[1], (MAX_LEN, HIDDEN), jnp.float32) * 0.02,
        "emb_ln": jnp.stack([jnp.ones((HIDDEN,), jnp.float32),
                             jnp.zeros((HIDDEN,), jnp.float32)])[:, None, :],   # (2,1,H)
        "layers": [],
    }
    for i in range(N_LAYERS):
        lk = jax.random.split(keys[2 + i], 6)
        wq, bq = dense(lk[0], HIDDEN, HIDDEN)
        wk, bk = dense(lk[1], HIDDEN, HIDDEN)
        wv, bv = dense(lk[2], HIDDEN, HIDDEN)
        wo, bo = dense(lk[3], HIDDEN, HIDDEN)
        w1, b1 = dense(lk[4], HIDDEN, FFN)
        w2, b2 = dense(lk[5], FFN, HIDDEN)
        ln1g = jnp.ones((HIDDEN,), jnp.float32)
        ln1b = jnp.zeros((HIDDEN,), jnp.float32)
        ln2g = jnp.ones((HIDDEN,), jnp.float32)
        ln2b = jnp.zeros((HIDDEN,), jnp.float32)

        # fold attention scale into Wq/bq; fold Wo into V per head (W'_vo,h = Wv_h @ Wo_h).
        # The V-bias folds exactly because softmax rows sum to 1.
        wvo, bvo = [], []
        for hh in range(N_HEADS):
            wv_h = wv[:, hh * HEAD_DIM:(hh + 1) * HEAD_DIM]      # (H, HD)
            bv_h = bv[hh * HEAD_DIM:(hh + 1) * HEAD_DIM]         # (HD,)
            wo_h = wo[hh * HEAD_DIM:(hh + 1) * HEAD_DIM, :]      # (HD, H)
            wvo.append(wv_h @ wo_h)                              # (H, H)
            bvo.append(bv_h @ wo_h)                              # (H,)
        wpack = jnp.concatenate([wq * scale_q, wk] + wvo, axis=1)            # (H, 2H+NH*H)
        bpack = jnp.concatenate([bq * scale_q, bk] + bvo)[None, :]           # (1, 2H+NH*H)
        vecs = jnp.stack([bo, ln1g, ln1b, b2, ln2g, ln2b], axis=0)[:, None, :]  # (6,1,H)
        params["layers"].append([wpack, bpack, w1, b1[None, :], w2, vecs])

    hk = jax.random.split(keys[2 + N_LAYERS], 2)
    hw1, hb1 = dense(hk[0], HIDDEN, HIDDEN)   # nn.Linear(hidden, hidden)
    hw2, hb2 = dense(hk[1], HIDDEN, TAGS)     # nn.Linear(hidden, tag_num)
    wh2p = jnp.zeros((HIDDEN, OUT_PAD), jnp.float32).at[:, :TAGS].set(hw2)
    bh2p = jnp.zeros((1, OUT_PAD), jnp.float32).at[0, :TAGS].set(hb2)
    params["head"] = [hw1, hb1[None, :], wh2p, bh2p]
    return params


if __name__ == "__main__":
    root = jax.random.PRNGKey(0)
    k_in, k_par = jax.random.split(root)
    x = jax.random.randint(k_in, (BATCH, SEQ), 0, VOCAB, dtype=jnp.int32)
    params = init_params(k_par)

    logits = classifier_forward(x, params)   # (BATCH, TAGS) == Classifier.forward(x)
    logits = jax.block_until_ready(logits)
    assert logits.shape == (BATCH, TAGS) and logits.dtype == jnp.float32
    assert bool(jnp.all(jnp.isfinite(logits)))
    print("KERNEL_OK")
</pallas_src>

<mosaic_0001>
module attributes {stable_mosaic.version = 11 : i64} {
  func.func @kernel(%arg0: i32, %arg1: memref<16x1xi32, #tpu.memory_space<vmem>>, %arg2: memref<128x32xf32, #tpu.memory_space<vmem>>, %arg3: memref<16x32xf32, #tpu.memory_space<vmem>>, %arg4: memref<2x1x32xf32, #tpu.memory_space<vmem>>, %arg5: memref<16x16xf32, #tpu.memory_space<vmem>>, %arg6: memref<2x16xf32, #tpu.memory_space<vmem>>, %arg7: memref<32x192xf32, #tpu.memory_space<vmem>>, %arg8: memref<1x192xf32, #tpu.memory_space<vmem>>, %arg9: memref<32x128xf32, #tpu.memory_space<vmem>>, %arg10: memref<1x128xf32, #tpu.memory_space<vmem>>, %arg11: memref<128x32xf32, #tpu.memory_space<vmem>>, %arg12: memref<6x1x32xf32, #tpu.memory_space<vmem>>, %arg13: memref<32x192xf32, #tpu.memory_space<vmem>>, %arg14: memref<1x192xf32, #tpu.memory_space<vmem>>, %arg15: memref<32x128xf32, #tpu.memory_space<vmem>>, %arg16: memref<1x128xf32, #tpu.memory_space<vmem>>, %arg17: memref<128x32xf32, #tpu.memory_space<vmem>>, %arg18: memref<6x1x32xf32, #tpu.memory_space<vmem>>, %arg19: memref<32x32xf32, #tpu.memory_space<vmem>>, %arg20: memref<1x32xf32, #tpu.memory_space<vmem>>, %arg21: memref<32x128xf32, #tpu.memory_space<vmem>>, %arg22: memref<1x128xf32, #tpu.memory_space<vmem>>, %arg23: memref<2x128xf32, #tpu.memory_space<vmem>>) attributes {dimension_semantics = [#tpu.dimension_semantics<arbitrary>], iteration_bounds = array<i64: 1>, scalar_prefetch = 0 : i64, scratch_operands = 0 : i64, tpu.core_type = #tpu.core_type<tc>, window_params = [{pipeline_mode = #tpu.pipeline_mode<synchronous>, transform_indices = @transform_0, window_bounds = array<i64: 16, 1>}, {pipeline_mode = #tpu.pipeline_mode<synchronous>, transform_indices = @transform_1, window_bounds = array<i64: 128, 32>}, {pipeline_mode = #tpu.pipeline_mode<synchronous>, transform_indices = @transform_2, window_bounds = array<i64: 16, 32>}, {pipeline_mode = #tpu.pipeline_mode<synchronous>, transform_indices = @transform_3, window_bounds = array<i64: 2, 1, 32>}, {pipeline_mode = #tpu.pipeline_mode<synchronous>, transform_indices = @transform_4, window_bounds = array<i64: 16, 16>}, {pipeline_mode = #tpu.pipeline_mode<synchronous>, transform_indices = @transform_5, window_bounds = array<i64: 2, 16>}, {pipeline_mode = #tpu.pipeline_mode<synchronous>, transform_indices = @transform_6, window_bounds = array<i64: 32, 192>}, {pipeline_mode = #tpu.pipeline_mode<synchronous>, transform_indices = @transform_7, window_bounds = array<i64: 1, 192>}, {pipeline_mode = #tpu.pipeline_mode<synchronous>, transform_indices = @transform_8, window_bounds = array<i64: 32, 128>}, {pipeline_mode = #tpu.pipeline_mode<synchronous>, transform_indices = @transform_9, window_bounds = array<i64: 1, 128>}, {pipeline_mode = #tpu.pipeline_mode<synchronous>, transform_indices = @transform_10, window_bounds = array<i64: 128, 32>}, {pipeline_mode = #tpu.pipeline_mode<synchronous>, transform_indices = @transform_11, window_bounds = array<i64: 6, 1, 32>}, {pipeline_mode = #tpu.pipeline_mode<synchronous>, transform_indices = @transform_12, window_bounds = array<i64: 32, 192>}, {pipeline_mode = #tpu.pipeline_mode<synchronous>, transform_indices = @transform_13, window_bounds = array<i64: 1, 192>}, {pipeline_mode = #tpu.pipeline_mode<synchronous>, transform_indices = @transform_14, window_bounds = array<i64: 32, 128>}, {pipeline_mode = #tpu.pipeline_mode<synchronous>, transform_indices = @transform_15, window_bounds = array<i64: 1, 128>}, {pipeline_mode = #tpu.pipeline_mode<synchronous>, transform_indices = @transform_16, window_bounds = array<i64: 128, 32>}, {pipeline_mode = #tpu.pipeline_mode<synchronous>, transform_indices = @transform_17, window_bounds = array<i64: 6, 1, 32>}, {pipeline_mode = #tpu.pipeline_mode<synchronous>, transform_indices = @transform_18, window_bounds = array<i64: 32, 32>}, {pipeline_mode = #tpu.pipeline_mode<synchronous>, transform_indices = @transform_19, window_bounds = array<i64: 1, 32>}, {pipeline_mode = #tpu.pipeline_mode<synchronous>, transform_indices = @transform_20, window_bounds = array<i64: 32, 128>}, {pipeline_mode = #tpu.pipeline_mode<synchronous>, transform_indices = @transform_21, window_bounds = array<i64: 1, 128>}, {pipeline_mode = #tpu.pipeline_mode<synchronous>, transform_indices = @transform_22, window_bounds = array<i64: 2, 128>}]} {
    %c0 = arith.constant 0 : index
    %c0_0 = arith.constant 0 : index
    %0 = vector.load %arg1[%c0, %c0_0] : memref<16x1xi32, #tpu.memory_space<vmem>>, vector<16x1xi32>
    %1 = tpu.iota {dimensions = array<i32: 1>} : vector<16x128xi32>
    %2 = vector.broadcast %0 : vector<16x1xi32> to vector<16x128xi32>
    %3 = arith.cmpi eq, %2, %1 : vector<16x128xi32>
    %4 = arith.extui %3 : vector<16x128xi1> to vector<16x128xi32>
    %5 = arith.sitofp %4 : vector<16x128xi32> to vector<16x128xf32>
    %c0_1 = arith.constant 0 : index
    %c0_2 = arith.constant 0 : index
    %6 = vector.load %arg2[%c0_1, %c0_2] : memref<128x32xf32, #tpu.memory_space<vmem>>, vector<128x32xf32>
    %cst = arith.constant dense<0.000000e+00> : vector<16x32xf32>
    %7 = tpu.matmul %5, %6, %cst {dimension_numbers = #tpu.dot_dimension_numbers<[1], [0], [0], [1], [0, 0, 1, 1], [], []>} : vector<16x128xf32>, vector<128x32xf32>, vector<16x32xf32> -> vector<16x32xf32>
    %c0_3 = arith.constant 0 : index
    %c0_4 = arith.constant 0 : index
    %8 = vector.load %arg3[%c0_3, %c0_4] : memref<16x32xf32, #tpu.memory_space<vmem>>, vector<16x32xf32>
    %9 = arith.addf %7, %8 : vector<16x32xf32>
    %c0_5 = arith.constant 0 : index
    %c0_6 = arith.constant 0 : index
    %c0_7 = arith.constant 0 : index
    %10 = vector.load %arg4[%c0_5, %c0_6, %c0_7] : memref<2x1x32xf32, #tpu.memory_space<vmem>>, vector<1x1x32xf32>
    %11 = vector.shape_cast %10 : vector<1x1x32xf32> to vector<1x32xf32>
    %c1 = arith.constant 1 : index
    %c0_8 = arith.constant 0 : index
    %c0_9 = arith.constant 0 : index
    %12 = vector.load %arg4[%c1, %c0_8, %c0_9] : memref<2x1x32xf32, #tpu.memory_space<vmem>>, vector<1x1x32xf32>
    %13 = vector.shape_cast %12 : vector<1x1x32xf32> to vector<1x32xf32>
    %cst_10 = arith.constant dense<0.000000e+00> : vector<16xf32>
    %14 = vector.multi_reduction <add>, %9, %cst_10 [1] : vector<16x32xf32> to vector<16xf32>
    %15 = vector.shape_cast %14 : vector<16xf32> to vector<16x1xf32>
    %cst_11 = arith.constant 3.200000e+01 : f32
    %16 = vector.broadcast %cst_11 : f32 to vector<16x1xf32>
    %17 = arith.divf %15, %16 : vector<16x1xf32>
    %18 = vector.broadcast %17 : vector<16x1xf32> to vector<16x32xf32>
    %19 = arith.subf %9, %18 : vector<16x32xf32>
    %20 = arith.mulf %19, %19 : vector<16x32xf32>
    %cst_12 = arith.constant dense<0.000000e+00> : vector<16xf32>
    %21 = vector.multi_reduction <add>, %20, %cst_12 [1] : vector<16x32xf32> to vector<16xf32>
    %22 = vector.shape_cast %21 : vector<16xf32> to vector<16x1xf32>
    %cst_13 = arith.constant 3.200000e+01 : f32
    %23 = vector.broadcast %cst_13 : f32 to vector<16x1xf32>
    %24 = arith.divf %22, %23 : vector<16x1xf32>
    %25 = vector.broadcast %17 : vector<16x1xf32> to vector<16x32xf32>
    %26 = arith.subf %9, %25 : vector<16x32xf32>
    %cst_14 = arith.constant 9.99999996E-13 : f32
    %27 = vector.broadcast %cst_14 : f32 to vector<16x1xf32>
    %28 = arith.addf %24, %27 : vector<16x1xf32>
    %29 = math.rsqrt %28 : vector<16x1xf32>
    %30 = vector.broadcast %29 : vector<16x1xf32> to vector<16x32xf32>
    %31 = arith.mulf %26, %30 : vector<16x32xf32>
    %32 = vector.broadcast %11 : vector<1x32xf32> to vector<16x32xf32>
    %33 = arith.mulf %31, %32 : vector<16x32xf32>
    %34 = vector.broadcast %13 : vector<1x32xf32> to vector<16x32xf32>
    %35 = arith.addf %33, %34 : vector<16x32xf32>
    %c0_15 = arith.constant 0 : index
    %c0_16 = arith.constant 0 : index
    %36 = vector.load %arg5[%c0_15, %c0_16] : memref<16x16xf32, #tpu.memory_space<vmem>>, vector<16x16xf32>
    %c0_17 = arith.constant 0 : index
    %c0_18 = arith.constant 0 : index
    %37 = vector.load %arg7[%c0_17, %c0_18] : memref<32x192xf32, #tpu.memory_space<vmem>>, vector<32x192xf32>
    %cst_19 = arith.constant dense<0.000000e+00> : vector<16x192xf32>
    %38 = tpu.matmul %35, %37, %cst_19 {dimension_numbers = #tpu.dot_dimension_numbers<[1], [0], [0], [1], [0, 0, 1, 1], [], []>} : vector<16x32xf32>, vector<32x192xf32>, vector<16x192xf32> -> vector<16x192xf32>
    %c0_20 = arith.constant 0 : index
    %c0_21 = arith.constant 0 : index
    %39 = vector.load %arg8[%c0_20, %c0_21] : memref<1x192xf32, #tpu.memory_space<vmem>>, vector<1x192xf32>
    %40 = vector.broadcast %39 : vector<1x192xf32> to vector<16x192xf32>
    %41 = arith.addf %38, %40 : vector<16x192xf32>
    %42 = vector.extract_strided_slice %41 {offsets = [0, 0], sizes = [16, 32], strides = [1, 1]} : vector<16x192xf32> to vector<16x32xf32>
    %43 = vector.extract_strided_slice %41 {offsets = [0, 32], sizes = [16, 32], strides = [1, 1]} : vector<16x192xf32> to vector<16x32xf32>
    %c0_22 = arith.constant 0 : index
    %c0_23 = arith.constant 0 : index
    %c0_24 = arith.constant 0 : index
    %44 = vector.load %arg12[%c0_22, %c0_23, %c0_24] : memref<6x1x32xf32, #tpu.memory_space<vmem>>, vector<1x1x32xf32>
    %45 = vector.shape_cast %44 : vector<1x1x32xf32> to vector<1x32xf32>
    %46 = vector.extract_strided_slice %42 {offsets = [0, 0], sizes = [16, 8], strides = [1, 1]} : vector<16x32xf32> to vector<16x8xf32>
    %47 = vector.extract_strided_slice %43 {offsets = [0, 0], sizes = [16, 8], strides = [1, 1]} : vector<16x32xf32> to vector<16x8xf32>
    %48 = vector.extract_strided_slice %41 {offsets = [0, 64], sizes = [16, 32], strides = [1, 1]} : vector<16x192xf32> to vector<16x32xf32>
    "tpu.trace_start"() <{level = 10 : i32, message = "qd,kd->qk"}> : () -> ()
    %cst_25 = arith.constant dense<0.000000e+00> : vector<16x16xf32>
    %49 = tpu.matmul %46, %47, %cst_25 {dimension_numbers = #tpu.dot_dimension_numbers<[1], [1], [0], [0], [0, 0, 1, 0], [], []>} : vector<16x8xf32>, vector<16x8xf32>, vector<16x16xf32> -> vector<16x16xf32>
    "tpu.trace_stop"() : () -> ()
    %50 = arith.addf %49, %36 : vector<16x16xf32>
    %cst_26 = arith.constant dense<0xFF800000> : vector<16xf32>
    %51 = vector.multi_reduction <maximumf>, %50, %cst_26 [1] : vector<16x16xf32> to vector<16xf32>
    %52 = vector.shape_cast %51 : vector<16xf32> to vector<16x1xf32>
    %53 = vector.broadcast %52 : vector<16x1xf32> to vector<16x16xf32>
    %54 = arith.subf %50, %53 : vector<16x16xf32>
    %55 = math.exp %54 : vector<16x16xf32>
    %cst_27 = arith.constant dense<0.000000e+00> : vector<16xf32>
    %56 = vector.multi_reduction <add>, %55, %cst_27 [1] : vector<16x16xf32> to vector<16xf32>
    %57 = vector.shape_cast %56 : vector<16xf32> to vector<16x1xf32>
    %58 = vector.broadcast %57 : vector<16x1xf32> to vector<16x16xf32>
    %59 = arith.divf %55, %58 : vector<16x16xf32>
    %cst_28 = arith.constant dense<0.000000e+00> : vector<16x32xf32>
    %60 = tpu.matmul %59, %48, %cst_28 {dimension_numbers = #tpu.dot_dimension_numbers<[1], [0], [0], [1], [0, 0, 1, 1], [], []>} : vector<16x16xf32>, vector<16x32xf32>, vector<16x32xf32> -> vector<16x32xf32>
    %61 = vector.broadcast %45 : vector<1x32xf32> to vector<16x32xf32>
    %62 = arith.addf %61, %60 : vector<16x32xf32>
    %63 = vector.extract_strided_slice %42 {offsets = [0, 8], sizes = [16, 8], strides = [1, 1]} : vector<16x32xf32> to vector<16x8xf32>
    %64 = vector.extract_strided_slice %43 {offsets = [0, 8], sizes = [16, 8], strides = [1, 1]} : vector<16x32xf32> to vector<16x8xf32>
    %65 = vector.extract_strided_slice %41 {offsets = [0, 96], sizes = [16, 32], strides = [1, 1]} : vector<16x192xf32> to vector<16x32xf32>
    "tpu.trace_start"() <{level = 10 : i32, message = "qd,kd->qk"}> : () -> ()
    %cst_29 = arith.constant dense<0.000000e+00> : vector<16x16xf32>
    %66 = tpu.matmul %63, %64, %cst_29 {dimension_numbers = #tpu.dot_dimension_numbers<[1], [1], [0], [0], [0, 0, 1, 0], [], []>} : vector<16x8xf32>, vector<16x8xf32>, vector<16x16xf32> -> vector<16x16xf32>
    "tpu.trace_stop"() : () -> ()
    %67 = arith.addf %66, %36 : vector<16x16xf32>
    %cst_30 = arith.constant dense<0xFF800000> : vector<16xf32>
    %68 = vector.multi_reduction <maximumf>, %67, %cst_30 [1] : vector<16x16xf32> to vector<16xf32>
    %69 = vector.shape_cast %68 : vector<16xf32> to vector<16x1xf32>
    %70 = vector.broadcast %69 : vector<16x1xf32> to vector<16x16xf32>
    %71 = arith.subf %67, %70 : vector<16x16xf32>
    %72 = math.exp %71 : vector<16x16xf32>
    %cst_31 = arith.constant dense<0.000000e+00> : vector<16xf32>
    %73 = vector.multi_reduction <add>, %72, %cst_31 [1] : vector<16x16xf32> to vector<16xf32>
    %74 = vector.shape_cast %73 : vector<16xf32> to vector<16x1xf32>
    %75 = vector.broadcast %74 : vector<16x1xf32> to vector<16x16xf32>
    %76 = arith.divf %72, %75 : vector<16x16xf32>
    %cst_32 = arith.constant dense<0.000000e+00> : vector<16x32xf32>
    %77 = tpu.matmul %76, %65, %cst_32 {dimension_numbers = #tpu.dot_dimension_numbers<[1], [0], [0], [1], [0, 0, 1, 1], [], []>} : vector<16x16xf32>, vector<16x32xf32>, vector<16x32xf32> -> vector<16x32xf32>
    %78 = arith.addf %62, %77 : vector<16x32xf32>
    %79 = vector.extract_strided_slice %42 {offsets = [0, 16], sizes = [16, 8], strides = [1, 1]} : vector<16x32xf32> to vector<16x8xf32>
    %80 = vector.extract_strided_slice %43 {offsets = [0, 16], sizes = [16, 8], strides = [1, 1]} : vector<16x32xf32> to vector<16x8xf32>
    %81 = vector.extract_strided_slice %41 {offsets = [0, 128], sizes = [16, 32], strides = [1, 1]} : vector<16x192xf32> to vector<16x32xf32>
    "tpu.trace_start"() <{level = 10 : i32, message = "qd,kd->qk"}> : () -> ()
    %cst_33 = arith.constant dense<0.000000e+00> : vector<16x16xf32>
    %82 = tpu.matmul %79, %80, %cst_33 {dimension_numbers = #tpu.dot_dimension_numbers<[1], [1], [0], [0], [0, 0, 1, 0], [], []>} : vector<16x8xf32>, vector<16x8xf32>, vector<16x16xf32> -> vector<16x16xf32>
    "tpu.trace_stop"() : () -> ()
    %83 = arith.addf %82, %36 : vector<16x16xf32>
    %cst_34 = arith.constant dense<0xFF800000> : vector<16xf32>
    %84 = vector.multi_reduction <maximumf>, %83, %cst_34 [1] : vector<16x16xf32> to vector<16xf32>
    %85 = vector.shape_cast %84 : vector<16xf32> to vector<16x1xf32>
    %86 = vector.broadcast %85 : vector<16x1xf32> to vector<16x16xf32>
    %87 = arith.subf %83, %86 : vector<16x16xf32>
    %88 = math.exp %87 : vector<16x16xf32>
    %cst_35 = arith.constant dense<0.000000e+00> : vector<16xf32>
    %89 = vector.multi_reduction <add>, %88, %cst_35 [1] : vector<16x16xf32> to vector<16xf32>
    %90 = vector.shape_cast %89 : vector<16xf32> to vector<16x1xf32>
    %91 = vector.broadcast %90 : vector<16x1xf32> to vector<16x16xf32>
    %92 = arith.divf %88, %91 : vector<16x16xf32>
    %cst_36 = arith.constant dense<0.000000e+00> : vector<16x32xf32>
    %93 = tpu.matmul %92, %81, %cst_36 {dimension_numbers = #tpu.dot_dimension_numbers<[1], [0], [0], [1], [0, 0, 1, 1], [], []>} : vector<16x16xf32>, vector<16x32xf32>, vector<16x32xf32> -> vector<16x32xf32>
    %94 = arith.addf %78, %93 : vector<16x32xf32>
    %95 = vector.extract_strided_slice %42 {offsets = [0, 24], sizes = [16, 8], strides = [1, 1]} : vector<16x32xf32> to vector<16x8xf32>
    %96 = vector.extract_strided_slice %43 {offsets = [0, 24], sizes = [16, 8], strides = [1, 1]} : vector<16x32xf32> to vector<16x8xf32>
    %97 = vector.extract_strided_slice %41 {offsets = [0, 160], sizes = [16, 32], strides = [1, 1]} : vector<16x192xf32> to vector<16x32xf32>
    "tpu.trace_start"() <{level = 10 : i32, message = "qd,kd->qk"}> : () -> ()
    %cst_37 = arith.constant dense<0.000000e+00> : vector<16x16xf32>
    %98 = tpu.matmul %95, %96, %cst_37 {dimension_numbers = #tpu.dot_dimension_numbers<[1], [1], [0], [0], [0, 0, 1, 0], [], []>} : vector<16x8xf32>, vector<16x8xf32>, vector<16x16xf32> -> vector<16x16xf32>
    "tpu.trace_stop"() : () -> ()
    %99 = arith.addf %98, %36 : vector<16x16xf32>
    %cst_38 = arith.constant dense<0xFF800000> : vector<16xf32>
    %100 = vector.multi_reduction <maximumf>, %99, %cst_38 [1] : vector<16x16xf32> to vector<16xf32>
    %101 = vector.shape_cast %100 : vector<16xf32> to vector<16x1xf32>
    %102 = vector.broadcast %101 : vector<16x1xf32> to vector<16x16xf32>
    %103 = arith.subf %99, %102 : vector<16x16xf32>
    %104 = math.exp %103 : vector<16x16xf32>
    %cst_39 = arith.constant dense<0.000000e+00> : vector<16xf32>
    %105 = vector.multi_reduction <add>, %104, %cst_39 [1] : vector<16x16xf32> to vector<16xf32>
    %106 = vector.shape_cast %105 : vector<16xf32> to vector<16x1xf32>
    %107 = vector.broadcast %106 : vector<16x1xf32> to vector<16x16xf32>
    %108 = arith.divf %104, %107 : vector<16x16xf32>
    %cst_40 = arith.constant dense<0.000000e+00> : vector<16x32xf32>
    %109 = tpu.matmul %108, %97, %cst_40 {dimension_numbers = #tpu.dot_dimension_numbers<[1], [0], [0], [1], [0, 0, 1, 1], [], []>} : vector<16x16xf32>, vector<16x32xf32>, vector<16x32xf32> -> vector<16x32xf32>
    %110 = arith.addf %94, %109 : vector<16x32xf32>
    %111 = arith.addf %35, %110 : vector<16x32xf32>
    %c1_41 = arith.constant 1 : index
    %c0_42 = arith.constant 0 : index
    %c0_43 = arith.constant 0 : index
    %112 = vector.load %arg12[%c1_41, %c0_42, %c0_43] : memref<6x1x32xf32, #tpu.memory_space<vmem>>, vector<1x1x32xf32>
    %113 = vector.shape_cast %112 : vector<1x1x32xf32> to vector<1x32xf32>
    %c2 = arith.constant 2 : index
    %c0_44 = arith.constant 0 : index
    %c0_45 = arith.constant 0 : index
    %114 = vector.load %arg12[%c2, %c0_44, %c0_45] : memref<6x1x32xf32, #tpu.memory_space<vmem>>, vector<1x1x32xf32>
    %115 = vector.shape_cast %114 : vector<1x1x32xf32> to vector<1x32xf32>
    %cst_46 = arith.constant dense<0.000000e+00> : vector<16xf32>
    %116 = vector.multi_reduction <add>, %111, %cst_46 [1] : vector<16x32xf32> to vector<16xf32>
    %117 = vector.shape_cast %116 : vector<16xf32> to vector<16x1xf32>
    %cst_47 = arith.constant 3.200000e+01 : f32
    %118 = vector.broadcast %cst_47 : f32 to vector<16x1xf32>
    %119 = arith.divf %117, %118 : vector<16x1xf32>
    %120 = vector.broadcast %119 : vector<16x1xf32> to vector<16x32xf32>
    %121 = arith.subf %111, %120 : vector<16x32xf32>
    %122 = arith.mulf %121, %121 : vector<16x32xf32>
    %cst_48 = arith.constant dense<0.000000e+00> : vector<16xf32>
    %123 = vector.multi_reduction <add>, %122, %cst_48 [1] : vector<16x32xf32> to vector<16xf32>
    %124 = vector.shape_cast %123 : vector<16xf32> to vector<16x1xf32>
    %cst_49 = arith.constant 3.200000e+01 : f32
    %125 = vector.broadcast %cst_49 : f32 to vector<16x1xf32>
    %126 = arith.divf %124, %125 : vector<16x1xf32>
    %127 = vector.broadcast %119 : vector<16x1xf32> to vector<16x32xf32>
    %128 = arith.subf %111, %127 : vector<16x32xf32>
    %cst_50 = arith.constant 9.99999996E-13 : f32
    %129 = vector.broadcast %cst_50 : f32 to vector<16x1xf32>
    %130 = arith.addf %126, %129 : vector<16x1xf32>
    %131 = math.rsqrt %130 : vector<16x1xf32>
    %132 = vector.broadcast %131 : vector<16x1xf32> to vector<16x32xf32>
    %133 = arith.mulf %128, %132 : vector<16x32xf32>
    %134 = vector.broadcast %113 : vector<1x32xf32> to vector<16x32xf32>
    %135 = arith.mulf %133, %134 : vector<16x32xf32>
    %136 = vector.broadcast %115 : vector<1x32xf32> to vector<16x32xf32>
    %137 = arith.addf %135, %136 : vector<16x32xf32>
    %c0_51 = arith.constant 0 : index
    %c0_52 = arith.constant 0 : index
    %138 = vector.load %arg9[%c0_51, %c0_52] : memref<32x128xf32, #tpu.memory_space<vmem>>, vector<32x128xf32>
    %cst_53 = arith.constant dense<0.000000e+00> : vector<16x128xf32>
    %139 = tpu.matmul %137, %138, %cst_53 {dimension_numbers = #tpu.dot_dimension_numbers<[1], [0], [0], [1], [0, 0, 1, 1], [], []>} : vector<16x32xf32>, vector<32x128xf32>, vector<16x128xf32> -> vector<16x128xf32>
    %c0_54 = arith.constant 0 : index
    %c0_55 = arith.constant 0 : index
    %140 = vector.load %arg10[%c0_54, %c0_55] : memref<1x128xf32, #tpu.memory_space<vmem>>, vector<1x128xf32>
    %141 = vector.broadcast %140 : vector<1x128xf32> to vector<16x128xf32>
    %142 = arith.addf %139, %141 : vector<16x128xf32>
    %143 = arith.mulf %142, %142 : vector<16x128xf32>
    %144 = arith.mulf %142, %143 : vector<16x128xf32>
    %cst_56 = arith.constant 4.471500e-02 : f32
    %145 = vector.broadcast %cst_56 : f32 to vector<16x128xf32>
    %146 = arith.mulf %145, %144 : vector<16x128xf32>
    %147 = arith.addf %142, %146 : vector<16x128xf32>
    %cst_57 = arith.constant 0.797884583 : f32
    %148 = vector.broadcast %cst_57 : f32 to vector<16x128xf32>
    %149 = arith.mulf %148, %147 : vector<16x128xf32>
    %150 = math.tanh %149 : vector<16x128xf32>
    %cst_58 = arith.constant 1.000000e+00 : f32
    %151 = vector.broadcast %cst_58 : f32 to vector<16x128xf32>
    %152 = arith.addf %151, %150 : vector<16x128xf32>
    %cst_59 = arith.constant 5.000000e-01 : f32
    %153 = vector.broadcast %cst_59 : f32 to vector<16x128xf32>
    %154 = arith.mulf %153, %152 : vector<16x128xf32>
    %155 = arith.mulf %142, %154 : vector<16x128xf32>
    %c0_60 = arith.constant 0 : index
    %c0_61 = arith.constant 0 : index
    %156 = vector.load %arg11[%c0_60, %c0_61] : memref<128x32xf32, #tpu.memory_space<vmem>>, vector<128x32xf32>
    %cst_62 = arith.constant dense<0.000000e+00> : vector<16x32xf32>
    %157 = tpu.matmul %155, %156, %cst_62 {dimension_numbers = #tpu.dot_dimension_numbers<[1], [0], [0], [1], [0, 0, 1, 1], [], []>} : vector<16x128xf32>, vector<128x32xf32>, vector<16x32xf32> -> vector<16x32xf32>
    %c3 = arith.constant 3 : index
    %c0_63 = arith.constant 0 : index
    %c0_64 = arith.constant 0 : index
    %158 = vector.load %arg12[%c3, %c0_63, %c0_64] : memref<6x1x32xf32, #tpu.memory_space<vmem>>, vector<1x1x32xf32>
    %159 = vector.shape_cast %158 : vector<1x1x32xf32> to vector<1x32xf32>
    %160 = vector.broadcast %159 : vector<1x32xf32> to vector<16x32xf32>
    %161 = arith.addf %157, %160 : vector<16x32xf32>
    %162 = arith.addf %137, %161 : vector<16x32xf32>
    %c4 = arith.constant 4 : index
    %c0_65 = arith.constant 0 : index
    %c0_66 = arith.constant 0 : index
    %163 = vector.load %arg12[%c4, %c0_65, %c0_66] : memref<6x1x32xf32, #tpu.memory_space<vmem>>, vector<1x1x32xf32>
    %164 = vector.shape_cast %163 : vector<1x1x32xf32> to vector<1x32xf32>
    %c5 = arith.constant 5 : index
    %c0_67 = arith.constant 0 : index
    %c0_68 = arith.constant 0 : index
    %165 = vector.load %arg12[%c5, %c0_67, %c0_68] : memref<6x1x32xf32, #tpu.memory_space<vmem>>, vector<1x1x32xf32>
    %166 = vector.shape_cast %165 : vector<1x1x32xf32> to vector<1x32xf32>
    %cst_69 = arith.constant dense<0.000000e+00> : vector<16xf32>
    %167 = vector.multi_reduction <add>, %162, %cst_69 [1] : vector<16x32xf32> to vector<16xf32>
    %168 = vector.shape_cast %167 : vector<16xf32> to vector<16x1xf32>
    %cst_70 = arith.constant 3.200000e+01 : f32
    %169 = vector.broadcast %cst_70 : f32 to vector<16x1xf32>
    %170 = arith.divf %168, %169 : vector<16x1xf32>
    %171 = vector.broadcast %170 : vector<16x1xf32> to vector<16x32xf32>
    %172 = arith.subf %162, %171 : vector<16x32xf32>
    %173 = arith.mulf %172, %172 : vector<16x32xf32>
    %cst_71 = arith.constant dense<0.000000e+00> : vector<16xf32>
    %174 = vector.multi_reduction <add>, %173, %cst_71 [1] : vector<16x32xf32> to vector<16xf32>
    %175 = vector.shape_cast %174 : vector<16xf32> to vector<16x1xf32>
    %cst_72 = arith.constant 3.200000e+01 : f32
    %176 = vector.broadcast %cst_72 : f32 to vector<16x1xf32>
    %177 = arith.divf %175, %176 : vector<16x1xf32>
    %178 = vector.broadcast %170 : vector<16x1xf32> to vector<16x32xf32>
    %179 = arith.subf %162, %178 : vector<16x32xf32>
    %cst_73 = arith.constant 9.99999996E-13 : f32
    %180 = vector.broadcast %cst_73 : f32 to vector<16x1xf32>
    %181 = arith.addf %177, %180 : vector<16x1xf32>
    %182 = math.rsqrt %181 : vector<16x1xf32>
    %183 = vector.broadcast %182 : vector<16x1xf32> to vector<16x32xf32>
    %184 = arith.mulf %179, %183 : vector<16x32xf32>
    %185 = vector.broadcast %164 : vector<1x32xf32> to vector<16x32xf32>
    %186 = arith.mulf %184, %185 : vector<16x32xf32>
    %187 = vector.broadcast %166 : vector<1x32xf32> to vector<16x32xf32>
    %188 = arith.addf %186, %187 : vector<16x32xf32>
    %c0_74 = arith.constant 0 : index
    %c0_75 = arith.constant 0 : index
    %189 = vector.load %arg13[%c0_74, %c0_75] : memref<32x192xf32, #tpu.memory_space<vmem>>, vector<32x192xf32>
    %cst_76 = arith.constant dense<0.000000e+00> : vector<16x192xf32>
    %190 = tpu.matmul %188, %189, %cst_76 {dimension_numbers = #tpu.dot_dimension_numbers<[1], [0], [0], [1], [0, 0, 1, 1], [], []>} : vector<16x32xf32>, vector<32x192xf32>, vector<16x192xf32> -> vector<16x192xf32>
    %c0_77 = arith.constant 0 : index
    %c0_78 = arith.constant 0 : index
    %191 = vector.load %arg14[%c0_77, %c0_78] : memref<1x192xf32, #tpu.memory_space<vmem>>, vector<1x192xf32>
    %192 = vector.broadcast %191 : vector<1x192xf32> to vector<16x192xf32>
    %193 = arith.addf %190, %192 : vector<16x192xf32>
    %194 = vector.extract_strided_slice %193 {offsets = [0, 0], sizes = [16, 32], strides = [1, 1]} : vector<16x192xf32> to vector<16x32xf32>
    %195 = vector.extract_strided_slice %193 {offsets = [0, 32], sizes = [16, 32], strides = [1, 1]} : vector<16x192xf32> to vector<16x32xf32>
    %c0_79 = arith.constant 0 : index
    %c0_80 = arith.constant 0 : index
    %c0_81 = arith.constant 0 : index
    %196 = vector.load %arg18[%c0_79, %c0_80, %c0_81] : memref<6x1x32xf32, #tpu.memory_space<vmem>>, vector<1x1x32xf32>
    %197 = vector.shape_cast %196 : vector<1x1x32xf32> to vector<1x32xf32>
    %198 = vector.extract_strided_slice %194 {offsets = [0, 0], sizes = [16, 8], strides = [1, 1]} : vector<16x32xf32> to vector<16x8xf32>
    %199 = vector.extract_strided_slice %195 {offsets = [0, 0], sizes = [16, 8], strides = [1, 1]} : vector<16x32xf32> to vector<16x8xf32>
    %200 = vector.extract_strided_slice %193 {offsets = [0, 64], sizes = [16, 32], strides = [1, 1]} : vector<16x192xf32> to vector<16x32xf32>
    "tpu.trace_start"() <{level = 10 : i32, message = "qd,kd->qk"}> : () -> ()
    %cst_82 = arith.constant dense<0.000000e+00> : vector<16x16xf32>
    %201 = tpu.matmul %198, %199, %cst_82 {dimension_numbers = #tpu.dot_dimension_numbers<[1], [1], [0], [0], [0, 0, 1, 0], [], []>} : vector<16x8xf32>, vector<16x8xf32>, vector<16x16xf32> -> vector<16x16xf32>
    "tpu.trace_stop"() : () -> ()
    %202 = arith.addf %201, %36 : vector<16x16xf32>
    %cst_83 = arith.constant dense<0xFF800000> : vector<16xf32>
    %203 = vector.multi_reduction <maximumf>, %202, %cst_83 [1] : vector<16x16xf32> to vector<16xf32>
    %204 = vector.shape_cast %203 : vector<16xf32> to vector<16x1xf32>
    %205 = vector.broadcast %204 : vector<16x1xf32> to vector<16x16xf32>
    %206 = arith.subf %202, %205 : vector<16x16xf32>
    %207 = math.exp %206 : vector<16x16xf32>
    %cst_84 = arith.constant dense<0.000000e+00> : vector<16xf32>
    %208 = vector.multi_reduction <add>, %207, %cst_84 [1] : vector<16x16xf32> to vector<16xf32>
    %209 = vector.shape_cast %208 : vector<16xf32> to vector<16x1xf32>
    %210 = vector.broadcast %209 : vector<16x1xf32> to vector<16x16xf32>
    %211 = arith.divf %207, %210 : vector<16x16xf32>
    %cst_85 = arith.constant dense<0.000000e+00> : vector<16x32xf32>
    %212 = tpu.matmul %211, %200, %cst_85 {dimension_numbers = #tpu.dot_dimension_numbers<[1], [0], [0], [1], [0, 0, 1, 1], [], []>} : vector<16x16xf32>, vector<16x32xf32>, vector<16x32xf32> -> vector<16x32xf32>
    %213 = vector.broadcast %197 : vector<1x32xf32> to vector<16x32xf32>
    %214 = arith.addf %213, %212 : vector<16x32xf32>
    %215 = vector.extract_strided_slice %194 {offsets = [0, 8], sizes = [16, 8], strides = [1, 1]} : vector<16x32xf32> to vector<16x8xf32>
    %216 = vector.extract_strided_slice %195 {offsets = [0, 8], sizes = [16, 8], strides = [1, 1]} : vector<16x32xf32> to vector<16x8xf32>
    %217 = vector.extract_strided_slice %193 {offsets = [0, 96], sizes = [16, 32], strides = [1, 1]} : vector<16x192xf32> to vector<16x32xf32>
    "tpu.trace_start"() <{level = 10 : i32, message = "qd,kd->qk"}> : () -> ()
    %cst_86 = arith.constant dense<0.000000e+00> : vector<16x16xf32>
    %218 = tpu.matmul %215, %216, %cst_86 {dimension_numbers = #tpu.dot_dimension_numbers<[1], [1], [0], [0], [0, 0, 1, 0], [], []>} : vector<16x8xf32>, vector<16x8xf32>, vector<16x16xf32> -> vector<16x16xf32>
    "tpu.trace_stop"() : () -> ()
    %219 = arith.addf %218, %36 : vector<16x16xf32>
    %cst_87 = arith.constant dense<0xFF800000> : vector<16xf32>
    %220 = vector.multi_reduction <maximumf>, %219, %cst_87 [1] : vector<16x16xf32> to vector<16xf32>
    %221 = vector.shape_cast %220 : vector<16xf32> to vector<16x1xf32>
    %222 = vector.broadcast %221 : vector<16x1xf32> to vector<16x16xf32>
    %223 = arith.subf %219, %222 : vector<16x16xf32>
    %224 = math.exp %223 : vector<16x16xf32>
    %cst_88 = arith.constant dense<0.000000e+00> : vector<16xf32>
    %225 = vector.multi_reduction <add>, %224, %cst_88 [1] : vector<16x16xf32> to vector<16xf32>
    %226 = vector.shape_cast %225 : vector<16xf32> to vector<16x1xf32>
    %227 = vector.broadcast %226 : vector<16x1xf32> to vector<16x16xf32>
    %228 = arith.divf %224, %227 : vector<16x16xf32>
    %cst_89 = arith.constant dense<0.000000e+00> : vector<16x32xf32>
    %229 = tpu.matmul %228, %217, %cst_89 {dimension_numbers = #tpu.dot_dimension_numbers<[1], [0], [0], [1], [0, 0, 1, 1], [], []>} : vector<16x16xf32>, vector<16x32xf32>, vector<16x32xf32> -> vector<16x32xf32>
    %230 = arith.addf %214, %229 : vector<16x32xf32>
    %231 = vector.extract_strided_slice %194 {offsets = [0, 16], sizes = [16, 8], strides = [1, 1]} : vector<16x32xf32> to vector<16x8xf32>
    %232 = vector.extract_strided_slice %195 {offsets = [0, 16], sizes = [16, 8], strides = [1, 1]} : vector<16x32xf32> to vector<16x8xf32>
    %233 = vector.extract_strided_slice %193 {offsets = [0, 128], sizes = [16, 32], strides = [1, 1]} : vector<16x192xf32> to vector<16x32xf32>
    "tpu.trace_start"() <{level = 10 : i32, message = "qd,kd->qk"}> : () -> ()
    %cst_90 = arith.constant dense<0.000000e+00> : vector<16x16xf32>
    %234 = tpu.matmul %231, %232, %cst_90 {dimension_numbers = #tpu.dot_dimension_numbers<[1], [1], [0], [0], [0, 0, 1, 0], [], []>} : vector<16x8xf32>, vector<16x8xf32>, vector<16x16xf32> -> vector<16x16xf32>
    "tpu.trace_stop"() : () -> ()
    %235 = arith.addf %234, %36 : vector<16x16xf32>
    %cst_91 = arith.constant dense<0xFF800000> : vector<16xf32>
    %236 = vector.multi_reduction <maximumf>, %235, %cst_91 [1] : vector<16x16xf32> to vector<16xf32>
    %237 = vector.shape_cast %236 : vector<16xf32> to vector<16x1xf32>
    %238 = vector.broadcast %237 : vector<16x1xf32> to vector<16x16xf32>
    %239 = arith.subf %235, %238 : vector<16x16xf32>
    %240 = math.exp %239 : vector<16x16xf32>
    %cst_92 = arith.constant dense<0.000000e+00> : vector<16xf32>
    %241 = vector.multi_reduction <add>, %240, %cst_92 [1] : vector<16x16xf32> to vector<16xf32>
    %242 = vector.shape_cast %241 : vector<16xf32> to vector<16x1xf32>
    %243 = vector.broadcast %242 : vector<16x1xf32> to vector<16x16xf32>
    %244 = arith.divf %240, %243 : vector<16x16xf32>
    %cst_93 = arith.constant dense<0.000000e+00> : vector<16x32xf32>
    %245 = tpu.matmul %244, %233, %cst_93 {dimension_numbers = #tpu.dot_dimension_numbers<[1], [0], [0], [1], [0, 0, 1, 1], [], []>} : vector<16x16xf32>, vector<16x32xf32>, vector<16x32xf32> -> vector<16x32xf32>
    %246 = arith.addf %230, %245 : vector<16x32xf32>
    %247 = vector.extract_strided_slice %194 {offsets = [0, 24], sizes = [16, 8], strides = [1, 1]} : vector<16x32xf32> to vector<16x8xf32>
    %248 = vector.extract_strided_slice %195 {offsets = [0, 24], sizes = [16, 8], strides = [1, 1]} : vector<16x32xf32> to vector<16x8xf32>
    %249 = vector.extract_strided_slice %193 {offsets = [0, 160], sizes = [16, 32], strides = [1, 1]} : vector<16x192xf32> to vector<16x32xf32>
    "tpu.trace_start"() <{level = 10 : i32, message = "qd,kd->qk"}> : () -> ()
    %cst_94 = arith.constant dense<0.000000e+00> : vector<16x16xf32>
    %250 = tpu.matmul %247, %248, %cst_94 {dimension_numbers = #tpu.dot_dimension_numbers<[1], [1], [0], [0], [0, 0, 1, 0], [], []>} : vector<16x8xf32>, vector<16x8xf32>, vector<16x16xf32> -> vector<16x16xf32>
    "tpu.trace_stop"() : () -> ()
    %251 = arith.addf %250, %36 : vector<16x16xf32>
    %cst_95 = arith.constant dense<0xFF800000> : vector<16xf32>
    %252 = vector.multi_reduction <maximumf>, %251, %cst_95 [1] : vector<16x16xf32> to vector<16xf32>
    %253 = vector.shape_cast %252 : vector<16xf32> to vector<16x1xf32>
    %254 = vector.broadcast %253 : vector<16x1xf32> to vector<16x16xf32>
    %255 = arith.subf %251, %254 : vector<16x16xf32>
    %256 = math.exp %255 : vector<16x16xf32>
    %cst_96 = arith.constant dense<0.000000e+00> : vector<16xf32>
    %257 = vector.multi_reduction <add>, %256, %cst_96 [1] : vector<16x16xf32> to vector<16xf32>
    %258 = vector.shape_cast %257 : vector<16xf32> to vector<16x1xf32>
    %259 = vector.broadcast %258 : vector<16x1xf32> to vector<16x16xf32>
    %260 = arith.divf %256, %259 : vector<16x16xf32>
    %cst_97 = arith.constant dense<0.000000e+00> : vector<16x32xf32>
    %261 = tpu.matmul %260, %249, %cst_97 {dimension_numbers = #tpu.dot_dimension_numbers<[1], [0], [0], [1], [0, 0, 1, 1], [], []>} : vector<16x16xf32>, vector<16x32xf32>, vector<16x32xf32> -> vector<16x32xf32>
    %262 = arith.addf %246, %261 : vector<16x32xf32>
    %263 = arith.addf %188, %262 : vector<16x32xf32>
    %c1_98 = arith.constant 1 : index
    %c0_99 = arith.constant 0 : index
    %c0_100 = arith.constant 0 : index
    %264 = vector.load %arg18[%c1_98, %c0_99, %c0_100] : memref<6x1x32xf32, #tpu.memory_space<vmem>>, vector<1x1x32xf32>
    %265 = vector.shape_cast %264 : vector<1x1x32xf32> to vector<1x32xf32>
    %c2_101 = arith.constant 2 : index
    %c0_102 = arith.constant 0 : index
    %c0_103 = arith.constant 0 : index
    %266 = vector.load %arg18[%c2_101, %c0_102, %c0_103] : memref<6x1x32xf32, #tpu.memory_space<vmem>>, vector<1x1x32xf32>
    %267 = vector.shape_cast %266 : vector<1x1x32xf32> to vector<1x32xf32>
    %cst_104 = arith.constant dense<0.000000e+00> : vector<16xf32>
    %268 = vector.multi_reduction <add>, %263, %cst_104 [1] : vector<16x32xf32> to vector<16xf32>
    %269 = vector.shape_cast %268 : vector<16xf32> to vector<16x1xf32>
    %cst_105 = arith.constant 3.200000e+01 : f32
    %270 = vector.broadcast %cst_105 : f32 to vector<16x1xf32>
    %271 = arith.divf %269, %270 : vector<16x1xf32>
    %272 = vector.broadcast %271 : vector<16x1xf32> to vector<16x32xf32>
    %273 = arith.subf %263, %272 : vector<16x32xf32>
    %274 = arith.mulf %273, %273 : vector<16x32xf32>
    %cst_106 = arith.constant dense<0.000000e+00> : vector<16xf32>
    %275 = vector.multi_reduction <add>, %274, %cst_106 [1] : vector<16x32xf32> to vector<16xf32>
    %276 = vector.shape_cast %275 : vector<16xf32> to vector<16x1xf32>
    %cst_107 = arith.constant 3.200000e+01 : f32
    %277 = vector.broadcast %cst_107 : f32 to vector<16x1xf32>
    %278 = arith.divf %276, %277 : vector<16x1xf32>
    %279 = vector.broadcast %271 : vector<16x1xf32> to vector<16x32xf32>
    %280 = arith.subf %263, %279 : vector<16x32xf32>
    %cst_108 = arith.constant 9.99999996E-13 : f32
    %281 = vector.broadcast %cst_108 : f32 to vector<16x1xf32>
    %282 = arith.addf %278, %281 : vector<16x1xf32>
    %283 = math.rsqrt %282 : vector<16x1xf32>
    %284 = vector.broadcast %283 : vector<16x1xf32> to vector<16x32xf32>
    %285 = arith.mulf %280, %284 : vector<16x32xf32>
    %286 = vector.broadcast %265 : vector<1x32xf32> to vector<16x32xf32>
    %287 = arith.mulf %285, %286 : vector<16x32xf32>
    %288 = vector.broadcast %267 : vector<1x32xf32> to vector<16x32xf32>
    %289 = arith.addf %287, %288 : vector<16x32xf32>
    %c0_109 = arith.constant 0 : index
    %c0_110 = arith.constant 0 : index
    %290 = vector.load %arg15[%c0_109, %c0_110] : memref<32x128xf32, #tpu.memory_space<vmem>>, vector<32x128xf32>
    %cst_111 = arith.constant dense<0.000000e+00> : vector<16x128xf32>
    %291 = tpu.matmul %289, %290, %cst_111 {dimension_numbers = #tpu.dot_dimension_numbers<[1], [0], [0], [1], [0, 0, 1, 1], [], []>} : vector<16x32xf32>, vector<32x128xf32>, vector<16x128xf32> -> vector<16x128xf32>
    %c0_112 = arith.constant 0 : index
    %c0_113 = arith.constant 0 : index
    %292 = vector.load %arg16[%c0_112, %c0_113] : memref<1x128xf32, #tpu.memory_space<vmem>>, vector<1x128xf32>
    %293 = vector.broadcast %292 : vector<1x128xf32> to vector<16x128xf32>
    %294 = arith.addf %291, %293 : vector<16x128xf32>
    %295 = arith.mulf %294, %294 : vector<16x128xf32>
    %296 = arith.mulf %294, %295 : vector<16x128xf32>
    %cst_114 = arith.constant 4.471500e-02 : f32
    %297 = vector.broadcast %cst_114 : f32 to vector<16x128xf32>
    %298 = arith.mulf %297, %296 : vector<16x128xf32>
    %299 = arith.addf %294, %298 : vector<16x128xf32>
    %cst_115 = arith.constant 0.797884583 : f32
    %300 = vector.broadcast %cst_115 : f32 to vector<16x128xf32>
    %301 = arith.mulf %300, %299 : vector<16x128xf32>
    %302 = math.tanh %301 : vector<16x128xf32>
    %cst_116 = arith.constant 1.000000e+00 : f32
    %303 = vector.broadcast %cst_116 : f32 to vector<16x128xf32>
    %304 = arith.addf %303, %302 : vector<16x128xf32>
    %cst_117 = arith.constant 5.000000e-01 : f32
    %305 = vector.broadcast %cst_117 : f32 to vector<16x128xf32>
    %306 = arith.mulf %305, %304 : vector<16x128xf32>
    %307 = arith.mulf %294, %306 : vector<16x128xf32>
    %c0_118 = arith.constant 0 : index
    %c0_119 = arith.constant 0 : index
    %308 = vector.load %arg17[%c0_118, %c0_119] : memref<128x32xf32, #tpu.memory_space<vmem>>, vector<128x32xf32>
    %cst_120 = arith.constant dense<0.000000e+00> : vector<16x32xf32>
    %309 = tpu.matmul %307, %308, %cst_120 {dimension_numbers = #tpu.dot_dimension_numbers<[1], [0], [0], [1], [0, 0, 1, 1], [], []>} : vector<16x128xf32>, vector<128x32xf32>, vector<16x32xf32> -> vector<16x32xf32>
    %c3_121 = arith.constant 3 : index
    %c0_122 = arith.constant 0 : index
    %c0_123 = arith.constant 0 : index
    %310 = vector.load %arg18[%c3_121, %c0_122, %c0_123] : memref<6x1x32xf32, #tpu.memory_space<vmem>>, vector<1x1x32xf32>
    %311 = vector.shape_cast %310 : vector<1x1x32xf32> to vector<1x32xf32>
    %312 = vector.broadcast %311 : vector<1x32xf32> to vector<16x32xf32>
    %313 = arith.addf %309, %312 : vector<16x32xf32>
    %314 = arith.addf %289, %313 : vector<16x32xf32>
    %c4_124 = arith.constant 4 : index
    %c0_125 = arith.constant 0 : index
    %c0_126 = arith.constant 0 : index
    %315 = vector.load %arg18[%c4_124, %c0_125, %c0_126] : memref<6x1x32xf32, #tpu.memory_space<vmem>>, vector<1x1x32xf32>
    %316 = vector.shape_cast %315 : vector<1x1x32xf32> to vector<1x32xf32>
    %c5_127 = arith.constant 5 : index
    %c0_128 = arith.constant 0 : index
    %c0_129 = arith.constant 0 : index
    %317 = vector.load %arg18[%c5_127, %c0_128, %c0_129] : memref<6x1x32xf32, #tpu.memory_space<vmem>>, vector<1x1x32xf32>
    %318 = vector.shape_cast %317 : vector<1x1x32xf32> to vector<1x32xf32>
    %cst_130 = arith.constant dense<0.000000e+00> : vector<16xf32>
    %319 = vector.multi_reduction <add>, %314, %cst_130 [1] : vector<16x32xf32> to vector<16xf32>
    %320 = vector.shape_cast %319 : vector<16xf32> to vector<16x1xf32>
    %cst_131 = arith.constant 3.200000e+01 : f32
    %321 = vector.broadcast %cst_131 : f32 to vector<16x1xf32>
    %322 = arith.divf %320, %321 : vector<16x1xf32>
    %323 = vector.broadcast %322 : vector<16x1xf32> to vector<16x32xf32>
    %324 = arith.subf %314, %323 : vector<16x32xf32>
    %325 = arith.mulf %324, %324 : vector<16x32xf32>
    %cst_132 = arith.constant dense<0.000000e+00> : vector<16xf32>
    %326 = vector.multi_reduction <add>, %325, %cst_132 [1] : vector<16x32xf32> to vector<16xf32>
    %327 = vector.shape_cast %326 : vector<16xf32> to vector<16x1xf32>
    %cst_133 = arith.constant 3.200000e+01 : f32
    %328 = vector.broadcast %cst_133 : f32 to vector<16x1xf32>
    %329 = arith.divf %327, %328 : vector<16x1xf32>
    %330 = vector.broadcast %322 : vector<16x1xf32> to vector<16x32xf32>
    %331 = arith.subf %314, %330 : vector<16x32xf32>
    %cst_134 = arith.constant 9.99999996E-13 : f32
    %332 = vector.broadcast %cst_134 : f32 to vector<16x1xf32>
    %333 = arith.addf %329, %332 : vector<16x1xf32>
    %334 = math.rsqrt %333 : vector<16x1xf32>
    %335 = vector.broadcast %334 : vector<16x1xf32> to vector<16x32xf32>
    %336 = arith.mulf %331, %335 : vector<16x32xf32>
    %337 = vector.broadcast %316 : vector<1x32xf32> to vector<16x32xf32>
    %338 = arith.mulf %336, %337 : vector<16x32xf32>
    %339 = vector.broadcast %318 : vector<1x32xf32> to vector<16x32xf32>
    %340 = arith.addf %338, %339 : vector<16x32xf32>
    %c0_135 = arith.constant 0 : index
    %c0_136 = arith.constant 0 : index
    %341 = vector.load %arg6[%c0_135, %c0_136] : memref<2x16xf32, #tpu.memory_space<vmem>>, vector<2x16xf32>
    %cst_137 = arith.constant dense<0.000000e+00> : vector<2x32xf32>
    %342 = tpu.matmul %341, %340, %cst_137 {dimension_numbers = #tpu.dot_dimension_numbers<[1], [0], [0], [1], [0, 0, 1, 1], [], []>} : vector<2x16xf32>, vector<16x32xf32>, vector<2x32xf32> -> vector<2x32xf32>
    %c0_138 = arith.constant 0 : index
    %c0_139 = arith.constant 0 : index
    %343 = vector.load %arg19[%c0_138, %c0_139] : memref<32x32xf32, #tpu.memory_space<vmem>>, vector<32x32xf32>
    %cst_140 = arith.constant dense<0.000000e+00> : vector<2x32xf32>
    %344 = tpu.matmul %342, %343, %cst_140 {dimension_numbers = #tpu.dot_dimension_numbers<[1], [0], [0], [1], [0, 0, 1, 1], [], []>} : vector<2x32xf32>, vector<32x32xf32>, vector<2x32xf32> -> vector<2x32xf32>
    %c0_141 = arith.constant 0 : index
    %c0_142 = arith.constant 0 : index
    %345 = vector.load %arg20[%c0_141, %c0_142] : memref<1x32xf32, #tpu.memory_space<vmem>>, vector<1x32xf32>
    %346 = vector.broadcast %345 : vector<1x32xf32> to vector<2x32xf32>
    %347 = arith.addf %344, %346 : vector<2x32xf32>
    %cst_143 = arith.constant 1.000000e-01 : f32
    %348 = vector.broadcast %cst_143 : f32 to vector<2x32xf32>
    %349 = arith.mulf %348, %347 : vector<2x32xf32>
    %350 = arith.maximumf %347, %349 : vector<2x32xf32>
    %c0_144 = arith.constant 0 : index
    %c0_145 = arith.constant 0 : index
    %351 = vector.load %arg21[%c0_144, %c0_145] : memref<32x128xf32, #tpu.memory_space<vmem>>, vector<32x128xf32>
    %cst_146 = arith.constant dense<0.000000e+00> : vector<2x128xf32>
    %352 = tpu.matmul %350, %351, %cst_146 {dimension_numbers = #tpu.dot_dimension_numbers<[1], [0], [0], [1], [0, 0, 1, 1], [], []>} : vector<2x32xf32>, vector<32x128xf32>, vector<2x128xf32> -> vector<2x128xf32>
    %c0_147 = arith.constant 0 : index
    %c0_148 = arith.constant 0 : index
    %353 = vector.load %arg22[%c0_147, %c0_148] : memref<1x128xf32, #tpu.memory_space<vmem>>, vector<1x128xf32>
    %354 = vector.broadcast %353 : vector<1x128xf32> to vector<2x128xf32>
    %355 = arith.addf %352, %354 : vector<2x128xf32>
    %c0_149 = arith.constant 0 : index
    %c0_150 = arith.constant 0 : index
    %356 = vector.load %arg23[%c0_149, %c0_150] : memref<2x128xf32, #tpu.memory_space<vmem>>, vector<2x128xf32>
    tpu.vector_store %arg23[%c0_149, %c0_150], %355 {strides = array<i32>} : memref<2x128xf32, #tpu.memory_space<vmem>>, vector<2x128xf32>,
    return
  }
  func.func @transform_0(%arg0: i32) -> (i32, i32) {
    %c0_i32 = arith.constant 0 : i32
    %c0_i32_0 = arith.constant 0 : i32
    %c0_i32_1 = arith.constant 0 : i32
    return %c0_i32, %c0_i32_0 : i32, i32
  }
  func.func @transform_1(%arg0: i32) -> (i32, i32) {
    %c0_i32 = arith.constant 0 : i32
    %c0_i32_0 = arith.constant 0 : i32
    %c0_i32_1 = arith.constant 0 : i32
    return %c0_i32, %c0_i32_0 : i32, i32
  }
  func.func @transform_2(%arg0: i32) -> (i32, i32) {
    %c0_i32 = arith.constant 0 : i32
    %c0_i32_0 = arith.constant 0 : i32
    %c0_i32_1 = arith.constant 0 : i32
    return %c0_i32, %c0_i32_0 : i32, i32
  }
  func.func @transform_3(%arg0: i32) -> (i32, i32, i32) {
    %c0_i32 = arith.constant 0 : i32
    %c0_i32_0 = arith.constant 0 : i32
    %c0_i32_1 = arith.constant 0 : i32
    %c0_i32_2 = arith.constant 0 : i32
    return %c0_i32, %c0_i32_0, %c0_i32_1 : i32, i32, i32
  }
  func.func @transform_4(%arg0: i32) -> (i32, i32) {
    %c0_i32 = arith.constant 0 : i32
    %c0_i32_0 = arith.constant 0 : i32
    %c0_i32_1 = arith.constant 0 : i32
    return %c0_i32, %c0_i32_0 : i32, i32
  }
  func.func @transform_5(%arg0: i32) -> (i32, i32) {
    %c0_i32 = arith.constant 0 : i32
    %c0_i32_0 = arith.constant 0 : i32
    %c0_i32_1 = arith.constant 0 : i32
    return %c0_i32, %c0_i32_0 : i32, i32
  }
  func.func @transform_6(%arg0: i32) -> (i32, i32) {
    %c0_i32 = arith.constant 0 : i32
    %c0_i32_0 = arith.constant 0 : i32
    %c0_i32_1 = arith.constant 0 : i32
    return %c0_i32, %c0_i32_0 : i32, i32
  }
  func.func @transform_7(%arg0: i32) -> (i32, i32) {
    %c0_i32 = arith.constant 0 : i32
    %c0_i32_0 = arith.constant 0 : i32
    %c0_i32_1 = arith.constant 0 : i32
    return %c0_i32, %c0_i32_0 : i32, i32
  }
  func.func @transform_8(%arg0: i32) -> (i32, i32) {
    %c0_i32 = arith.constant 0 : i32
    %c0_i32_0 = arith.constant 0 : i32
    %c0_i32_1 = arith.constant 0 : i32
    return %c0_i32, %c0_i32_0 : i32, i32
  }
  func.func @transform_9(%arg0: i32) -> (i32, i32) {
    %c0_i32 = arith.constant 0 : i32
    %c0_i32_0 = arith.constant 0 : i32
    %c0_i32_1 = arith.constant 0 : i32
    return %c0_i32, %c0_i32_0 : i32, i32
  }
  func.func @transform_10(%arg0: i32) -> (i32, i32) {
    %c0_i32 = arith.constant 0 : i32
    %c0_i32_0 = arith.constant 0 : i32
    %c0_i32_1 = arith.constant 0 : i32
    return %c0_i32, %c0_i32_0 : i32, i32
  }
  func.func @transform_11(%arg0: i32) -> (i32, i32, i32) {
    %c0_i32 = arith.constant 0 : i32
    %c0_i32_0 = arith.constant 0 : i32
    %c0_i32_1 = arith.constant 0 : i32
    %c0_i32_2 = arith.constant 0 : i32
    return %c0_i32, %c0_i32_0, %c0_i32_1 : i32, i32, i32
  }
  func.func @transform_12(%arg0: i32) -> (i32, i32) {
    %c0_i32 = arith.constant 0 : i32
    %c0_i32_0 = arith.constant 0 : i32
    %c0_i32_1 = arith.constant 0 : i32
    return %c0_i32, %c0_i32_0 : i32, i32
  }
  func.func @transform_13(%arg0: i32) -> (i32, i32) {
    %c0_i32 = arith.constant 0 : i32
    %c0_i32_0 = arith.constant 0 : i32
    %c0_i32_1 = arith.constant 0 : i32
    return %c0_i32, %c0_i32_0 : i32, i32
  }
  func.func @transform_14(%arg0: i32) -> (i32, i32) {
    %c0_i32 = arith.constant 0 : i32
    %c0_i32_0 = arith.constant 0 : i32
    %c0_i32_1 = arith.constant 0 : i32
    return %c0_i32, %c0_i32_0 : i32, i32
  }
  func.func @transform_15(%arg0: i32) -> (i32, i32) {
    %c0_i32 = arith.constant 0 : i32
    %c0_i32_0 = arith.constant 0 : i32
    %c0_i32_1 = arith.constant 0 : i32
    return %c0_i32, %c0_i32_0 : i32, i32
  }
  func.func @transform_16(%arg0: i32) -> (i32, i32) {
    %c0_i32 = arith.constant 0 : i32
    %c0_i32_0 = arith.constant 0 : i32
    %c0_i32_1 = arith.constant 0 : i32
    return %c0_i32, %c0_i32_0 : i32, i32
  }
  func.func @transform_17(%arg0: i32) -> (i32, i32, i32) {
    %c0_i32 = arith.constant 0 : i32
    %c0_i32_0 = arith.constant 0 : i32
    %c0_i32_1 = arith.constant 0 : i32
    %c0_i32_2 = arith.constant 0 : i32
    return %c0_i32, %c0_i32_0, %c0_i32_1 : i32, i32, i32
  }
  func.func @transform_18(%arg0: i32) -> (i32, i32) {
    %c0_i32 = arith.constant 0 : i32
    %c0_i32_0 = arith.constant 0 : i32
    %c0_i32_1 = arith.constant 0 : i32
    return %c0_i32, %c0_i32_0 : i32, i32
  }
  func.func @transform_19(%arg0: i32) -> (i32, i32) {
    %c0_i32 = arith.constant 0 : i32
    %c0_i32_0 = arith.constant 0 : i32
    %c0_i32_1 = arith.constant 0 : i32
    return %c0_i32, %c0_i32_0 : i32, i32
  }
  func.func @transform_20(%arg0: i32) -> (i32, i32) {
    %c0_i32 = arith.constant 0 : i32
    %c0_i32_0 = arith.constant 0 : i32
    %c0_i32_1 = arith.constant 0 : i32
    return %c0_i32, %c0_i32_0 : i32, i32
  }
  func.func @transform_21(%arg0: i32) -> (i32, i32) {
    %c0_i32 = arith.constant 0 : i32
    %c0_i32_0 = arith.constant 0 : i32
    %c0_i32_1 = arith.constant 0 : i32
    return %c0_i32, %c0_i32_0 : i32, i32
  }
  func.func @transform_22(%arg0: i32) -> (i32, i32) {
    %c0_i32 = arith.constant 0 : i32
    %c0_i32_0 = arith.constant 0 : i32
    %c0_i32_1 = arith.constant 0 : i32
    return %c0_i32, %c0_i32_0 : i32, i32
  }
}

</mosaic_0001>

<llo_original>
// kernel: tpu_custom_call.1
$region0: #{tpu_custom_call.1}
  #allocation0 [shape = 'u32[]', space=smem, size = 0x4, offset = 0x4, fixed_abs, tag = 'smem constant byte address 0x4 - core index']
  #allocation1 [shape = 'u32[144,128]{1,0:T(1,128)}', space=vmem, size = 0x12000, scoped, tag = 'internal scratch']
  %s0 = inlined_call_operand.vmem [shape: s32[16,1], index: 0, kind: input, shape index: {}]
  %s1 = inlined_call_operand.vmem [shape: f32[128,32], index: 1, kind: input, shape index: {}]
  %s2 = inlined_call_operand.vmem [shape: f32[16,32], index: 2, kind: input, shape index: {}]
  %s3 = inlined_call_operand.vmem [shape: f32[2,1,32], index: 3, kind: input, shape index: {}]
  %s4 = inlined_call_operand.vmem [shape: f32[16,16], index: 4, kind: input, shape index: {}]
  %s5 = inlined_call_operand.vmem [shape: f32[2,16], index: 5, kind: input, shape index: {}]
  %s6 = inlined_call_operand.vmem [shape: f32[32,192], index: 6, kind: input, shape index: {}]
  %s7 = inlined_call_operand.vmem [shape: f32[1,192], index: 7, kind: input, shape index: {}]
  %s8 = inlined_call_operand.vmem [shape: f32[32,128], index: 8, kind: input, shape index: {}]
  %s9 = inlined_call_operand.vmem [shape: f32[1,128], index: 9, kind: input, shape index: {}]
  %s10 = inlined_call_operand.vmem [shape: f32[128,32], index: 10, kind: input, shape index: {}]
  %s11 = inlined_call_operand.vmem [shape: f32[6,1,32], index: 11, kind: input, shape index: {}]
  %s12 = inlined_call_operand.vmem [shape: f32[32,192], index: 12, kind: input, shape index: {}]
  %s13 = inlined_call_operand.vmem [shape: f32[1,192], index: 13, kind: input, shape index: {}]
  %s14 = inlined_call_operand.vmem [shape: f32[32,128], index: 14, kind: input, shape index: {}]
  %s15 = inlined_call_operand.vmem [shape: f32[1,128], index: 15, kind: input, shape index: {}]
  %s16 = inlined_call_operand.vmem [shape: f32[128,32], index: 16, kind: input, shape index: {}]
  %s17 = inlined_call_operand.vmem [shape: f32[6,1,32], index: 17, kind: input, shape index: {}]
  %s18 = inlined_call_operand.vmem [shape: f32[32,32], index: 18, kind: input, shape index: {}]
  %s19 = inlined_call_operand.vmem [shape: f32[1,32], index: 19, kind: input, shape index: {}]
  %s20 = inlined_call_operand.vmem [shape: f32[32,128], index: 20, kind: input, shape index: {}]
  %s21 = inlined_call_operand.vmem [shape: f32[1,128], index: 21, kind: input, shape index: {}]
  %s22 = inlined_call_operand.hbm [shape: f32[2,128], index: 22, kind: output, shape index: {}]
  %s23 = sld [smem:[#allocation0]]
  $region98: #{tpu_custom_call.1} parent=0
    _
  %s25 = ssub.s32 1, %s23
  %s26 = scalar_select 0, %s25, %s23
  $region1: #{tpu_custom_call.1} parent=0
    #allocation2 [shape = 'u8[1024]{0}', space=vmem, size = 0x400, scoped, tag = 'output window, operand 0, single buffered']
    #allocation3 [shape = 's32[1]{0}', space=sflag, size = 0x4, scoped, tag = 'scoped memory for tpu_custom_call.1']
    %27 = vsyncpa [#allocation3], 0
    // Predicated region
    $region2: #{tpu_custom_call.1} parent=1 // pred_check
      _
    $region3: #{tpu_custom_call.1} parent=1 // pred_check_branch
      %29 = sbr.rel (0) target = $region5
    $region4: #{tpu_custom_call.1} parent=1 // pred_region
      _
    $region5: #{tpu_custom_call.1} parent=1 // pred_fallthru
      _
    // Predicated region
    $region6: #{tpu_custom_call.1} parent=1 // pred_check
      _
    $region7: #{tpu_custom_call.1} parent=1 // pred_check_branch
      %31 = sbr.rel (0) target = $region9
    $region8: #{tpu_custom_call.1} parent=1 // pred_region
      _
    $region9: #{tpu_custom_call.1} parent=1 // pred_fallthru
      _
    // Predicated region
    $region10: #{tpu_custom_call.1} parent=1 // pred_check
      _
    $region11: #{tpu_custom_call.1} parent=1 // pred_check_branch
      %33 = sbr.rel (0) target = $region13
    $region12: #{tpu_custom_call.1} parent=1 // pred_region
      _
    $region13: #{tpu_custom_call.1} parent=1 // pred_fallthru
      _
    // Predicated region
    $region14: #{tpu_custom_call.1} parent=1 // pred_check
      _
    $region15: #{tpu_custom_call.1} parent=1 // pred_check_branch
      %35 = sbr.rel (0) target = $region17
    $region16: #{tpu_custom_call.1} parent=1 // pred_region
      _
    $region17: #{tpu_custom_call.1} parent=1 // pred_fallthru
      _
    // Predicated region
    $region18: #{tpu_custom_call.1} parent=1 // pred_check
      _
    $region19: #{tpu_custom_call.1} parent=1 // pred_check_branch
      %37 = sbr.rel (0) target = $region21
    $region20: #{tpu_custom_call.1} parent=1 // pred_region
      _
    $region21: #{tpu_custom_call.1} parent=1 // pred_fallthru
      _
    // Predicated region
    $region22: #{tpu_custom_call.1} parent=1 // pred_check
      _
    $region23: #{tpu_custom_call.1} parent=1 // pred_check_branch
      %39 = sbr.rel (0) target = $region25
    $region24: #{tpu_custom_call.1} parent=1 // pred_region
      _
    $region25: #{tpu_custom_call.1} parent=1 // pred_fallthru
      _
    // Predicated region
    $region26: #{tpu_custom_call.1} parent=1 // pred_check
      _
    $region27: #{tpu_custom_call.1} parent=1 // pred_check_branch
      %41 = sbr.rel (0) target = $region29
    $region28: #{tpu_custom_call.1} parent=1 // pred_region
      _
    $region29: #{tpu_custom_call.1} parent=1 // pred_fallthru
      _
    // Predicated region
    $region30: #{tpu_custom_call.1} parent=1 // pred_check
      _
    $region31: #{tpu_custom_call.1} parent=1 // pred_check_branch
      %43 = sbr.rel (0) target = $region33
    $region32: #{tpu_custom_call.1} parent=1 // pred_region
      _
    $region33: #{tpu_custom_call.1} parent=1 // pred_fallthru
      _
    // Predicated region
    $region34: #{tpu_custom_call.1} parent=1 // pred_check
      _
    $region35: #{tpu_custom_call.1} parent=1 // pred_check_branch
      %45 = sbr.rel (0) target = $region37
    $region36: #{tpu_custom_call.1} parent=1 // pred_region
      _
    $region37: #{tpu_custom_call.1} parent=1 // pred_fallthru
      _
    // Predicated region
    $region38: #{tpu_custom_call.1} parent=1 // pred_check
      _
    $region39: #{tpu_custom_call.1} parent=1 // pred_check_branch
      %47 = sbr.rel (0) target = $region41
    $region40: #{tpu_custom_call.1} parent=1 // pred_region
      _
    $region41: #{tpu_custom_call.1} parent=1 // pred_fallthru
      _
    // Predicated region
    $region42: #{tpu_custom_call.1} parent=1 // pred_check
      _
    $region43: #{tpu_custom_call.1} parent=1 // pred_check_branch
      %49 = sbr.rel (0) target = $region45
    $region44: #{tpu_custom_call.1} parent=1 // pred_region
      _
    $region45: #{tpu_custom_call.1} parent=1 // pred_fallthru
      _
    // Predicated region
    $region46: #{tpu_custom_call.1} parent=1 // pred_check
      _
    $region47: #{tpu_custom_call.1} parent=1 // pred_check_branch
      %51 = sbr.rel (0) target = $region49
    $region48: #{tpu_custom_call.1} parent=1 // pred_region
      _
    $region49: #{tpu_custom_call.1} parent=1 // pred_fallthru
      _
    // Predicated region
    $region50: #{tpu_custom_call.1} parent=1 // pred_check
      _
    $region51: #{tpu_custom_call.1} parent=1 // pred_check_branch
      %53 = sbr.rel (0) target = $region53
    $region52: #{tpu_custom_call.1} parent=1 // pred_region
      _
    $region53: #{tpu_custom_call.1} parent=1 // pred_fallthru
      _
    // Predicated region
    $region54: #{tpu_custom_call.1} parent=1 // pred_check
      _
    $region55: #{tpu_custom_call.1} parent=1 // pred_check_branch
      %55 = sbr.rel (0) target = $region57
    $region56: #{tpu_custom_call.1} parent=1 // pred_region
      _
    $region57: #{tpu_custom_call.1} parent=1 // pred_fallthru
      _
    // Predicated region
    $region58: #{tpu_custom_call.1} parent=1 // pred_check
      _
    $region59: #{tpu_custom_call.1} parent=1 // pred_check_branch
      %57 = sbr.rel (0) target = $region61
    $region60: #{tpu_custom_call.1} parent=1 // pred_region
      _
    $region61: #{tpu_custom_call.1} parent=1 // pred_fallthru
      _
    // Predicated region
    $region62: #{tpu_custom_call.1} parent=1 // pred_check
      _
    $region63: #{tpu_custom_call.1} parent=1 // pred_check_branch
      %59 = sbr.rel (0) target = $region65
    $region64: #{tpu_custom_call.1} parent=1 // pred_region
      _
    $region65: #{tpu_custom_call.1} parent=1 // pred_fallthru
      _
    // Predicated region
    $region66: #{tpu_custom_call.1} parent=1 // pred_check
      _
    $region67: #{tpu_custom_call.1} parent=1 // pred_check_branch
      %61 = sbr.rel (0) target = $region69
    $region68: #{tpu_custom_call.1} parent=1 // pred_region
      _
    $region69: #{tpu_custom_call.1} parent=1 // pred_fallthru
      _
    // Predicated region
    $region70: #{tpu_custom_call.1} parent=1 // pred_check
      _
    $region71: #{tpu_custom_call.1} parent=1 // pred_check_branch
      %63 = sbr.rel (0) target = $region73
    $region72: #{tpu_custom_call.1} parent=1 // pred_region
      _
    $region73: #{tpu_custom_call.1} parent=1 // pred_fallthru
      _
    // Predicated region
    $region74: #{tpu_custom_call.1} parent=1 // pred_check
      _
    $region75: #{tpu_custom_call.1} parent=1 // pred_check_branch
      %65 = sbr.rel (0) target = $region77
    $region76: #{tpu_custom_call.1} parent=1 // pred_region
      _
    $region77: #{tpu_custom_call.1} parent=1 // pred_fallthru
      _
    // Predicated region
    $region78: #{tpu_custom_call.1} parent=1 // pred_check
      _
    $region79: #{tpu_custom_call.1} parent=1 // pred_check_branch
      %67 = sbr.rel (0) target = $region81
    $region80: #{tpu_custom_call.1} parent=1 // pred_region
      _
    $region81: #{tpu_custom_call.1} parent=1 // pred_fallthru
      _
    // Predicated region
    $region82: #{tpu_custom_call.1} parent=1 // pred_check
      _
    $region83: #{tpu_custom_call.1} parent=1 // pred_check_branch
      %69 = sbr.rel (0) target = $region85
    $region84: #{tpu_custom_call.1} parent=1 // pred_region
      _
    $region85: #{tpu_custom_call.1} parent=1 // pred_fallthru
      _
    // Predicated region
    $region86: #{tpu_custom_call.1} parent=1 // pred_check
      _
    $region87: #{tpu_custom_call.1} parent=1 // pred_check_branch
      %71 = sbr.rel (0) target = $region89
    $region88: #{tpu_custom_call.1} parent=1 // pred_region
      _
    $region89: #{tpu_custom_call.1} parent=1 // pred_fallthru
      _
    %v72 = vld [vmem:[%s0] sm:$0xff]
    %v73 = vld [vmem:[%s0 + $0x8] sm:$0xff]
    %v74 = vlaneseq
    %v75 = vand.u32 %v74, 127
    %76 = vset.pattern.permute.xlu0 0
    %77 = vperm.xlu0 %76, %v72
    %v78 = vpop.permute.xlu0 %77
    %79 = vset.pattern.permute.xlu0 0
    %80 = vperm.xlu0 %79, %v73
    %v81 = vpop.permute.xlu0 %80
    %vm82 = vcmp.eq.s32.totalorder %v78, %v75
    %vm83 = vcmp.eq.s32.totalorder %v81, %v75
    %v84 = vsel %vm82, 1, 0
    %v85 = vsel %vm83, 1, 0
    %v86 = vcvt.s32.f32 %v84
    %v87 = vcvt.s32.f32 %v85
    %v88 = vld [vmem:[%s1] sm:$0xff]
    %v89 = vld [vmem:[%s1 + $0x8] sm:$0xff]
    %v90 = vld [vmem:[%s1 + $0x10] sm:$0xff]
    %v91 = vld [vmem:[%s1 + $0x18] sm:$0xff]
    %v92 = vld [vmem:[%s1 + $0x20] sm:$0xff]
    %v93 = vld [vmem:[%s1 + $0x28] sm:$0xff]
    %v94 = vld [vmem:[%s1 + $0x30] sm:$0xff]
    %v95 = vld [vmem:[%s1 + $0x38] sm:$0xff]
    %v96 = vld [vmem:[%s1 + $0x40] sm:$0xff]
    %v97 = vld [vmem:[%s1 + $0x48] sm:$0xff]
    %v98 = vld [vmem:[%s1 + $0x50] sm:$0xff]
    %v99 = vld [vmem:[%s1 + $0x58] sm:$0xff]
    %v100 = vld [vmem:[%s1 + $0x60] sm:$0xff]
    %v101 = vld [vmem:[%s1 + $0x68] sm:$0xff]
    %v102 = vld [vmem:[%s1 + $0x70] sm:$0xff]
    %v103 = vld [vmem:[%s1 + $0x78] sm:$0xff]
    %v104 = vld [vmem:[%s2] sm:$0xff]
    %v105 = vld [vmem:[%s2 + $0x8] sm:$0xff]
    %106 = vmatprep.subr.mxu0 0.0
    %107 = vmatpush1.msra.mxu0 %v103
    %108 = vmatprep.subr.mxu0 0.0
    %109 = vmatpush1.msra.mxu0 %v102
    %110 = vmatprep.subr.mxu0 0.0
    %111 = vmatpush1.msra.mxu0 %v101
    %112 = vmatprep.subr.mxu0 0.0
    %113 = vmatpush1.msra.mxu0 %v100
    %114 = vmatprep.subr.mxu0 0.0
    %115 = vmatpush1.msra.mxu0 %v99
    %116 = vmatprep.subr.mxu0 0.0
    %117 = vmatpush1.msra.mxu0 %v98
    %118 = vmatprep.subr.mxu0 0.0
    %119 = vmatpush1.msra.mxu0 %v97
    %120 = vmatprep.subr.mxu0 0.0
    %121 = vmatpush1.msra.mxu0 %v96
    %122 = vmatprep.subr.mxu0 0.0
    %123 = vmatpush1.msra.mxu0 %v95
    %124 = vmatprep.subr.mxu0 0.0
    %125 = vmatpush1.msra.mxu0 %v94
    %126 = vmatprep.subr.mxu0 0.0
    %127 = vmatpush1.msra.mxu0 %v93
    %128 = vmatprep.subr.mxu0 0.0
    %129 = vmatpush1.msra.mxu0 %v92
    %130 = vmatprep.subr.mxu0 0.0
    %131 = vmatpush1.msra.mxu0 %v91
    %132 = vmatprep.subr.mxu0 0.0
    %133 = vmatpush1.msra.mxu0 %v90
    %134 = vmatprep.subr.mxu0 0.0
    %135 = vmatpush1.msra.mxu0 %v89
    %136 = vmatprep.subr.mxu0 0.0
    %137 = vmatpush1.msra.mxu0 %v88
    %138 = vmatprep.subr.mxu0 0.0
    %139 = vmatpush2.msra.mxu0 0.0
    %140 = vmatprep.subr.mxu0 0.0
    %141 = vmatpush2.msra.mxu0 0.0
    %142 = vmatprep.subr.mxu0 0.0
    %143 = vmatpush2.msra.mxu0 0.0
    %144 = vmatprep.subr.mxu0 0.0
    %145 = vmatpush2.msra.mxu0 0.0
    %146 = vmatprep.subr.mxu0 0.0
    %147 = vmatpush2.msra.mxu0 0.0
    %148 = vmatprep.subr.mxu0 0.0
    %149 = vmatpush2.msra.mxu0 0.0
    %150 = vmatprep.subr.mxu0 0.0
    %151 = vmatpush2.msra.mxu0 0.0
    %152 = vmatprep.subr.mxu0 0.0
    %153 = vmatpush2.msra.mxu0 0.0
    %154 = vmatprep.subr.mxu0 0.0
    %155 = vmatpush2.msra.mxu0 0.0
    %156 = vmatprep.subr.mxu0 0.0
    %157 = vmatpush2.msra.mxu0 0.0
    %158 = vmatprep.subr.mxu0 0.0
    %159 = vmatpush2.msra.mxu0 0.0
    %160 = vmatprep.subr.mxu0 0.0
    %161 = vmatpush2.msra.mxu0 0.0
    %162 = vmatprep.subr.mxu0 0.0
    %163 = vmatpush2.msra.mxu0 0.0
    %164 = vmatprep.subr.mxu0 0.0
    %165 = vmatpush2.msra.mxu0 0.0
    %166 = vmatprep.subr.mxu0 0.0
    %167 = vmatpush2.msra.mxu0 0.0
    %168 = vmatprep.subr.mxu0 0.0
    %169 = vmatpush2.msra.mxu0 0.0
    %170 = vmatprep.mubr.f32.mxu0 0.0
    %171 = vmatmul.mubr.f32.gmra.mxu0 %v86
    %v172 = vpop.f32.mrf.mxu0
    %v173 = vadd.f32 %v104, %v172
    %v174 = vpop.f32.mrf.mxu0
    %175 = vmatprep.mubr.f32.mxu0 0.0
    %176 = vmatmul.mubr.f32.gmra.mxu0 %v87
    %v177 = vpop.f32.mrf.mxu0
    %v178 = vadd.f32 %v105, %v177
    %v179 = vpop.f32.mrf.mxu0
    %180 = vdwg.mxu0
    %v181 = vld [vmem:[%s3] sm:$0x1]
    %s182 = scalar_lea.vmem %s3, 1
    %v183 = vld [vmem:[%s182] sm:$0x1]
    %vm184 = vcmask 261120
    %v185 = vsel %vm184, %v173, 0.0
    %186 = vadd.xlane.f32.xlu0 %v185
    %v187 = vpop.xlane.xlu0 %186
    %v188 = vsel %vm184, %v178, 0.0
    %189 = vadd.xlane.f32.xlu0 %v188
    %v190 = vpop.xlane.xlu0 %189
    %v191 = vrcp.pop 32.0
    %v192 = vmul.f32 %v187, %v191
    %v193 = vmul.f32 %v190, %v191
    %v194 = vsub.f32 %v173, %v192
    %v195 = vsub.f32 %v178, %v193
    %v196 = vmul.f32 %v194, %v194
    %v197 = vmul.f32 %v195, %v195
    %v198 = vsel %vm184, %v196, 0.0
    %199 = vadd.xlane.f32.xlu0 %v198
    %v200 = vpop.xlane.xlu0 %199
    %v201 = vsel %vm184, %v197, 0.0
    %202 = vadd.xlane.f32.xlu0 %v201
    %v203 = vpop.xlane.xlu0 %202
    %v204 = vmul.f32 %v200, %v191
    %v205 = vmul.f32 %v203, %v191
    %v206 = vadd.f32 %v204, 1e-12
    %v207 = vadd.f32 %v205, 1e-12
    %v208 = vrsqrt.pop %v206
    %v209 = vrsqrt.pop %v207
    %v210 = vmul.f32 %v194, %v208
    %v211 = vmul.f32 %v195, %v209
    %v213 = vlaneseq
    %v214 = vshrl.u32 %v213, 7
    %v215 = vsub.s32 0, %v214
    %v216 = vrot.slane %v181, %v215
    %v218 = vmul.f32 %v210, %v216
    %v219 = vmul.f32 %v211, %v216
    %v221 = vlaneseq
    %v222 = vshrl.u32 %v221, 7
    %v223 = vsub.s32 0, %v222
    %v224 = vrot.slane %v183, %v223
    %v226 = vadd.f32 %v218, %v224
    %v227 = vadd.f32 %v219, %v224
    %v228 = vld [vmem:[%s4] sm:$0xff]
    %v229 = vld [vmem:[%s4 + $0x8] sm:$0xff]
    %v230 = vld [vmem:[%s6] sm:$0xff]
    %v231 = vld [vmem:[%s6 + $0x8] sm:$0xff]
    %v232 = vld [vmem:[%s6 + $0x10] sm:$0xff]
    %v233 = vld [vmem:[%s6 + $0x18] sm:$0xff]
    %v234 = vld [vmem:[%s6 + $0x20] sm:$0xff]
    %v235 = vld [vmem:[%s6 + $0x28] sm:$0xff]
    %v236 = vld [vmem:[%s6 + $0x30] sm:$0xff]
    %v237 = vld [vmem:[%s6 + $0x38] sm:$0xff]
    %v238 = vld [vmem:[%s7] sm:$0x3]
    %v240 = vlaneseq
    %v241 = vshrl.u32 %v240, 7
    %v242 = vsub.s32 0, %v241
    %v243 = vrot.slane %v238, %v242
    %v244 = vlaneseq
    %v245 = vshrl.u32 %v244, 7
    %v246 = vsub.s32 1, %v245
    %v247 = vrot.slane %v238, %v246
    %v251 = vsel %vm184, %v226, 0
    %v254 = vsel %vm184, %v227, 0
    %256 = vmatprep.subr.mxu0 0.0
    %257 = vmatpush1.msra.mxu0 0.0
    %258 = vmatprep.subr.mxu0 0.0
    %259 = vmatpush1.msra.mxu0 0.0
    %260 = vmatprep.subr.mxu0 0.0
    %261 = vmatpush1.msra.mxu0 0.0
    %262 = vmatprep.subr.mxu0 0.0
    %263 = vmatpush1.msra.mxu0 0.0
    %264 = vmatprep.subr.mxu0 0.0
    %265 = vmatpush1.msra.mxu0 0.0
    %266 = vmatprep.subr.mxu0 0.0
    %267 = vmatpush1.msra.mxu0 0.0
    %268 = vmatprep.subr.mxu0 0.0
    %269 = vmatpush1.msra.mxu0 0.0
    %270 = vmatprep.subr.mxu0 0.0
    %271 = vmatpush1.msra.mxu0 0.0
    %272 = vmatprep.subr.mxu0 0.0
    %273 = vmatpush1.msra.mxu0 0.0
    %274 = vmatprep.subr.mxu0 0.0
    %275 = vmatpush1.msra.mxu0 0.0
    %276 = vmatprep.subr.mxu0 0.0
    %277 = vmatpush1.msra.mxu0 0.0
    %278 = vmatprep.subr.mxu0 0.0
    %279 = vmatpush1.msra.mxu0 0.0
    %280 = vmatprep.subr.mxu0 %v237
    %281 = vmatpush1.msra.mxu0 %v236
    %282 = vmatprep.subr.mxu0 %v235
    %283 = vmatpush1.msra.mxu0 %v234
    %284 = vmatprep.subr.mxu0 %v233
    %285 = vmatpush1.msra.mxu0 %v232
    %286 = vmatprep.subr.mxu0 %v231
    %287 = vmatpush1.msra.mxu0 %v230
    %288 = vmatprep.subr.mxu0 0.0
    %289 = vmatpush2.msra.mxu0 0.0
    %290 = vmatprep.subr.mxu0 0.0
    %291 = vmatpush2.msra.mxu0 0.0
    %292 = vmatprep.subr.mxu0 0.0
    %293 = vmatpush2.msra.mxu0 0.0
    %294 = vmatprep.subr.mxu0 0.0
    %295 = vmatpush2.msra.mxu0 0.0
    %296 = vmatprep.subr.mxu0 0.0
    %297 = vmatpush2.msra.mxu0 0.0
    %298 = vmatprep.subr.mxu0 0.0
    %299 = vmatpush2.msra.mxu0 0.0
    %300 = vmatprep.subr.mxu0 0.0
    %301 = vmatpush2.msra.mxu0 0.0
    %302 = vmatprep.subr.mxu0 0.0
    %303 = vmatpush2.msra.mxu0 0.0
    %304 = vmatprep.subr.mxu0 0.0
    %305 = vmatpush2.msra.mxu0 0.0
    %306 = vmatprep.subr.mxu0 0.0
    %307 = vmatpush2.msra.mxu0 0.0
    %308 = vmatprep.subr.mxu0 0.0
    %309 = vmatpush2.msra.mxu0 0.0
    %310 = vmatprep.subr.mxu0 0.0
    %311 = vmatpush2.msra.mxu0 0.0
    %312 = vmatprep.subr.mxu0 0.0
    %313 = vmatpush2.msra.mxu0 0.0
    %314 = vmatprep.subr.mxu0 0.0
    %315 = vmatpush2.msra.mxu0 0.0
    %316 = vmatprep.subr.mxu0 0.0
    %317 = vmatpush2.msra.mxu0 0.0
    %318 = vmatprep.subr.mxu0 0.0
    %319 = vmatpush2.msra.mxu0 0.0
    %320 = vmatprep.mubr.f32.mxu0 0.0
    %321 = vmatmul.mubr.f32.gmra.mxu0 %v251
    %v322 = vpop.f32.mrf.mxu0
    %v323 = vadd.f32 %v243, %v322
    %v324 = vpop.f32.mrf.mxu0
    %v325 = vadd.f32 %v247, %v324
    %326 = vmatprep.mubr.f32.mxu0 0.0
    %327 = vmatmul.mubr.f32.gmra.mxu0 %v254
    %v328 = vpop.f32.mrf.mxu0
    %v329 = vadd.f32 %v243, %v328
    %v330 = vpop.f32.mrf.mxu0
    %v331 = vadd.f32 %v247, %v330
    %332 = vdwg.mxu0
    %v333 = vld [vmem:[%s11] sm:$0x1]
    %336 = vrot.lane.b32.xlu0 %v323, 96
    %v337 = vpop.permute.xlu0 %336
    %338 = vrot.lane.b32.xlu0 %v329, 96
    %v339 = vpop.permute.xlu0 %338
    %vm340 = vcmask 64512
    %v341 = vsel %vm340, %v323, 0
    %v343 = vsel %vm340, %v329, 0
    %v345 = vsel %vm340, %v337, 0
    %v347 = vsel %vm340, %v339, 0
    %349 = vmatprep.subr.mxu0 0.0
    %350 = vmatpush1.xpose.msra.mxu0 0.0
    %351 = vmatprep.subr.mxu0 0.0
    %352 = vmatpush1.xpose.msra.mxu0 0.0
    %353 = vmatprep.subr.mxu0 0.0
    %354 = vmatpush1.xpose.msra.mxu0 0.0
    %355 = vmatprep.subr.mxu0 0.0
    %356 = vmatpush1.xpose.msra.mxu0 0.0
    %357 = vmatprep.subr.mxu0 0.0
    %358 = vmatpush1.xpose.msra.mxu0 0.0
    %359 = vmatprep.subr.mxu0 0.0
    %360 = vmatpush1.xpose.msra.mxu0 0.0
    %361 = vmatprep.subr.mxu0 0.0
    %362 = vmatpush1.xpose.msra.mxu0 0.0
    %363 = vmatprep.subr.mxu0 0.0
    %364 = vmatpush1.xpose.msra.mxu0 0.0
    %365 = vmatprep.subr.mxu0 0.0
    %366 = vmatpush1.xpose.msra.mxu0 0.0
    %367 = vmatprep.subr.mxu0 0.0
    %368 = vmatpush1.xpose.msra.mxu0 0.0
    %369 = vmatprep.subr.mxu0 0.0
    %370 = vmatpush1.xpose.msra.mxu0 0.0
    %371 = vmatprep.subr.mxu0 0.0
    %372 = vmatpush1.xpose.msra.mxu0 0.0
    %373 = vmatprep.subr.mxu0 0.0
    %374 = vmatpush1.xpose.msra.mxu0 0.0
    %375 = vmatprep.subr.mxu0 0.0
    %376 = vmatpush1.xpose.msra.mxu0 0.0
    %377 = vmatprep.subr.mxu0 0.0
    %378 = vmatpush1.xpose.msra.mxu0 %v347
    %379 = vmatprep.subr.mxu0 0.0
    %380 = vmatpush1.xpose.msra.mxu0 %v345
    %381 = vmatprep.subr.mxu0 0.0
    %382 = vmatpush2.xpose.msra.mxu0 0.0
    %383 = vmatprep.subr.mxu0 0.0
    %384 = vmatpush2.xpose.msra.mxu0 0.0
    %385 = vmatprep.subr.mxu0 0.0
    %386 = vmatpush2.xpose.msra.mxu0 0.0
    %387 = vmatprep.subr.mxu0 0.0
    %388 = vmatpush2.xpose.msra.mxu0 0.0
    %389 = vmatprep.subr.mxu0 0.0
    %390 = vmatpush2.xpose.msra.mxu0 0.0
    %391 = vmatprep.subr.mxu0 0.0
    %392 = vmatpush2.xpose.msra.mxu0 0.0
    %393 = vmatprep.subr.mxu0 0.0
    %394 = vmatpush2.xpose.msra.mxu0 0.0
    %395 = vmatprep.subr.mxu0 0.0
    %396 = vmatpush2.xpose.msra.mxu0 0.0
    %397 = vmatprep.subr.mxu0 0.0
    %398 = vmatpush2.xpose.msra.mxu0 0.0
    %399 = vmatprep.subr.mxu0 0.0
    %400 = vmatpush2.xpose.msra.mxu0 0.0
    %401 = vmatprep.subr.mxu0 0.0
    %402 = vmatpush2.xpose.msra.mxu0 0.0
    %403 = vmatprep.subr.mxu0 0.0
    %404 = vmatpush2.xpose.msra.mxu0 0.0
    %405 = vmatprep.subr.mxu0 0.0
    %406 = vmatpush2.xpose.msra.mxu0 0.0
    %407 = vmatprep.subr.mxu0 0.0
    %408 = vmatpush2.xpose.msra.mxu0 0.0
    %409 = vmatprep.subr.mxu0 0.0
    %410 = vmatpush2.xpose.msra.mxu0 0.0
    %411 = vmatprep.subr.mxu0 0.0
    %412 = vmatpush2.xpose.msra.mxu0 0.0
    %413 = vmatprep.mubr.f32.mxu0 0.0
    %414 = vmatmul.mubr.f32.gmra.mxu0 %v341
    %v415 = vpop.f32.mrf.mxu0
    %v416 = vadd.f32 %v228, %v415
    %v417 = vpop.f32.mrf.mxu0
    %418 = vmatprep.mubr.f32.mxu0 0.0
    %419 = vmatmul.mubr.f32.gmra.mxu0 %v343
    %v420 = vpop.f32.mrf.mxu0
    %v421 = vadd.f32 %v229, %v420
    %v422 = vpop.f32.mrf.mxu0
    %423 = vdwg.mxu0
    %vm424 = vcmask 130048
    %v425 = vsel %vm424, %v416, -inf
    %426 = vmax.xlane.f32.xlu0 %v425
    %v427 = vpop.xlane.xlu0 %426
    %v428 = vsel %vm424, %v421, -inf
    %429 = vmax.xlane.f32.xlu0 %v428
    %v430 = vpop.xlane.xlu0 %429
    %v431 = vsub.f32 %v416, %v427
    %v432 = vsub.f32 %v421, %v430
    %v433 = vmul.f32 %v431, 1.442695
    %v434 = vpow.pop %v433
    %v435 = vmul.f32 %v432, 1.442695
    %v436 = vpow.pop %v435
    %v437 = vsel %vm424, %v434, 0.0
    %438 = vadd.xlane.f32.xlu0 %v437
    %v439 = vpop.xlane.xlu0 %438
    %v440 = vsel %vm424, %v436, 0.0
    %441 = vadd.xlane.f32.xlu0 %v440
    %v442 = vpop.xlane.xlu0 %441
    %v443 = vrcp.pop %v439
    %v444 = vmul.f32 %v434, %v443
    %v445 = vrcp.pop %v442
    %v446 = vmul.f32 %v436, %v445
    %447 = vrot.lane.b32.xlu0 %v323, 64
    %v448 = vpop.permute.xlu0 %447
    %449 = vrot.lane.b32.xlu0 %v329, 64
    %v450 = vpop.permute.xlu0 %449
    %v454 = vsel %vm424, %v444, 0
    %v457 = vsel %vm424, %v446, 0
    %459 = vmatprep.subr.mxu0 0.0
    %460 = vmatpush1.msra.mxu0 0.0
    %461 = vmatprep.subr.mxu0 0.0
    %462 = vmatpush1.msra.mxu0 0.0
    %463 = vmatprep.subr.mxu0 0.0
    %464 = vmatpush1.msra.mxu0 0.0
    %465 = vmatprep.subr.mxu0 0.0
    %466 = vmatpush1.msra.mxu0 0.0
    %467 = vmatprep.subr.mxu0 0.0
    %468 = vmatpush1.msra.mxu0 0.0
    %469 = vmatprep.subr.mxu0 0.0
    %470 = vmatpush1.msra.mxu0 0.0
    %471 = vmatprep.subr.mxu0 0.0
    %472 = vmatpush1.msra.mxu0 0.0
    %473 = vmatprep.subr.mxu0 0.0
    %474 = vmatpush1.msra.mxu0 0.0
    %475 = vmatprep.subr.mxu0 0.0
    %476 = vmatpush1.msra.mxu0 0.0
    %477 = vmatprep.subr.mxu0 0.0
    %478 = vmatpush1.msra.mxu0 0.0
    %479 = vmatprep.subr.mxu0 0.0
    %480 = vmatpush1.msra.mxu0 0.0
    %481 = vmatprep.subr.mxu0 0.0
    %482 = vmatpush1.msra.mxu0 0.0
    %483 = vmatprep.subr.mxu0 0.0
    %484 = vmatpush1.msra.mxu0 0.0
    %485 = vmatprep.subr.mxu0 0.0
    %486 = vmatpush1.msra.mxu0 0.0
    %487 = vmatprep.subr.mxu0 0.0
    %488 = vmatpush1.msra.mxu0 %v450
    %489 = vmatprep.subr.mxu0 0.0
    %490 = vmatpush1.msra.mxu0 %v448
    %491 = vmatprep.subr.mxu0 0.0
    %492 = vmatpush2.msra.mxu0 0.0
    %493 = vmatprep.subr.mxu0 0.0
    %494 = vmatpush2.msra.mxu0 0.0
    %495 = vmatprep.subr.mxu0 0.0
    %496 = vmatpush2.msra.mxu0 0.0
    %497 = vmatprep.subr.mxu0 0.0
    %498 = vmatpush2.msra.mxu0 0.0
    %499 = vmatprep.subr.mxu0 0.0
    %500 = vmatpush2.msra.mxu0 0.0
    %501 = vmatprep.subr.mxu0 0.0
    %502 = vmatpush2.msra.mxu0 0.0
    %503 = vmatprep.subr.mxu0 0.0
    %504 = vmatpush2.msra.mxu0 0.0
    %505 = vmatprep.subr.mxu0 0.0
    %506 = vmatpush2.msra.mxu0 0.0
    %507 = vmatprep.subr.mxu0 0.0
    %508 = vmatpush2.msra.mxu0 0.0
    %509 = vmatprep.subr.mxu0 0.0
    %510 = vmatpush2.msra.mxu0 0.0
    %511 = vmatprep.subr.mxu0 0.0
    %512 = vmatpush2.msra.mxu0 0.0
    %513 = vmatprep.subr.mxu0 0.0
    %514 = vmatpush2.msra.mxu0 0.0
    %515 = vmatprep.subr.mxu0 0.0
    %516 = vmatpush2.msra.mxu0 0.0
    %517 = vmatprep.subr.mxu0 0.0
    %518 = vmatpush2.msra.mxu0 0.0
    %519 = vmatprep.subr.mxu0 0.0
    %520 = vmatpush2.msra.mxu0 0.0
    %521 = vmatprep.subr.mxu0 0.0
    %522 = vmatpush2.msra.mxu0 0.0
    %523 = vmatprep.mubr.f32.mxu0 0.0
    %524 = vmatmul.mubr.f32.gmra.mxu0 %v454
    %v525 = vpop.f32.mrf.mxu0
    %v526 = vadd.f32 0.0, %v525
    %v527 = vpop.f32.mrf.mxu0
    %528 = vmatprep.mubr.f32.mxu0 0.0
    %529 = vmatmul.mubr.f32.gmra.mxu0 %v457
    %v530 = vpop.f32.mrf.mxu0
    %v531 = vadd.f32 0.0, %v530
    %v532 = vpop.f32.mrf.mxu0
    %533 = vdwg.mxu0
    %v535 = vlaneseq
    %v536 = vshrl.u32 %v535, 7
    %v537 = vsub.s32 0, %v536
    %v538 = vrot.slane %v333, %v537
    %v540 = vadd.f32 %v538, %v526
    %v541 = vadd.f32 %v538, %v531
    %542 = vrot.lane.b32.xlu0 %v323, 120
    %v543 = vpop.permute.xlu0 %542
    %544 = vrot.lane.b32.xlu0 %v329, 120
    %v545 = vpop.permute.xlu0 %544
    %546 = vrot.lane.b32.xlu0 %v323, 88
    %v547 = vpop.permute.xlu0 %546
    %548 = vrot.lane.b32.xlu0 %v329, 88
    %v549 = vpop.permute.xlu0 %548
    %v550 = vsel %vm340, %v543, 0
    %v552 = vsel %vm340, %v545, 0
    %v554 = vsel %vm340, %v547, 0
    %v556 = vsel %vm340, %v549, 0
    %558 = vmatprep.subr.mxu0 0.0
    %559 = vmatpush1.xpose.msra.mxu0 0.0
    %560 = vmatprep.subr.mxu0 0.0
    %561 = vmatpush1.xpose.msra.mxu0 0.0
    %562 = vmatprep.subr.mxu0 0.0
    %563 = vmatpush1.xpose.msra.mxu0 0.0
    %564 = vmatprep.subr.mxu0 0.0
    %565 = vmatpush1.xpose.msra.mxu0 0.0
    %566 = vmatprep.subr.mxu0 0.0
    %567 = vmatpush1.xpose.msra.mxu0 0.0
    %568 = vmatprep.subr.mxu0 0.0
    %569 = vmatpush1.xpose.msra.mxu0 0.0
    %570 = vmatprep.subr.mxu0 0.0
    %571 = vmatpush1.xpose.msra.mxu0 0.0
    %572 = vmatprep.subr.mxu0 0.0
    %573 = vmatpush1.xpose.msra.mxu0 0.0
    %574 = vmatprep.subr.mxu0 0.0
    %575 = vmatpush1.xpose.msra.mxu0 0.0
    %576 = vmatprep.subr.mxu0 0.0
    %577 = vmatpush1.xpose.msra.mxu0 0.0
    %578 = vmatprep.subr.mxu0 0.0
    %579 = vmatpush1.xpose.msra.mxu0 0.0
    %580 = vmatprep.subr.mxu0 0.0
    %581 = vmatpush1.xpose.msra.mxu0 0.0
    %582 = vmatprep.subr.mxu0 0.0
    %583 = vmatpush1.xpose.msra.mxu0 0.0
    %584 = vmatprep.subr.mxu0 0.0
    %585 = vmatpush1.xpose.msra.mxu0 0.0
    %586 = vmatprep.subr.mxu0 0.0
    %587 = vmatpush1.xpose.msra.mxu0 %v556
    %588 = vmatprep.subr.mxu0 0.0
    %589 = vmatpush1.xpose.msra.mxu0 %v554
    %590 = vmatprep.subr.mxu0 0.0
    %591 = vmatpush2.xpose.msra.mxu0 0.0
    %592 = vmatprep.subr.mxu0 0.0
    %593 = vmatpush2.xpose.msra.mxu0 0.0
    %594 = vmatprep.subr.mxu0 0.0
    %595 = vmatpush2.xpose.msra.mxu0 0.0
    %596 = vmatprep.subr.mxu0 0.0
    %597 = vmatpush2.xpose.msra.mxu0 0.0
    %598 = vmatprep.subr.mxu0 0.0
    %599 = vmatpush2.xpose.msra.mxu0 0.0
    %600 = vmatprep.subr.mxu0 0.0
    %601 = vmatpush2.xpose.msra.mxu0 0.0
    %602 = vmatprep.subr.mxu0 0.0
    %603 = vmatpush2.xpose.msra.mxu0 0.0
    %604 = vmatprep.subr.mxu0 0.0
    %605 = vmatpush2.xpose.msra.mxu0 0.0
    %606 = vmatprep.subr.mxu0 0.0
    %607 = vmatpush2.xpose.msra.mxu0 0.0
    %608 = vmatprep.subr.mxu0 0.0
    %609 = vmatpush2.xpose.msra.mxu0 0.0
    %610 = vmatprep.subr.mxu0 0.0
    %611 = vmatpush2.xpose.msra.mxu0 0.0
    %612 = vmatprep.subr.mxu0 0.0
    %613 = vmatpush2.xpose.msra.mxu0 0.0
    %614 = vmatprep.subr.mxu0 0.0
    %615 = vmatpush2.xpose.msra.mxu0 0.0
    %616 = vmatprep.subr.mxu0 0.0
    %617 = vmatpush2.xpose.msra.mxu0 0.0
    %618 = vmatprep.subr.mxu0 0.0
    %619 = vmatpush2.xpose.msra.mxu0 0.0
    %620 = vmatprep.subr.mxu0 0.0
    %621 = vmatpush2.xpose.msra.mxu0 0.0
    %622 = vmatprep.mubr.f32.mxu0 0.0
    %623 = vmatmul.mubr.f32.gmra.mxu0 %v550
    %v624 = vpop.f32.mrf.mxu0
    %v625 = vadd.f32 %v228, %v624
    %v626 = vpop.f32.mrf.mxu0
    %627 = vmatprep.mubr.f32.mxu0 0.0
    %628 = vmatmul.mubr.f32.gmra.mxu0 %v552
    %v629 = vpop.f32.mrf.mxu0
    %v630 = vadd.f32 %v229, %v629
    %v631 = vpop.f32.mrf.mxu0
    %632 = vdwg.mxu0
    %v633 = vsel %vm424, %v625, -inf
    %634 = vmax.xlane.f32.xlu0 %v633
    %v635 = vpop.xlane.xlu0 %634
    %v636 = vsel %vm424, %v630, -inf
    %637 = vmax.xlane.f32.xlu0 %v636
    %v638 = vpop.xlane.xlu0 %637
    %v639 = vsub.f32 %v625, %v635
    %v640 = vsub.f32 %v630, %v638
    %v641 = vmul.f32 %v639, 1.442695
    %v642 = vpow.pop %v641
    %v643 = vmul.f32 %v640, 1.442695
    %v644 = vpow.pop %v643
    %v645 = vsel %vm424, %v642, 0.0
    %646 = vadd.xlane.f32.xlu0 %v645
    %v647 = vpop.xlane.xlu0 %646
    %v648 = vsel %vm424, %v644, 0.0
    %649 = vadd.xlane.f32.xlu0 %v648
    %v650 = vpop.xlane.xlu0 %649
    %v651 = vrcp.pop %v647
    %v652 = vmul.f32 %v642, %v651
    %v653 = vrcp.pop %v650
    %v654 = vmul.f32 %v644, %v653
    %655 = vrot.lane.b32.xlu0 %v323, 32
    %v656 = vpop.permute.xlu0 %655
    %657 = vrot.lane.b32.xlu0 %v329, 32
    %v658 = vpop.permute.xlu0 %657
    %v662 = vsel %vm424, %v652, 0
    %v665 = vsel %vm424, %v654, 0
    %667 = vmatprep.subr.mxu0 0.0
    %668 = vmatpush1.msra.mxu0 0.0
    %669 = vmatprep.subr.mxu0 0.0
    %670 = vmatpush1.msra.mxu0 0.0
    %671 = vmatprep.subr.mxu0 0.0
    %672 = vmatpush1.msra.mxu0 0.0
    %673 = vmatprep.subr.mxu0 0.0
    %674 = vmatpush1.msra.mxu0 0.0
    %675 = vmatprep.subr.mxu0 0.0
    %676 = vmatpush1.msra.mxu0 0.0
    %677 = vmatprep.subr.mxu0 0.0
    %678 = vmatpush1.msra.mxu0 0.0
    %679 = vmatprep.subr.mxu0 0.0
    %680 = vmatpush1.msra.mxu0 0.0
    %681 = vmatprep.subr.mxu0 0.0
    %682 = vmatpush1.msra.mxu0 0.0
    %683 = vmatprep.subr.mxu0 0.0
    %684 = vmatpush1.msra.mxu0 0.0
    %685 = vmatprep.subr.mxu0 0.0
    %686 = vmatpush1.msra.mxu0 0.0
    %687 = vmatprep.subr.mxu0 0.0
    %688 = vmatpush1.msra.mxu0 0.0
    %689 = vmatprep.subr.mxu0 0.0
    %690 = vmatpush1.msra.mxu0 0.0
    %691 = vmatprep.subr.mxu0 0.0
    %692 = vmatpush1.msra.mxu0 0.0
    %693 = vmatprep.subr.mxu0 0.0
    %694 = vmatpush1.msra.mxu0 0.0
    %695 = vmatprep.subr.mxu0 0.0
    %696 = vmatpush1.msra.mxu0 %v658
    %697 = vmatprep.subr.mxu0 0.0
    %698 = vmatpush1.msra.mxu0 %v656
    %699 = vmatprep.subr.mxu0 0.0
    %700 = vmatpush2.msra.mxu0 0.0
    %701 = vmatprep.subr.mxu0 0.0
    %702 = vmatpush2.msra.mxu0 0.0
    %703 = vmatprep.subr.mxu0 0.0
    %704 = vmatpush2.msra.mxu0 0.0
    %705 = vmatprep.subr.mxu0 0.0
    %706 = vmatpush2.msra.mxu0 0.0
    %707 = vmatprep.subr.mxu0 0.0
    %708 = vmatpush2.msra.mxu0 0.0
    %709 = vmatprep.subr.mxu0 0.0
    %710 = vmatpush2.msra.mxu0 0.0
    %711 = vmatprep.subr.mxu0 0.0
    %712 = vmatpush2.msra.mxu0 0.0
    %713 = vmatprep.subr.mxu0 0.0
    %714 = vmatpush2.msra.mxu0 0.0
    %715 = vmatprep.subr.mxu0 0.0
    %716 = vmatpush2.msra.mxu0 0.0
    %717 = vmatprep.subr.mxu0 0.0
    %718 = vmatpush2.msra.mxu0 0.0
    %719 = vmatprep.subr.mxu0 0.0
    %720 = vmatpush2.msra.mxu0 0.0
    %721 = vmatprep.subr.mxu0 0.0
    %722 = vmatpush2.msra.mxu0 0.0
    %723 = vmatprep.subr.mxu0 0.0
    %724 = vmatpush2.msra.mxu0 0.0
    %725 = vmatprep.subr.mxu0 0.0
    %726 = vmatpush2.msra.mxu0 0.0
    %727 = vmatprep.subr.mxu0 0.0
    %728 = vmatpush2.msra.mxu0 0.0
    %729 = vmatprep.subr.mxu0 0.0
    %730 = vmatpush2.msra.mxu0 0.0
    %731 = vmatprep.mubr.f32.mxu0 0.0
    %732 = vmatmul.mubr.f32.gmra.mxu0 %v662
    %v733 = vpop.f32.mrf.mxu0
    %v734 = vadd.f32 0.0, %v733
    %v735 = vpop.f32.mrf.mxu0
    %736 = vmatprep.mubr.f32.mxu0 0.0
    %737 = vmatmul.mubr.f32.gmra.mxu0 %v665
    %v738 = vpop.f32.mrf.mxu0
    %v739 = vadd.f32 0.0, %v738
    %v740 = vpop.f32.mrf.mxu0
    %741 = vdwg.mxu0
    %v742 = vadd.f32 %v540, %v734
    %v743 = vadd.f32 %v541, %v739
    %744 = vrot.lane.b32.xlu0 %v323, 112
    %v745 = vpop.permute.xlu0 %744
    %746 = vrot.lane.b32.xlu0 %v329, 112
    %v747 = vpop.permute.xlu0 %746
    %748 = vrot.lane.b32.xlu0 %v323, 80
    %v749 = vpop.permute.xlu0 %748
    %750 = vrot.lane.b32.xlu0 %v329, 80
    %v751 = vpop.permute.xlu0 %750
    %v752 = vsel %vm340, %v745, 0
    %v754 = vsel %vm340, %v747, 0
    %v756 = vsel %vm340, %v749, 0
    %v758 = vsel %vm340, %v751, 0
    %760 = vmatprep.subr.mxu0 0.0
    %761 = vmatpush1.xpose.msra.mxu0 0.0
    %762 = vmatprep.subr.mxu0 0.0
    %763 = vmatpush1.xpose.msra.mxu0 0.0
    %764 = vmatprep.subr.mxu0 0.0
    %765 = vmatpush1.xpose.msra.mxu0 0.0
    %766 = vmatprep.subr.mxu0 0.0
    %767 = vmatpush1.xpose.msra.mxu0 0.0
    %768 = vmatprep.subr.mxu0 0.0
    %769 = vmatpush1.xpose.msra.mxu0 0.0
    %770 = vmatprep.subr.mxu0 0.0
    %771 = vmatpush1.xpose.msra.mxu0 0.0
    %772 = vmatprep.subr.mxu0 0.0
    %773 = vmatpush1.xpose.msra.mxu0 0.0
    %774 = vmatprep.subr.mxu0 0.0
    %775 = vmatpush1.xpose.msra.mxu0 0.0
    %776 = vmatprep.subr.mxu0 0.0
    %777 = vmatpush1.xpose.msra.mxu0 0.0
    %778 = vmatprep.subr.mxu0 0.0
    %779 = vmatpush1.xpose.msra.mxu0 0.0
    %780 = vmatprep.subr.mxu0 0.0
    %781 = vmatpush1.xpose.msra.mxu0 0.0
    %782 = vmatprep.subr.mxu0 0.0
    %783 = vmatpush1.xpose.msra.mxu0 0.0
    %784 = vmatprep.subr.mxu0 0.0
    %785 = vmatpush1.xpose.msra.mxu0 0.0
    %786 = vmatprep.subr.mxu0 0.0
    %787 = vmatpush1.xpose.msra.mxu0 0.0
    %788 = vmatprep.subr.mxu0 0.0
    %789 = vmatpush1.xpose.msra.mxu0 %v758
    %790 = vmatprep.subr.mxu0 0.0
    %791 = vmatpush1.xpose.msra.mxu0 %v756
    %792 = vmatprep.subr.mxu0 0.0
    %793 = vmatpush2.xpose.msra.mxu0 0.0
    %794 = vmatprep.subr.mxu0 0.0
    %795 = vmatpush2.xpose.msra.mxu0 0.0
    %796 = vmatprep.subr.mxu0 0.0
    %797 = vmatpush2.xpose.msra.mxu0 0.0
    %798 = vmatprep.subr.mxu0 0.0
    %799 = vmatpush2.xpose.msra.mxu0 0.0
    %800 = vmatprep.subr.mxu0 0.0
    %801 = vmatpush2.xpose.msra.mxu0 0.0
    %802 = vmatprep.subr.mxu0 0.0
    %803 = vmatpush2.xpose.msra.mxu0 0.0
    %804 = vmatprep.subr.mxu0 0.0
    %805 = vmatpush2.xpose.msra.mxu0 0.0
    %806 = vmatprep.subr.mxu0 0.0
    %807 = vmatpush2.xpose.msra.mxu0 0.0
    %808 = vmatprep.subr.mxu0 0.0
    %809 = vmatpush2.xpose.msra.mxu0 0.0
    %810 = vmatprep.subr.mxu0 0.0
    %811 = vmatpush2.xpose.msra.mxu0 0.0
    %812 = vmatprep.subr.mxu0 0.0
    %813 = vmatpush2.xpose.msra.mxu0 0.0
    %814 = vmatprep.subr.mxu0 0.0
    %815 = vmatpush2.xpose.msra.mxu0 0.0
    %816 = vmatprep.subr.mxu0 0.0
    %817 = vmatpush2.xpose.msra.mxu0 0.0
    %818 = vmatprep.subr.mxu0 0.0
    %819 = vmatpush2.xpose.msra.mxu0 0.0
    %820 = vmatprep.subr.mxu0 0.0
    %821 = vmatpush2.xpose.msra.mxu0 0.0
    %822 = vmatprep.subr.mxu0 0.0
    %823 = vmatpush2.xpose.msra.mxu0 0.0
    %824 = vmatprep.mubr.f32.mxu0 0.0
    %825 = vmatmul.mubr.f32.gmra.mxu0 %v752
    %v826 = vpop.f32.mrf.mxu0
    %v827 = vadd.f32 %v228, %v826
    %v828 = vpop.f32.mrf.mxu0
    %829 = vmatprep.mubr.f32.mxu0 0.0
    %830 = vmatmul.mubr.f32.gmra.mxu0 %v754
    %v831 = vpop.f32.mrf.mxu0
    %v832 = vadd.f32 %v229, %v831
    %v833 = vpop.f32.mrf.mxu0
    %834 = vdwg.mxu0
    %v835 = vsel %vm424, %v827, -inf
    %836 = vmax.xlane.f32.xlu0 %v835
    %v837 = vpop.xlane.xlu0 %836
    %v838 = vsel %vm424, %v832, -inf
    %839 = vmax.xlane.f32.xlu0 %v838
    %v840 = vpop.xlane.xlu0 %839
    %v841 = vsub.f32 %v827, %v837
    %v842 = vsub.f32 %v832, %v840
    %v843 = vmul.f32 %v841, 1.442695
    %v844 = vpow.pop %v843
    %v845 = vmul.f32 %v842, 1.442695
    %v846 = vpow.pop %v845
    %v847 = vsel %vm424, %v844, 0.0
    %848 = vadd.xlane.f32.xlu0 %v847
    %v849 = vpop.xlane.xlu0 %848
    %v850 = vsel %vm424, %v846, 0.0
    %851 = vadd.xlane.f32.xlu0 %v850
    %v852 = vpop.xlane.xlu0 %851
    %v853 = vrcp.pop %v849
    %v854 = vmul.f32 %v844, %v853
    %v855 = vrcp.pop %v852
    %v856 = vmul.f32 %v846, %v855
    %v858 = vsel %vm424, %v854, 0
    %v861 = vsel %vm424, %v856, 0
    %863 = vmatprep.subr.mxu0 0.0
    %864 = vmatpush1.msra.mxu0 0.0
    %865 = vmatprep.subr.mxu0 0.0
    %866 = vmatpush1.msra.mxu0 0.0
    %867 = vmatprep.subr.mxu0 0.0
    %868 = vmatpush1.msra.mxu0 0.0
    %869 = vmatprep.subr.mxu0 0.0
    %870 = vmatpush1.msra.mxu0 0.0
    %871 = vmatprep.subr.mxu0 0.0
    %872 = vmatpush1.msra.mxu0 0.0
    %873 = vmatprep.subr.mxu0 0.0
    %874 = vmatpush1.msra.mxu0 0.0
    %875 = vmatprep.subr.mxu0 0.0
    %876 = vmatpush1.msra.mxu0 0.0
    %877 = vmatprep.subr.mxu0 0.0
    %878 = vmatpush1.msra.mxu0 0.0
    %879 = vmatprep.subr.mxu0 0.0
    %880 = vmatpush1.msra.mxu0 0.0
    %881 = vmatprep.subr.mxu0 0.0
    %882 = vmatpush1.msra.mxu0 0.0
    %883 = vmatprep.subr.mxu0 0.0
    %884 = vmatpush1.msra.mxu0 0.0
    %885 = vmatprep.subr.mxu0 0.0
    %886 = vmatpush1.msra.mxu0 0.0
    %887 = vmatprep.subr.mxu0 0.0
    %888 = vmatpush1.msra.mxu0 0.0
    %889 = vmatprep.subr.mxu0 0.0
    %890 = vmatpush1.msra.mxu0 0.0
    %891 = vmatprep.subr.mxu0 0.0
    %892 = vmatpush1.msra.mxu0 %v331
    %893 = vmatprep.subr.mxu0 0.0
    %894 = vmatpush1.msra.mxu0 %v325
    %895 = vmatprep.subr.mxu0 0.0
    %896 = vmatpush2.msra.mxu0 0.0
    %897 = vmatprep.subr.mxu0 0.0
    %898 = vmatpush2.msra.mxu0 0.0
    %899 = vmatprep.subr.mxu0 0.0
    %900 = vmatpush2.msra.mxu0 0.0
    %901 = vmatprep.subr.mxu0 0.0
    %902 = vmatpush2.msra.mxu0 0.0
    %903 = vmatprep.subr.mxu0 0.0
    %904 = vmatpush2.msra.mxu0 0.0
    %905 = vmatprep.subr.mxu0 0.0
    %906 = vmatpush2.msra.mxu0 0.0
    %907 = vmatprep.subr.mxu0 0.0
    %908 = vmatpush2.msra.mxu0 0.0
    %909 = vmatprep.subr.mxu0 0.0
    %910 = vmatpush2.msra.mxu0 0.0
    %911 = vmatprep.subr.mxu0 0.0
    %912 = vmatpush2.msra.mxu0 0.0
    %913 = vmatprep.subr.mxu0 0.0
    %914 = vmatpush2.msra.mxu0 0.0
    %915 = vmatprep.subr.mxu0 0.0
    %916 = vmatpush2.msra.mxu0 0.0
    %917 = vmatprep.subr.mxu0 0.0
    %918 = vmatpush2.msra.mxu0 0.0
    %919 = vmatprep.subr.mxu0 0.0
    %920 = vmatpush2.msra.mxu0 0.0
    %921 = vmatprep.subr.mxu0 0.0
    %922 = vmatpush2.msra.mxu0 0.0
    %923 = vmatprep.subr.mxu0 0.0
    %924 = vmatpush2.msra.mxu0 0.0
    %925 = vmatprep.subr.mxu0 0.0
    %926 = vmatpush2.msra.mxu0 0.0
    %927 = vmatprep.mubr.f32.mxu0 0.0
    %928 = vmatmul.mubr.f32.gmra.mxu0 %v858
    %v929 = vpop.f32.mrf.mxu0
    %v930 = vadd.f32 0.0, %v929
    %v931 = vpop.f32.mrf.mxu0
    %932 = vmatprep.mubr.f32.mxu0 0.0
    %933 = vmatmul.mubr.f32.gmra.mxu0 %v861
    %v934 = vpop.f32.mrf.mxu0
    %v935 = vadd.f32 0.0, %v934
    %v936 = vpop.f32.mrf.mxu0
    %937 = vdwg.mxu0
    %v938 = vadd.f32 %v742, %v930
    %v939 = vadd.f32 %v743, %v935
    %940 = vrot.lane.b32.xlu0 %v323, 104
    %v941 = vpop.permute.xlu0 %940
    %942 = vrot.lane.b32.xlu0 %v329, 104
    %v943 = vpop.permute.xlu0 %942
    %944 = vrot.lane.b32.xlu0 %v323, 72
    %v945 = vpop.permute.xlu0 %944
    %946 = vrot.lane.b32.xlu0 %v329, 72
    %v947 = vpop.permute.xlu0 %946
    %v948 = vsel %vm340, %v941, 0
    %v950 = vsel %vm340, %v943, 0
    %v952 = vsel %vm340, %v945, 0
    %v954 = vsel %vm340, %v947, 0
    %956 = vmatprep.subr.mxu0 0.0
    %957 = vmatpush1.xpose.msra.mxu0 0.0
    %958 = vmatprep.subr.mxu0 0.0
    %959 = vmatpush1.xpose.msra.mxu0 0.0
    %960 = vmatprep.subr.mxu0 0.0
    %961 = vmatpush1.xpose.msra.mxu0 0.0
    %962 = vmatprep.subr.mxu0 0.0
    %963 = vmatpush1.xpose.msra.mxu0 0.0
    %964 = vmatprep.subr.mxu0 0.0
    %965 = vmatpush1.xpose.msra.mxu0 0.0
    %966 = vmatprep.subr.mxu0 0.0
    %967 = vmatpush1.xpose.msra.mxu0 0.0
    %968 = vmatprep.subr.mxu0 0.0
    %969 = vmatpush1.xpose.msra.mxu0 0.0
    %970 = vmatprep.subr.mxu0 0.0
    %971 = vmatpush1.xpose.msra.mxu0 0.0
    %972 = vmatprep.subr.mxu0 0.0
    %973 = vmatpush1.xpose.msra.mxu0 0.0
    %974 = vmatprep.subr.mxu0 0.0
    %975 = vmatpush1.xpose.msra.mxu0 0.0
    %976 = vmatprep.subr.mxu0 0.0
    %977 = vmatpush1.xpose.msra.mxu0 0.0
    %978 = vmatprep.subr.mxu0 0.0
    %979 = vmatpush1.xpose.msra.mxu0 0.0
    %980 = vmatprep.subr.mxu0 0.0
    %981 = vmatpush1.xpose.msra.mxu0 0.0
    %982 = vmatprep.subr.mxu0 0.0
    %983 = vmatpush1.xpose.msra.mxu0 0.0
    %984 = vmatprep.subr.mxu0 0.0
    %985 = vmatpush1.xpose.msra.mxu0 %v954
    %986 = vmatprep.subr.mxu0 0.0
    %987 = vmatpush1.xpose.msra.mxu0 %v952
    %988 = vmatprep.subr.mxu0 0.0
    %989 = vmatpush2.xpose.msra.mxu0 0.0
    %990 = vmatprep.subr.mxu0 0.0
    %991 = vmatpush2.xpose.msra.mxu0 0.0
    %992 = vmatprep.subr.mxu0 0.0
    %993 = vmatpush2.xpose.msra.mxu0 0.0
    %994 = vmatprep.subr.mxu0 0.0
    %995 = vmatpush2.xpose.msra.mxu0 0.0
    %996 = vmatprep.subr.mxu0 0.0
    %997 = vmatpush2.xpose.msra.mxu0 0.0
    %998 = vmatprep.subr.mxu0 0.0
    %999 = vmatpush2.xpose.msra.mxu0 0.0
    %1000 = vmatprep.subr.mxu0 0.0
    %1001 = vmatpush2.xpose.msra.mxu0 0.0
    %1002 = vmatprep.subr.mxu0 0.0
    %1003 = vmatpush2.xpose.msra.mxu0 0.0
    %1004 = vmatprep.subr.mxu0 0.0
    %1005 = vmatpush2.xpose.msra.mxu0 0.0
    %1006 = vmatprep.subr.mxu0 0.0
    %1007 = vmatpush2.xpose.msra.mxu0 0.0
    %1008 = vmatprep.subr.mxu0 0.0
    %1009 = vmatpush2.xpose.msra.mxu0 0.0
    %1010 = vmatprep.subr.mxu0 0.0
    %1011 = vmatpush2.xpose.msra.mxu0 0.0
    %1012 = vmatprep.subr.mxu0 0.0
    %1013 = vmatpush2.xpose.msra.mxu0 0.0
    %1014 = vmatprep.subr.mxu0 0.0
    %1015 = vmatpush2.xpose.msra.mxu0 0.0
    %1016 = vmatprep.subr.mxu0 0.0
    %1017 = vmatpush2.xpose.msra.mxu0 0.0
    %1018 = vmatprep.subr.mxu0 0.0
    %1019 = vmatpush2.xpose.msra.mxu0 0.0
    %1020 = vmatprep.mubr.f32.mxu0 0.0
    %1021 = vmatmul.mubr.f32.gmra.mxu0 %v948
    %v1022 = vpop.f32.mrf.mxu0
    %v1023 = vadd.f32 %v228, %v1022
    %v1024 = vpop.f32.mrf.mxu0
    %1025 = vmatprep.mubr.f32.mxu0 0.0
    %1026 = vmatmul.mubr.f32.gmra.mxu0 %v950
    %v1027 = vpop.f32.mrf.mxu0
    %v1028 = vadd.f32 %v229, %v1027
    %v1029 = vpop.f32.mrf.mxu0
    %1030 = vdwg.mxu0
    %v1031 = vsel %vm424, %v1023, -inf
    %1032 = vmax.xlane.f32.xlu0 %v1031
    %v1033 = vpop.xlane.xlu0 %1032
    %v1034 = vsel %vm424, %v1028, -inf
    %1035 = vmax.xlane.f32.xlu0 %v1034
    %v1036 = vpop.xlane.xlu0 %1035
    %v1037 = vsub.f32 %v1023, %v1033
    %v1038 = vsub.f32 %v1028, %v1036
    %v1039 = vmul.f32 %v1037, 1.442695
    %v1040 = vpow.pop %v1039
    %v1041 = vmul.f32 %v1038, 1.442695
    %v1042 = vpow.pop %v1041
    %v1043 = vsel %vm424, %v1040, 0.0
    %1044 = vadd.xlane.f32.xlu0 %v1043
    %v1045 = vpop.xlane.xlu0 %1044
    %v1046 = vsel %vm424, %v1042, 0.0
    %1047 = vadd.xlane.f32.xlu0 %v1046
    %v1048 = vpop.xlane.xlu0 %1047
    %v1049 = vrcp.pop %v1045
    %v1050 = vmul.f32 %v1040, %v1049
    %v1051 = vrcp.pop %v1048
    %v1052 = vmul.f32 %v1042, %v1051
    %1055 = vrot.lane.b32.xlu0 %v325, 96
    %v1056 = vpop.permute.xlu0 %1055
    %1057 = vrot.lane.b32.xlu0 %v331, 96
    %v1058 = vpop.permute.xlu0 %1057
    %v1062 = vsel %vm424, %v1050, 0
    %v1065 = vsel %vm424, %v1052, 0
    %1067 = vmatprep.subr.mxu0 0.0
    %1068 = vmatpush1.msra.mxu0 0.0
    %1069 = vmatprep.subr.mxu0 0.0
    %1070 = vmatpush1.msra.mxu0 0.0
    %1071 = vmatprep.subr.mxu0 0.0
    %1072 = vmatpush1.msra.mxu0 0.0
    %1073 = vmatprep.subr.mxu0 0.0
    %1074 = vmatpush1.msra.mxu0 0.0
    %1075 = vmatprep.subr.mxu0 0.0
    %1076 = vmatpush1.msra.mxu0 0.0
    %1077 = vmatprep.subr.mxu0 0.0
    %1078 = vmatpush1.msra.mxu0 0.0
    %1079 = vmatprep.subr.mxu0 0.0
    %1080 = vmatpush1.msra.mxu0 0.0
    %1081 = vmatprep.subr.mxu0 0.0
    %1082 = vmatpush1.msra.mxu0 0.0
    %1083 = vmatprep.subr.mxu0 0.0
    %1084 = vmatpush1.msra.mxu0 0.0
    %1085 = vmatprep.subr.mxu0 0.0
    %1086 = vmatpush1.msra.mxu0 0.0
    %1087 = vmatprep.subr.mxu0 0.0
    %1088 = vmatpush1.msra.mxu0 0.0
    %1089 = vmatprep.subr.mxu0 0.0
    %1090 = vmatpush1.msra.mxu0 0.0
    %1091 = vmatprep.subr.mxu0 0.0
    %1092 = vmatpush1.msra.mxu0 0.0
    %1093 = vmatprep.subr.mxu0 0.0
    %1094 = vmatpush1.msra.mxu0 0.0
    %1095 = vmatprep.subr.mxu0 0.0
    %1096 = vmatpush1.msra.mxu0 %v1058
    %1097 = vmatprep.subr.mxu0 0.0
    %1098 = vmatpush1.msra.mxu0 %v1056
    %1099 = vmatprep.subr.mxu0 0.0
    %1100 = vmatpush2.msra.mxu0 0.0
    %1101 = vmatprep.subr.mxu0 0.0
    %1102 = vmatpush2.msra.mxu0 0.0
    %1103 = vmatprep.subr.mxu0 0.0
    %1104 = vmatpush2.msra.mxu0 0.0
    %1105 = vmatprep.subr.mxu0 0.0
    %1106 = vmatpush2.msra.mxu0 0.0
    %1107 = vmatprep.subr.mxu0 0.0
    %1108 = vmatpush2.msra.mxu0 0.0
    %1109 = vmatprep.subr.mxu0 0.0
    %1110 = vmatpush2.msra.mxu0 0.0
    %1111 = vmatprep.subr.mxu0 0.0
    %1112 = vmatpush2.msra.mxu0 0.0
    %1113 = vmatprep.subr.mxu0 0.0
    %1114 = vmatpush2.msra.mxu0 0.0
    %1115 = vmatprep.subr.mxu0 0.0
    %1116 = vmatpush2.msra.mxu0 0.0
    %1117 = vmatprep.subr.mxu0 0.0
    %1118 = vmatpush2.msra.mxu0 0.0
    %1119 = vmatprep.subr.mxu0 0.0
    %1120 = vmatpush2.msra.mxu0 0.0
    %1121 = vmatprep.subr.mxu0 0.0
    %1122 = vmatpush2.msra.mxu0 0.0
    %1123 = vmatprep.subr.mxu0 0.0
    %1124 = vmatpush2.msra.mxu0 0.0
    %1125 = vmatprep.subr.mxu0 0.0
    %1126 = vmatpush2.msra.mxu0 0.0
    %1127 = vmatprep.subr.mxu0 0.0
    %1128 = vmatpush2.msra.mxu0 0.0
    %1129 = vmatprep.subr.mxu0 0.0
    %1130 = vmatpush2.msra.mxu0 0.0
    %1131 = vmatprep.mubr.f32.mxu0 0.0
    %1132 = vmatmul.mubr.f32.gmra.mxu0 %v1062
    %v1133 = vpop.f32.mrf.mxu0
    %v1134 = vadd.f32 0.0, %v1133
    %v1135 = vpop.f32.mrf.mxu0
    %1136 = vmatprep.mubr.f32.mxu0 0.0
    %1137 = vmatmul.mubr.f32.gmra.mxu0 %v1065
    %v1138 = vpop.f32.mrf.mxu0
    %v1139 = vadd.f32 0.0, %v1138
    %v1140 = vpop.f32.mrf.mxu0
    %1141 = vdwg.mxu0
    %v1142 = vadd.f32 %v938, %v1134
    %v1143 = vadd.f32 %v939, %v1139
    %v1144 = vadd.f32 %v226, %v1142
    %v1145 = vadd.f32 %v227, %v1143
    %s1146 = scalar_lea.vmem %s11, 1
    %v1147 = vld [vmem:[%s1146] sm:$0x1]
    %s1148 = scalar_lea.vmem %s11, 2
    %v1149 = vld [vmem:[%s1148] sm:$0x1]
    %v1150 = vsel %vm184, %v1144, 0.0
    %1151 = vadd.xlane.f32.xlu0 %v1150
    %v1152 = vpop.xlane.xlu0 %1151
    %v1153 = vsel %vm184, %v1145, 0.0
    %1154 = vadd.xlane.f32.xlu0 %v1153
    %v1155 = vpop.xlane.xlu0 %1154
    %v1156 = vmul.f32 %v1152, %v191
    %v1157 = vmul.f32 %v1155, %v191
    %v1158 = vsub.f32 %v1144, %v1156
    %v1159 = vsub.f32 %v1145, %v1157
    %v1160 = vmul.f32 %v1158, %v1158
    %v1161 = vmul.f32 %v1159, %v1159
    %v1162 = vsel %vm184, %v1160, 0.0
    %1163 = vadd.xlane.f32.xlu0 %v1162
    %v1164 = vpop.xlane.xlu0 %1163
    %v1165 = vsel %vm184, %v1161, 0.0
    %1166 = vadd.xlane.f32.xlu0 %v1165
    %v1167 = vpop.xlane.xlu0 %1166
    %v1168 = vmul.f32 %v1164, %v191
    %v1169 = vmul.f32 %v1167, %v191
    %v1170 = vadd.f32 %v1168, 1e-12
    %v1171 = vadd.f32 %v1169, 1e-12
    %v1172 = vrsqrt.pop %v1170
    %v1173 = vrsqrt.pop %v1171
    %v1174 = vmul.f32 %v1158, %v1172
    %v1175 = vmul.f32 %v1159, %v1173
    %v1177 = vlaneseq
    %v1178 = vshrl.u32 %v1177, 7
    %v1179 = vsub.s32 0, %v1178
    %v1180 = vrot.slane %v1147, %v1179
    %v1182 = vmul.f32 %v1174, %v1180
    %v1183 = vmul.f32 %v1175, %v1180
    %v1185 = vlaneseq
    %v1186 = vshrl.u32 %v1185, 7
    %v1187 = vsub.s32 0, %v1186
    %v1188 = vrot.slane %v1149, %v1187
    %v1190 = vadd.f32 %v1182, %v1188
    %v1191 = vadd.f32 %v1183, %v1188
    %v1192 = vld [vmem:[%s8] sm:$0xff]
    %v1193 = vld [vmem:[%s8 + $0x8] sm:$0xff]
    %v1194 = vld [vmem:[%s8 + $0x10] sm:$0xff]
    %v1195 = vld [vmem:[%s8 + $0x18] sm:$0xff]
    %v1196 = vld [vmem:[%s9] sm:$0x1]
    %v1198 = vlaneseq
    %v1199 = vshrl.u32 %v1198, 7
    %v1200 = vsub.s32 0, %v1199
    %v1201 = vrot.slane %v1196, %v1200
    %v1204 = vsel %vm184, %v1190, 0
    %v1207 = vsel %vm184, %v1191, 0
    %1209 = vmatprep.subr.mxu0 0.0
    %1210 = vmatpush1.msra.mxu0 0.0
    %1211 = vmatprep.subr.mxu0 0.0
    %1212 = vmatpush1.msra.mxu0 0.0
    %1213 = vmatprep.subr.mxu0 0.0
    %1214 = vmatpush1.msra.mxu0 0.0
    %1215 = vmatprep.subr.mxu0 0.0
    %1216 = vmatpush1.msra.mxu0 0.0
    %1217 = vmatprep.subr.mxu0 0.0
    %1218 = vmatpush1.msra.mxu0 0.0
    %1219 = vmatprep.subr.mxu0 0.0
    %1220 = vmatpush1.msra.mxu0 0.0
    %1221 = vmatprep.subr.mxu0 0.0
    %1222 = vmatpush1.msra.mxu0 0.0
    %1223 = vmatprep.subr.mxu0 0.0
    %1224 = vmatpush1.msra.mxu0 0.0
    %1225 = vmatprep.subr.mxu0 0.0
    %1226 = vmatpush1.msra.mxu0 0.0
    %1227 = vmatprep.subr.mxu0 0.0
    %1228 = vmatpush1.msra.mxu0 0.0
    %1229 = vmatprep.subr.mxu0 0.0
    %1230 = vmatpush1.msra.mxu0 0.0
    %1231 = vmatprep.subr.mxu0 0.0
    %1232 = vmatpush1.msra.mxu0 0.0
    %1233 = vmatprep.subr.mxu0 0.0
    %1234 = vmatpush1.msra.mxu0 %v1195
    %1235 = vmatprep.subr.mxu0 0.0
    %1236 = vmatpush1.msra.mxu0 %v1194
    %1237 = vmatprep.subr.mxu0 0.0
    %1238 = vmatpush1.msra.mxu0 %v1193
    %1239 = vmatprep.subr.mxu0 0.0
    %1240 = vmatpush1.msra.mxu0 %v1192
    %1241 = vmatprep.subr.mxu0 0.0
    %1242 = vmatpush2.msra.mxu0 0.0
    %1243 = vmatprep.subr.mxu0 0.0
    %1244 = vmatpush2.msra.mxu0 0.0
    %1245 = vmatprep.subr.mxu0 0.0
    %1246 = vmatpush2.msra.mxu0 0.0
    %1247 = vmatprep.subr.mxu0 0.0
    %1248 = vmatpush2.msra.mxu0 0.0
    %1249 = vmatprep.subr.mxu0 0.0
    %1250 = vmatpush2.msra.mxu0 0.0
    %1251 = vmatprep.subr.mxu0 0.0
    %1252 = vmatpush2.msra.mxu0 0.0
    %1253 = vmatprep.subr.mxu0 0.0
    %1254 = vmatpush2.msra.mxu0 0.0
    %1255 = vmatprep.subr.mxu0 0.0
    %1256 = vmatpush2.msra.mxu0 0.0
    %1257 = vmatprep.subr.mxu0 0.0
    %1258 = vmatpush2.msra.mxu0 0.0
    %1259 = vmatprep.subr.mxu0 0.0
    %1260 = vmatpush2.msra.mxu0 0.0
    %1261 = vmatprep.subr.mxu0 0.0
    %1262 = vmatpush2.msra.mxu0 0.0
    %1263 = vmatprep.subr.mxu0 0.0
    %1264 = vmatpush2.msra.mxu0 0.0
    %1265 = vmatprep.subr.mxu0 0.0
    %1266 = vmatpush2.msra.mxu0 0.0
    %1267 = vmatprep.subr.mxu0 0.0
    %1268 = vmatpush2.msra.mxu0 0.0
    %1269 = vmatprep.subr.mxu0 0.0
    %1270 = vmatpush2.msra.mxu0 0.0
    %1271 = vmatprep.subr.mxu0 0.0
    %1272 = vmatpush2.msra.mxu0 0.0
    %1273 = vmatprep.mubr.f32.mxu0 0.0
    %1274 = vmatmul.mubr.f32.gmra.mxu0 %v1204
    %v1275 = vpop.f32.mrf.mxu0
    %v1276 = vadd.f32 %v1201, %v1275
    %v1277 = vpop.f32.mrf.mxu0
    %1278 = vmatprep.mubr.f32.mxu0 0.0
    %1279 = vmatmul.mubr.f32.gmra.mxu0 %v1207
    %v1280 = vpop.f32.mrf.mxu0
    %v1281 = vadd.f32 %v1201, %v1280
    %v1282 = vpop.f32.mrf.mxu0
    %1283 = vdwg.mxu0
    %v1284 = vmul.f32 %v1276, %v1276
    %v1285 = vmul.f32 %v1281, %v1281
    %v1286 = vmul.f32 %v1276, %v1284
    %v1287 = vmul.f32 %v1281, %v1285
    %v1288 = vmul.f32 %v1286, 0.044715
    %v1289 = vmul.f32 %v1287, 0.044715
    %v1290 = vadd.f32 %v1276, %v1288
    %v1291 = vadd.f32 %v1281, %v1289
    %v1292 = vmul.f32 %v1290, 0.7978846
    %v1293 = vmul.f32 %v1291, 0.7978846
    %v1294 = vtanh.pop %v1292
    %v1295 = vtanh.pop %v1293
    %v1296 = vadd.f32 %v1294, 1.0
    %v1297 = vadd.f32 %v1295, 1.0
    %v1298 = vmul.f32 %v1296, 0.5
    %v1299 = vmul.f32 %v1297, 0.5
    %v1300 = vmul.f32 %v1276, %v1298
    %v1301 = vmul.f32 %v1281, %v1299
    %v1302 = vld [vmem:[%s10] sm:$0xff]
    %v1303 = vld [vmem:[%s10 + $0x8] sm:$0xff]
    %v1304 = vld [vmem:[%s10 + $0x10] sm:$0xff]
    %v1305 = vld [vmem:[%s10 + $0x18] sm:$0xff]
    %v1306 = vld [vmem:[%s10 + $0x20] sm:$0xff]
    %v1307 = vld [vmem:[%s10 + $0x28] sm:$0xff]
    %v1308 = vld [vmem:[%s10 + $0x30] sm:$0xff]
    %v1309 = vld [vmem:[%s10 + $0x38] sm:$0xff]
    %v1310 = vld [vmem:[%s10 + $0x40] sm:$0xff]
    %v1311 = vld [vmem:[%s10 + $0x48] sm:$0xff]
    %v1312 = vld [vmem:[%s10 + $0x50] sm:$0xff]
    %v1313 = vld [vmem:[%s10 + $0x58] sm:$0xff]
    %v1314 = vld [vmem:[%s10 + $0x60] sm:$0xff]
    %v1315 = vld [vmem:[%s10 + $0x68] sm:$0xff]
    %v1316 = vld [vmem:[%s10 + $0x70] sm:$0xff]
    %v1317 = vld [vmem:[%s10 + $0x78] sm:$0xff]
    %s1318 = scalar_lea.vmem %s11, 3
    %v1319 = vld [vmem:[%s1318] sm:$0x1]
    %v1321 = vlaneseq
    %v1322 = vshrl.u32 %v1321, 7
    %v1323 = vsub.s32 0, %v1322
    %v1324 = vrot.slane %v1319, %v1323
    %1326 = vmatprep.subr.mxu0 0.0
    %1327 = vmatpush1.msra.mxu0 %v1317
    %1328 = vmatprep.subr.mxu0 0.0
    %1329 = vmatpush1.msra.mxu0 %v1316
    %1330 = vmatprep.subr.mxu0 0.0
    %1331 = vmatpush1.msra.mxu0 %v1315
    %1332 = vmatprep.subr.mxu0 0.0
    %1333 = vmatpush1.msra.mxu0 %v1314
    %1334 = vmatprep.subr.mxu0 0.0
    %1335 = vmatpush1.msra.mxu0 %v1313
    %1336 = vmatprep.subr.mxu0 0.0
    %1337 = vmatpush1.msra.mxu0 %v1312
    %1338 = vmatprep.subr.mxu0 0.0
    %1339 = vmatpush1.msra.mxu0 %v1311
    %1340 = vmatprep.subr.mxu0 0.0
    %1341 = vmatpush1.msra.mxu0 %v1310
    %1342 = vmatprep.subr.mxu0 0.0
    %1343 = vmatpush1.msra.mxu0 %v1309
    %1344 = vmatprep.subr.mxu0 0.0
    %1345 = vmatpush1.msra.mxu0 %v1308
    %1346 = vmatprep.subr.mxu0 0.0
    %1347 = vmatpush1.msra.mxu0 %v1307
    %1348 = vmatprep.subr.mxu0 0.0
    %1349 = vmatpush1.msra.mxu0 %v1306
    %1350 = vmatprep.subr.mxu0 0.0
    %1351 = vmatpush1.msra.mxu0 %v1305
    %1352 = vmatprep.subr.mxu0 0.0
    %1353 = vmatpush1.msra.mxu0 %v1304
    %1354 = vmatprep.subr.mxu0 0.0
    %1355 = vmatpush1.msra.mxu0 %v1303
    %1356 = vmatprep.subr.mxu0 0.0
    %1357 = vmatpush1.msra.mxu0 %v1302
    %1358 = vmatprep.subr.mxu0 0.0
    %1359 = vmatpush2.msra.mxu0 0.0
    %1360 = vmatprep.subr.mxu0 0.0
    %1361 = vmatpush2.msra.mxu0 0.0
    %1362 = vmatprep.subr.mxu0 0.0
    %1363 = vmatpush2.msra.mxu0 0.0
    %1364 = vmatprep.subr.mxu0 0.0
    %1365 = vmatpush2.msra.mxu0 0.0
    %1366 = vmatprep.subr.mxu0 0.0
    %1367 = vmatpush2.msra.mxu0 0.0
    %1368 = vmatprep.subr.mxu0 0.0
    %1369 = vmatpush2.msra.mxu0 0.0
    %1370 = vmatprep.subr.mxu0 0.0
    %1371 = vmatpush2.msra.mxu0 0.0
    %1372 = vmatprep.subr.mxu0 0.0
    %1373 = vmatpush2.msra.mxu0 0.0
    %1374 = vmatprep.subr.mxu0 0.0
    %1375 = vmatpush2.msra.mxu0 0.0
    %1376 = vmatprep.subr.mxu0 0.0
    %1377 = vmatpush2.msra.mxu0 0.0
    %1378 = vmatprep.subr.mxu0 0.0
    %1379 = vmatpush2.msra.mxu0 0.0
    %1380 = vmatprep.subr.mxu0 0.0
    %1381 = vmatpush2.msra.mxu0 0.0
    %1382 = vmatprep.subr.mxu0 0.0
    %1383 = vmatpush2.msra.mxu0 0.0
    %1384 = vmatprep.subr.mxu0 0.0
    %1385 = vmatpush2.msra.mxu0 0.0
    %1386 = vmatprep.subr.mxu0 0.0
    %1387 = vmatpush2.msra.mxu0 0.0
    %1388 = vmatprep.subr.mxu0 0.0
    %1389 = vmatpush2.msra.mxu0 0.0
    %1390 = vmatprep.mubr.f32.mxu0 0.0
    %1391 = vmatmul.mubr.f32.gmra.mxu0 %v1300
    %v1392 = vpop.f32.mrf.mxu0
    %v1393 = vadd.f32 %v1324, %v1392
    %v1394 = vpop.f32.mrf.mxu0
    %1395 = vmatprep.mubr.f32.mxu0 0.0
    %1396 = vmatmul.mubr.f32.gmra.mxu0 %v1301
    %v1397 = vpop.f32.mrf.mxu0
    %v1398 = vadd.f32 %v1324, %v1397
    %v1399 = vpop.f32.mrf.mxu0
    %1400 = vdwg.mxu0
    %v1401 = vadd.f32 %v1190, %v1393
    %v1402 = vadd.f32 %v1191, %v1398
    %s1403 = scalar_lea.vmem %s11, 4
    %v1404 = vld [vmem:[%s1403] sm:$0x1]
    %s1405 = scalar_lea.vmem %s11, 5
    %v1406 = vld [vmem:[%s1405] sm:$0x1]
    %v1407 = vsel %vm184, %v1401, 0.0
    %1408 = vadd.xlane.f32.xlu0 %v1407
    %v1409 = vpop.xlane.xlu0 %1408
    %v1410 = vsel %vm184, %v1402, 0.0
    %1411 = vadd.xlane.f32.xlu0 %v1410
    %v1412 = vpop.xlane.xlu0 %1411
    %v1413 = vmul.f32 %v1409, %v191
    %v1414 = vmul.f32 %v1412, %v191
    %v1415 = vsub.f32 %v1401, %v1413
    %v1416 = vsub.f32 %v1402, %v1414
    %v1417 = vmul.f32 %v1415, %v1415
    %v1418 = vmul.f32 %v1416, %v1416
    %v1419 = vsel %vm184, %v1417, 0.0
    %1420 = vadd.xlane.f32.xlu0 %v1419
    %v1421 = vpop.xlane.xlu0 %1420
    %v1422 = vsel %vm184, %v1418, 0.0
    %1423 = vadd.xlane.f32.xlu0 %v1422
    %v1424 = vpop.xlane.xlu0 %1423
    %v1425 = vmul.f32 %v1421, %v191
    %v1426 = vmul.f32 %v1424, %v191
    %v1427 = vadd.f32 %v1425, 1e-12
    %v1428 = vadd.f32 %v1426, 1e-12
    %v1429 = vrsqrt.pop %v1427
    %v1430 = vrsqrt.pop %v1428
    %v1431 = vmul.f32 %v1415, %v1429
    %v1432 = vmul.f32 %v1416, %v1430
    %v1434 = vlaneseq
    %v1435 = vshrl.u32 %v1434, 7
    %v1436 = vsub.s32 0, %v1435
    %v1437 = vrot.slane %v1404, %v1436
    %v1439 = vmul.f32 %v1431, %v1437
    %v1440 = vmul.f32 %v1432, %v1437
    %v1442 = vlaneseq
    %v1443 = vshrl.u32 %v1442, 7
    %v1444 = vsub.s32 0, %v1443
    %v1445 = vrot.slane %v1406, %v1444
    %v1447 = vadd.f32 %v1439, %v1445
    %v1448 = vadd.f32 %v1440, %v1445
    %v1449 = vld [vmem:[%s12] sm:$0xff]
    %v1450 = vld [vmem:[%s12 + $0x8] sm:$0xff]
    %v1451 = vld [vmem:[%s12 + $0x10] sm:$0xff]
    %v1452 = vld [vmem:[%s12 + $0x18] sm:$0xff]
    %v1453 = vld [vmem:[%s12 + $0x20] sm:$0xff]
    %v1454 = vld [vmem:[%s12 + $0x28] sm:$0xff]
    %v1455 = vld [vmem:[%s12 + $0x30] sm:$0xff]
    %v1456 = vld [vmem:[%s12 + $0x38] sm:$0xff]
    %v1457 = vld [vmem:[%s13] sm:$0x3]
    %v1459 = vlaneseq
    %v1460 = vshrl.u32 %v1459, 7
    %v1461 = vsub.s32 0, %v1460
    %v1462 = vrot.slane %v1457, %v1461
    %v1463 = vlaneseq
    %v1464 = vshrl.u32 %v1463, 7
    %v1465 = vsub.s32 1, %v1464
    %v1466 = vrot.slane %v1457, %v1465
    %v1470 = vsel %vm184, %v1447, 0
    %v1473 = vsel %vm184, %v1448, 0
    %1475 = vmatprep.subr.mxu0 0.0
    %1476 = vmatpush1.msra.mxu0 0.0
    %1477 = vmatprep.subr.mxu0 0.0
    %1478 = vmatpush1.msra.mxu0 0.0
    %1479 = vmatprep.subr.mxu0 0.0
    %1480 = vmatpush1.msra.mxu0 0.0
    %1481 = vmatprep.subr.mxu0 0.0
    %1482 = vmatpush1.msra.mxu0 0.0
    %1483 = vmatprep.subr.mxu0 0.0
    %1484 = vmatpush1.msra.mxu0 0.0
    %1485 = vmatprep.subr.mxu0 0.0
    %1486 = vmatpush1.msra.mxu0 0.0
    %1487 = vmatprep.subr.mxu0 0.0
    %1488 = vmatpush1.msra.mxu0 0.0
    %1489 = vmatprep.subr.mxu0 0.0
    %1490 = vmatpush1.msra.mxu0 0.0
    %1491 = vmatprep.subr.mxu0 0.0
    %1492 = vmatpush1.msra.mxu0 0.0
    %1493 = vmatprep.subr.mxu0 0.0
    %1494 = vmatpush1.msra.mxu0 0.0
    %1495 = vmatprep.subr.mxu0 0.0
    %1496 = vmatpush1.msra.mxu0 0.0
    %1497 = vmatprep.subr.mxu0 0.0
    %1498 = vmatpush1.msra.mxu0 0.0
    %1499 = vmatprep.subr.mxu0 %v1456
    %1500 = vmatpush1.msra.mxu0 %v1455
    %1501 = vmatprep.subr.mxu0 %v1454
    %1502 = vmatpush1.msra.mxu0 %v1453
    %1503 = vmatprep.subr.mxu0 %v1452
    %1504 = vmatpush1.msra.mxu0 %v1451
    %1505 = vmatprep.subr.mxu0 %v1450
    %1506 = vmatpush1.msra.mxu0 %v1449
    %1507 = vmatprep.subr.mxu0 0.0
    %1508 = vmatpush2.msra.mxu0 0.0
    %1509 = vmatprep.subr.mxu0 0.0
    %1510 = vmatpush2.msra.mxu0 0.0
    %1511 = vmatprep.subr.mxu0 0.0
    %1512 = vmatpush2.msra.mxu0 0.0
    %1513 = vmatprep.subr.mxu0 0.0
    %1514 = vmatpush2.msra.mxu0 0.0
    %1515 = vmatprep.subr.mxu0 0.0
    %1516 = vmatpush2.msra.mxu0 0.0
    %1517 = vmatprep.subr.mxu0 0.0
    %1518 = vmatpush2.msra.mxu0 0.0
    %1519 = vmatprep.subr.mxu0 0.0
    %1520 = vmatpush2.msra.mxu0 0.0
    %1521 = vmatprep.subr.mxu0 0.0
    %1522 = vmatpush2.msra.mxu0 0.0
    %1523 = vmatprep.subr.mxu0 0.0
    %1524 = vmatpush2.msra.mxu0 0.0
    %1525 = vmatprep.subr.mxu0 0.0
    %1526 = vmatpush2.msra.mxu0 0.0
    %1527 = vmatprep.subr.mxu0 0.0
    %1528 = vmatpush2.msra.mxu0 0.0
    %1529 = vmatprep.subr.mxu0 0.0
    %1530 = vmatpush2.msra.mxu0 0.0
    %1531 = vmatprep.subr.mxu0 0.0
    %1532 = vmatpush2.msra.mxu0 0.0
    %1533 = vmatprep.subr.mxu0 0.0
    %1534 = vmatpush2.msra.mxu0 0.0
    %1535 = vmatprep.subr.mxu0 0.0
    %1536 = vmatpush2.msra.mxu0 0.0
    %1537 = vmatprep.subr.mxu0 0.0
    %1538 = vmatpush2.msra.mxu0 0.0
    %1539 = vmatprep.mubr.f32.mxu0 0.0
    %1540 = vmatmul.mubr.f32.gmra.mxu0 %v1470
    %v1541 = vpop.f32.mrf.mxu0
    %v1542 = vadd.f32 %v1462, %v1541
    %v1543 = vpop.f32.mrf.mxu0
    %v1544 = vadd.f32 %v1466, %v1543
    %1545 = vmatprep.mubr.f32.mxu0 0.0
    %1546 = vmatmul.mubr.f32.gmra.mxu0 %v1473
    %v1547 = vpop.f32.mrf.mxu0
    %v1548 = vadd.f32 %v1462, %v1547
    %v1549 = vpop.f32.mrf.mxu0
    %v1550 = vadd.f32 %v1466, %v1549
    %1551 = vdwg.mxu0
    %v1552 = vld [vmem:[%s17] sm:$0x1]
    %1555 = vrot.lane.b32.xlu0 %v1542, 96
    %v1556 = vpop.permute.xlu0 %1555
    %1557 = vrot.lane.b32.xlu0 %v1548, 96
    %v1558 = vpop.permute.xlu0 %1557
    %v1559 = vsel %vm340, %v1542, 0
    %v1561 = vsel %vm340, %v1548, 0
    %v1563 = vsel %vm340, %v1556, 0
    %v1565 = vsel %vm340, %v1558, 0
    %1567 = vmatprep.subr.mxu0 0.0
    %1568 = vmatpush1.xpose.msra.mxu0 0.0
    %1569 = vmatprep.subr.mxu0 0.0
    %1570 = vmatpush1.xpose.msra.mxu0 0.0
    %1571 = vmatprep.subr.mxu0 0.0
    %1572 = vmatpush1.xpose.msra.mxu0 0.0
    %1573 = vmatprep.subr.mxu0 0.0
    %1574 = vmatpush1.xpose.msra.mxu0 0.0
    %1575 = vmatprep.subr.mxu0 0.0
    %1576 = vmatpush1.xpose.msra.mxu0 0.0
    %1577 = vmatprep.subr.mxu0 0.0
    %1578 = vmatpush1.xpose.msra.mxu0 0.0
    %1579 = vmatprep.subr.mxu0 0.0
    %1580 = vmatpush1.xpose.msra.mxu0 0.0
    %1581 = vmatprep.subr.mxu0 0.0
    %1582 = vmatpush1.xpose.msra.mxu0 0.0
    %1583 = vmatprep.subr.mxu0 0.0
    %1584 = vmatpush1.xpose.msra.mxu0 0.0
    %1585 = vmatprep.subr.mxu0 0.0
    %1586 = vmatpush1.xpose.msra.mxu0 0.0
    %1587 = vmatprep.subr.mxu0 0.0
    %1588 = vmatpush1.xpose.msra.mxu0 0.0
    %1589 = vmatprep.subr.mxu0 0.0
    %1590 = vmatpush1.xpose.msra.mxu0 0.0
    %1591 = vmatprep.subr.mxu0 0.0
    %1592 = vmatpush1.xpose.msra.mxu0 0.0
    %1593 = vmatprep.subr.mxu0 0.0
    %1594 = vmatpush1.xpose.msra.mxu0 0.0
    %1595 = vmatprep.subr.mxu0 0.0
    %1596 = vmatpush1.xpose.msra.mxu0 %v1565
    %1597 = vmatprep.subr.mxu0 0.0
    %1598 = vmatpush1.xpose.msra.mxu0 %v1563
    %1599 = vmatprep.subr.mxu0 0.0
    %1600 = vmatpush2.xpose.msra.mxu0 0.0
    %1601 = vmatprep.subr.mxu0 0.0
    %1602 = vmatpush2.xpose.msra.mxu0 0.0
    %1603 = vmatprep.subr.mxu0 0.0
    %1604 = vmatpush2.xpose.msra.mxu0 0.0
    %1605 = vmatprep.subr.mxu0 0.0
    %1606 = vmatpush2.xpose.msra.mxu0 0.0
    %1607 = vmatprep.subr.mxu0 0.0
    %1608 = vmatpush2.xpose.msra.mxu0 0.0
    %1609 = vmatprep.subr.mxu0 0.0
    %1610 = vmatpush2.xpose.msra.mxu0 0.0
    %1611 = vmatprep.subr.mxu0 0.0
    %1612 = vmatpush2.xpose.msra.mxu0 0.0
    %1613 = vmatprep.subr.mxu0 0.0
    %1614 = vmatpush2.xpose.msra.mxu0 0.0
    %1615 = vmatprep.subr.mxu0 0.0
    %1616 = vmatpush2.xpose.msra.mxu0 0.0
    %1617 = vmatprep.subr.mxu0 0.0
    %1618 = vmatpush2.xpose.msra.mxu0 0.0
    %1619 = vmatprep.subr.mxu0 0.0
    %1620 = vmatpush2.xpose.msra.mxu0 0.0
    %1621 = vmatprep.subr.mxu0 0.0
    %1622 = vmatpush2.xpose.msra.mxu0 0.0
    %1623 = vmatprep.subr.mxu0 0.0
    %1624 = vmatpush2.xpose.msra.mxu0 0.0
    %1625 = vmatprep.subr.mxu0 0.0
    %1626 = vmatpush2.xpose.msra.mxu0 0.0
    %1627 = vmatprep.subr.mxu0 0.0
    %1628 = vmatpush2.xpose.msra.mxu0 0.0
    %1629 = vmatprep.subr.mxu0 0.0
    %1630 = vmatpush2.xpose.msra.mxu0 0.0
    %1631 = vmatprep.mubr.f32.mxu0 0.0
    %1632 = vmatmul.mubr.f32.gmra.mxu0 %v1559
    %v1633 = vpop.f32.mrf.mxu0
    %v1634 = vadd.f32 %v228, %v1633
    %v1635 = vpop.f32.mrf.mxu0
    %1636 = vmatprep.mubr.f32.mxu0 0.0
    %1637 = vmatmul.mubr.f32.gmra.mxu0 %v1561
    %v1638 = vpop.f32.mrf.mxu0
    %v1639 = vadd.f32 %v229, %v1638
    %v1640 = vpop.f32.mrf.mxu0
    %1641 = vdwg.mxu0
    %v1642 = vsel %vm424, %v1634, -inf
    %1643 = vmax.xlane.f32.xlu0 %v1642
    %v1644 = vpop.xlane.xlu0 %1643
    %v1645 = vsel %vm424, %v1639, -inf
    %1646 = vmax.xlane.f32.xlu0 %v1645
    %v1647 = vpop.xlane.xlu0 %1646
    %v1648 = vsub.f32 %v1634, %v1644
    %v1649 = vsub.f32 %v1639, %v1647
    %v1650 = vmul.f32 %v1648, 1.442695
    %v1651 = vpow.pop %v1650
    %v1652 = vmul.f32 %v1649, 1.442695
    %v1653 = vpow.pop %v1652
    %v1654 = vsel %vm424, %v1651, 0.0
    %1655 = vadd.xlane.f32.xlu0 %v1654
    %v1656 = vpop.xlane.xlu0 %1655
    %v1657 = vsel %vm424, %v1653, 0.0
    %1658 = vadd.xlane.f32.xlu0 %v1657
    %v1659 = vpop.xlane.xlu0 %1658
    %v1660 = vrcp.pop %v1656
    %v1661 = vmul.f32 %v1651, %v1660
    %v1662 = vrcp.pop %v1659
    %v1663 = vmul.f32 %v1653, %v1662
    %1664 = vrot.lane.b32.xlu0 %v1542, 64
    %v1665 = vpop.permute.xlu0 %1664
    %1666 = vrot.lane.b32.xlu0 %v1548, 64
    %v1667 = vpop.permute.xlu0 %1666
    %v1671 = vsel %vm424, %v1661, 0
    %v1674 = vsel %vm424, %v1663, 0
    %1676 = vmatprep.subr.mxu0 0.0
    %1677 = vmatpush1.msra.mxu0 0.0
    %1678 = vmatprep.subr.mxu0 0.0
    %1679 = vmatpush1.msra.mxu0 0.0
    %1680 = vmatprep.subr.mxu0 0.0
    %1681 = vmatpush1.msra.mxu0 0.0
    %1682 = vmatprep.subr.mxu0 0.0
    %1683 = vmatpush1.msra.mxu0 0.0
    %1684 = vmatprep.subr.mxu0 0.0
    %1685 = vmatpush1.msra.mxu0 0.0
    %1686 = vmatprep.subr.mxu0 0.0
    %1687 = vmatpush1.msra.mxu0 0.0
    %1688 = vmatprep.subr.mxu0 0.0
    %1689 = vmatpush1.msra.mxu0 0.0
    %1690 = vmatprep.subr.mxu0 0.0
    %1691 = vmatpush1.msra.mxu0 0.0
    %1692 = vmatprep.subr.mxu0 0.0
    %1693 = vmatpush1.msra.mxu0 0.0
    %1694 = vmatprep.subr.mxu0 0.0
    %1695 = vmatpush1.msra.mxu0 0.0
    %1696 = vmatprep.subr.mxu0 0.0
    %1697 = vmatpush1.msra.mxu0 0.0
    %1698 = vmatprep.subr.mxu0 0.0
    %1699 = vmatpush1.msra.mxu0 0.0
    %1700 = vmatprep.subr.mxu0 0.0
    %1701 = vmatpush1.msra.mxu0 0.0
    %1702 = vmatprep.subr.mxu0 0.0
    %1703 = vmatpush1.msra.mxu0 0.0
    %1704 = vmatprep.subr.mxu0 0.0
    %1705 = vmatpush1.msra.mxu0 %v1667
    %1706 = vmatprep.subr.mxu0 0.0
    %1707 = vmatpush1.msra.mxu0 %v1665
    %1708 = vmatprep.subr.mxu0 0.0
    %1709 = vmatpush2.msra.mxu0 0.0
    %1710 = vmatprep.subr.mxu0 0.0
    %1711 = vmatpush2.msra.mxu0 0.0
    %1712 = vmatprep.subr.mxu0 0.0
    %1713 = vmatpush2.msra.mxu0 0.0
    %1714 = vmatprep.subr.mxu0 0.0
    %1715 = vmatpush2.msra.mxu0 0.0
    %1716 = vmatprep.subr.mxu0 0.0
    %1717 = vmatpush2.msra.mxu0 0.0
    %1718 = vmatprep.subr.mxu0 0.0
    %1719 = vmatpush2.msra.mxu0 0.0
    %1720 = vmatprep.subr.mxu0 0.0
    %1721 = vmatpush2.msra.mxu0 0.0
    %1722 = vmatprep.subr.mxu0 0.0
    %1723 = vmatpush2.msra.mxu0 0.0
    %1724 = vmatprep.subr.mxu0 0.0
    %1725 = vmatpush2.msra.mxu0 0.0
    %1726 = vmatprep.subr.mxu0 0.0
    %1727 = vmatpush2.msra.mxu0 0.0
    %1728 = vmatprep.subr.mxu0 0.0
    %1729 = vmatpush2.msra.mxu0 0.0
    %1730 = vmatprep.subr.mxu0 0.0
    %1731 = vmatpush2.msra.mxu0 0.0
    %1732 = vmatprep.subr.mxu0 0.0
    %1733 = vmatpush2.msra.mxu0 0.0
    %1734 = vmatprep.subr.mxu0 0.0
    %1735 = vmatpush2.msra.mxu0 0.0
    %1736 = vmatprep.subr.mxu0 0.0
    %1737 = vmatpush2.msra.mxu0 0.0
    %1738 = vmatprep.subr.mxu0 0.0
    %1739 = vmatpush2.msra.mxu0 0.0
    %1740 = vmatprep.mubr.f32.mxu0 0.0
    %1741 = vmatmul.mubr.f32.gmra.mxu0 %v1671
    %v1742 = vpop.f32.mrf.mxu0
    %v1743 = vadd.f32 0.0, %v1742
    %v1744 = vpop.f32.mrf.mxu0
    %1745 = vmatprep.mubr.f32.mxu0 0.0
    %1746 = vmatmul.mubr.f32.gmra.mxu0 %v1674
    %v1747 = vpop.f32.mrf.mxu0
    %v1748 = vadd.f32 0.0, %v1747
    %v1749 = vpop.f32.mrf.mxu0
    %1750 = vdwg.mxu0
    %v1752 = vlaneseq
    %v1753 = vshrl.u32 %v1752, 7
    %v1754 = vsub.s32 0, %v1753
    %v1755 = vrot.slane %v1552, %v1754
    %v1757 = vadd.f32 %v1755, %v1743
    %v1758 = vadd.f32 %v1755, %v1748
    %1759 = vrot.lane.b32.xlu0 %v1542, 120
    %v1760 = vpop.permute.xlu0 %1759
    %1761 = vrot.lane.b32.xlu0 %v1548, 120
    %v1762 = vpop.permute.xlu0 %1761
    %1763 = vrot.lane.b32.xlu0 %v1542, 88
    %v1764 = vpop.permute.xlu0 %1763
    %1765 = vrot.lane.b32.xlu0 %v1548, 88
    %v1766 = vpop.permute.xlu0 %1765
    %v1767 = vsel %vm340, %v1760, 0
    %v1769 = vsel %vm340, %v1762, 0
    %v1771 = vsel %vm340, %v1764, 0
    %v1773 = vsel %vm340, %v1766, 0
    %1775 = vmatprep.subr.mxu0 0.0
    %1776 = vmatpush1.xpose.msra.mxu0 0.0
    %1777 = vmatprep.subr.mxu0 0.0
    %1778 = vmatpush1.xpose.msra.mxu0 0.0
    %1779 = vmatprep.subr.mxu0 0.0
    %1780 = vmatpush1.xpose.msra.mxu0 0.0
    %1781 = vmatprep.subr.mxu0 0.0
    %1782 = vmatpush1.xpose.msra.mxu0 0.0
    %1783 = vmatprep.subr.mxu0 0.0
    %1784 = vmatpush1.xpose.msra.mxu0 0.0
    %1785 = vmatprep.subr.mxu0 0.0
    %1786 = vmatpush1.xpose.msra.mxu0 0.0
    %1787 = vmatprep.subr.mxu0 0.0
    %1788 = vmatpush1.xpose.msra.mxu0 0.0
    %1789 = vmatprep.subr.mxu0 0.0
    %1790 = vmatpush1.xpose.msra.mxu0 0.0
    %1791 = vmatprep.subr.mxu0 0.0
    %1792 = vmatpush1.xpose.msra.mxu0 0.0
    %1793 = vmatprep.subr.mxu0 0.0
    %1794 = vmatpush1.xpose.msra.mxu0 0.0
    %1795 = vmatprep.subr.mxu0 0.0
    %1796 = vmatpush1.xpose.msra.mxu0 0.0
    %1797 = vmatprep.subr.mxu0 0.0
    %1798 = vmatpush1.xpose.msra.mxu0 0.0
    %1799 = vmatprep.subr.mxu0 0.0
    %1800 = vmatpush1.xpose.msra.mxu0 0.0
    %1801 = vmatprep.subr.mxu0 0.0
    %1802 = vmatpush1.xpose.msra.mxu0 0.0
    %1803 = vmatprep.subr.mxu0 0.0
    %1804 = vmatpush1.xpose.msra.mxu0 %v1773
    %1805 = vmatprep.subr.mxu0 0.0
    %1806 = vmatpush1.xpose.msra.mxu0 %v1771
    %1807 = vmatprep.subr.mxu0 0.0
    %1808 = vmatpush2.xpose.msra.mxu0 0.0
    %1809 = vmatprep.subr.mxu0 0.0
    %1810 = vmatpush2.xpose.msra.mxu0 0.0
    %1811 = vmatprep.subr.mxu0 0.0
    %1812 = vmatpush2.xpose.msra.mxu0 0.0
    %1813 = vmatprep.subr.mxu0 0.0
    %1814 = vmatpush2.xpose.msra.mxu0 0.0
    %1815 = vmatprep.subr.mxu0 0.0
    %1816 = vmatpush2.xpose.msra.mxu0 0.0
    %1817 = vmatprep.subr.mxu0 0.0
    %1818 = vmatpush2.xpose.msra.mxu0 0.0
    %1819 = vmatprep.subr.mxu0 0.0
    %1820 = vmatpush2.xpose.msra.mxu0 0.0
    %1821 = vmatprep.subr.mxu0 0.0
    %1822 = vmatpush2.xpose.msra.mxu0 0.0
    %1823 = vmatprep.subr.mxu0 0.0
    %1824 = vmatpush2.xpose.msra.mxu0 0.0
    %1825 = vmatprep.subr.mxu0 0.0
    %1826 = vmatpush2.xpose.msra.mxu0 0.0
    %1827 = vmatprep.subr.mxu0 0.0
    %1828 = vmatpush2.xpose.msra.mxu0 0.0
    %1829 = vmatprep.subr.mxu0 0.0
    %1830 = vmatpush2.xpose.msra.mxu0 0.0
    %1831 = vmatprep.subr.mxu0 0.0
    %1832 = vmatpush2.xpose.msra.mxu0 0.0
    %1833 = vmatprep.subr.mxu0 0.0
    %1834 = vmatpush2.xpose.msra.mxu0 0.0
    %1835 = vmatprep.subr.mxu0 0.0
    %1836 = vmatpush2.xpose.msra.mxu0 0.0
    %1837 = vmatprep.subr.mxu0 0.0
    %1838 = vmatpush2.xpose.msra.mxu0 0.0
    %1839 = vmatprep.mubr.f32.mxu0 0.0
    %1840 = vmatmul.mubr.f32.gmra.mxu0 %v1767
    %v1841 = vpop.f32.mrf.mxu0
    %v1842 = vadd.f32 %v228, %v1841
    %v1843 = vpop.f32.mrf.mxu0
    %1844 = vmatprep.mubr.f32.mxu0 0.0
    %1845 = vmatmul.mubr.f32.gmra.mxu0 %v1769
    %v1846 = vpop.f32.mrf.mxu0
    %v1847 = vadd.f32 %v229, %v1846
    %v1848 = vpop.f32.mrf.mxu0
    %1849 = vdwg.mxu0
    %v1850 = vsel %vm424, %v1842, -inf
    %1851 = vmax.xlane.f32.xlu0 %v1850
    %v1852 = vpop.xlane.xlu0 %1851
    %v1853 = vsel %vm424, %v1847, -inf
    %1854 = vmax.xlane.f32.xlu0 %v1853
    %v1855 = vpop.xlane.xlu0 %1854
    %v1856 = vsub.f32 %v1842, %v1852
    %v1857 = vsub.f32 %v1847, %v1855
    %v1858 = vmul.f32 %v1856, 1.442695
    %v1859 = vpow.pop %v1858
    %v1860 = vmul.f32 %v1857, 1.442695
    %v1861 = vpow.pop %v1860
    %v1862 = vsel %vm424, %v1859, 0.0
    %1863 = vadd.xlane.f32.xlu0 %v1862
    %v1864 = vpop.xlane.xlu0 %1863
    %v1865 = vsel %vm424, %v1861, 0.0
    %1866 = vadd.xlane.f32.xlu0 %v1865
    %v1867 = vpop.xlane.xlu0 %1866
    %v1868 = vrcp.pop %v1864
    %v1869 = vmul.f32 %v1859, %v1868
    %v1870 = vrcp.pop %v1867
    %v1871 = vmul.f32 %v1861, %v1870
    %1872 = vrot.lane.b32.xlu0 %v1542, 32
    %v1873 = vpop.permute.xlu0 %1872
    %1874 = vrot.lane.b32.xlu0 %v1548, 32
    %v1875 = vpop.permute.xlu0 %1874
    %v1879 = vsel %vm424, %v1869, 0
    %v1882 = vsel %vm424, %v1871, 0
    %1884 = vmatprep.subr.mxu0 0.0
    %1885 = vmatpush1.msra.mxu0 0.0
    %1886 = vmatprep.subr.mxu0 0.0
    %1887 = vmatpush1.msra.mxu0 0.0
    %1888 = vmatprep.subr.mxu0 0.0
    %1889 = vmatpush1.msra.mxu0 0.0
    %1890 = vmatprep.subr.mxu0 0.0
    %1891 = vmatpush1.msra.mxu0 0.0
    %1892 = vmatprep.subr.mxu0 0.0
    %1893 = vmatpush1.msra.mxu0 0.0
    %1894 = vmatprep.subr.mxu0 0.0
    %1895 = vmatpush1.msra.mxu0 0.0
    %1896 = vmatprep.subr.mxu0 0.0
    %1897 = vmatpush1.msra.mxu0 0.0
    %1898 = vmatprep.subr.mxu0 0.0
    %1899 = vmatpush1.msra.mxu0 0.0
    %1900 = vmatprep.subr.mxu0 0.0
    %1901 = vmatpush1.msra.mxu0 0.0
    %1902 = vmatprep.subr.mxu0 0.0
    %1903 = vmatpush1.msra.mxu0 0.0
    %1904 = vmatprep.subr.mxu0 0.0
    %1905 = vmatpush1.msra.mxu0 0.0
    %1906 = vmatprep.subr.mxu0 0.0
    %1907 = vmatpush1.msra.mxu0 0.0
    %1908 = vmatprep.subr.mxu0 0.0
    %1909 = vmatpush1.msra.mxu0 0.0
    %1910 = vmatprep.subr.mxu0 0.0
    %1911 = vmatpush1.msra.mxu0 0.0
    %1912 = vmatprep.subr.mxu0 0.0
    %1913 = vmatpush1.msra.mxu0 %v1875
    %1914 = vmatprep.subr.mxu0 0.0
    %1915 = vmatpush1.msra.mxu0 %v1873
    %1916 = vmatprep.subr.mxu0 0.0
    %1917 = vmatpush2.msra.mxu0 0.0
    %1918 = vmatprep.subr.mxu0 0.0
    %1919 = vmatpush2.msra.mxu0 0.0
    %1920 = vmatprep.subr.mxu0 0.0
    %1921 = vmatpush2.msra.mxu0 0.0
    %1922 = vmatprep.subr.mxu0 0.0
    %1923 = vmatpush2.msra.mxu0 0.0
    %1924 = vmatprep.subr.mxu0 0.0
    %1925 = vmatpush2.msra.mxu0 0.0
    %1926 = vmatprep.subr.mxu0 0.0
    %1927 = vmatpush2.msra.mxu0 0.0
    %1928 = vmatprep.subr.mxu0 0.0
    %1929 = vmatpush2.msra.mxu0 0.0
    %1930 = vmatprep.subr.mxu0 0.0
    %1931 = vmatpush2.msra.mxu0 0.0
    %1932 = vmatprep.subr.mxu0 0.0
    %1933 = vmatpush2.msra.mxu0 0.0
    %1934 = vmatprep.subr.mxu0 0.0
    %1935 = vmatpush2.msra.mxu0 0.0
    %1936 = vmatprep.subr.mxu0 0.0
    %1937 = vmatpush2.msra.mxu0 0.0
    %1938 = vmatprep.subr.mxu0 0.0
    %1939 = vmatpush2.msra.mxu0 0.0
    %1940 = vmatprep.subr.mxu0 0.0
    %1941 = vmatpush2.msra.mxu0 0.0
    %1942 = vmatprep.subr.mxu0 0.0
    %1943 = vmatpush2.msra.mxu0 0.0
    %1944 = vmatprep.subr.mxu0 0.0
    %1945 = vmatpush2.msra.mxu0 0.0
    %1946 = vmatprep.subr.mxu0 0.0
    %1947 = vmatpush2.msra.mxu0 0.0
    %1948 = vmatprep.mubr.f32.mxu0 0.0
    %1949 = vmatmul.mubr.f32.gmra.mxu0 %v1879
    %v1950 = vpop.f32.mrf.mxu0
    %v1951 = vadd.f32 0.0, %v1950
    %v1952 = vpop.f32.mrf.mxu0
    %1953 = vmatprep.mubr.f32.mxu0 0.0
    %1954 = vmatmul.mubr.f32.gmra.mxu0 %v1882
    %v1955 = vpop.f32.mrf.mxu0
    %v1956 = vadd.f32 0.0, %v1955
    %v1957 = vpop.f32.mrf.mxu0
    %1958 = vdwg.mxu0
    %v1959 = vadd.f32 %v1757, %v1951
    %v1960 = vadd.f32 %v1758, %v1956
    %1961 = vrot.lane.b32.xlu0 %v1542, 112
    %v1962 = vpop.permute.xlu0 %1961
    %1963 = vrot.lane.b32.xlu0 %v1548, 112
    %v1964 = vpop.permute.xlu0 %1963
    %1965 = vrot.lane.b32.xlu0 %v1542, 80
    %v1966 = vpop.permute.xlu0 %1965
    %1967 = vrot.lane.b32.xlu0 %v1548, 80
    %v1968 = vpop.permute.xlu0 %1967
    %v1969 = vsel %vm340, %v1962, 0
    %v1971 = vsel %vm340, %v1964, 0
    %v1973 = vsel %vm340, %v1966, 0
    %v1975 = vsel %vm340, %v1968, 0
    %1977 = vmatprep.subr.mxu0 0.0
    %1978 = vmatpush1.xpose.msra.mxu0 0.0
    %1979 = vmatprep.subr.mxu0 0.0
    %1980 = vmatpush1.xpose.msra.mxu0 0.0
    %1981 = vmatprep.subr.mxu0 0.0
    %1982 = vmatpush1.xpose.msra.mxu0 0.0
    %1983 = vmatprep.subr.mxu0 0.0
    %1984 = vmatpush1.xpose.msra.mxu0 0.0
    %1985 = vmatprep.subr.mxu0 0.0
    %1986 = vmatpush1.xpose.msra.mxu0 0.0
    %1987 = vmatprep.subr.mxu0 0.0
    %1988 = vmatpush1.xpose.msra.mxu0 0.0
    %1989 = vmatprep.subr.mxu0 0.0
    %1990 = vmatpush1.xpose.msra.mxu0 0.0
    %1991 = vmatprep.subr.mxu0 0.0
    %1992 = vmatpush1.xpose.msra.mxu0 0.0
    %1993 = vmatprep.subr.mxu0 0.0
    %1994 = vmatpush1.xpose.msra.mxu0 0.0
    %1995 = vmatprep.subr.mxu0 0.0
    %1996 = vmatpush1.xpose.msra.mxu0 0.0
    %1997 = vmatprep.subr.mxu0 0.0
    %1998 = vmatpush1.xpose.msra.mxu0 0.0
    %1999 = vmatprep.subr.mxu0 0.0
    %2000 = vmatpush1.xpose.msra.mxu0 0.0
    %2001 = vmatprep.subr.mxu0 0.0
    %2002 = vmatpush1.xpose.msra.mxu0 0.0
    %2003 = vmatprep.subr.mxu0 0.0
    %2004 = vmatpush1.xpose.msra.mxu0 0.0
    %2005 = vmatprep.subr.mxu0 0.0
    %2006 = vmatpush1.xpose.msra.mxu0 %v1975
    %2007 = vmatprep.subr.mxu0 0.0
    %2008 = vmatpush1.xpose.msra.mxu0 %v1973
    %2009 = vmatprep.subr.mxu0 0.0
    %2010 = vmatpush2.xpose.msra.mxu0 0.0
    %2011 = vmatprep.subr.mxu0 0.0
    %2012 = vmatpush2.xpose.msra.mxu0 0.0
    %2013 = vmatprep.subr.mxu0 0.0
    %2014 = vmatpush2.xpose.msra.mxu0 0.0
    %2015 = vmatprep.subr.mxu0 0.0
    %2016 = vmatpush2.xpose.msra.mxu0 0.0
    %2017 = vmatprep.subr.mxu0 0.0
    %2018 = vmatpush2.xpose.msra.mxu0 0.0
    %2019 = vmatprep.subr.mxu0 0.0
    %2020 = vmatpush2.xpose.msra.mxu0 0.0
    %2021 = vmatprep.subr.mxu0 0.0
    %2022 = vmatpush2.xpose.msra.mxu0 0.0
    %2023 = vmatprep.subr.mxu0 0.0
    %2024 = vmatpush2.xpose.msra.mxu0 0.0
    %2025 = vmatprep.subr.mxu0 0.0
    %2026 = vmatpush2.xpose.msra.mxu0 0.0
    %2027 = vmatprep.subr.mxu0 0.0
    %2028 = vmatpush2.xpose.msra.mxu0 0.0
    %2029 = vmatprep.subr.mxu0 0.0
    %2030 = vmatpush2.xpose.msra.mxu0 0.0
    %2031 = vmatprep.subr.mxu0 0.0
    %2032 = vmatpush2.xpose.msra.mxu0 0.0
    %2033 = vmatprep.subr.mxu0 0.0
    %2034 = vmatpush2.xpose.msra.mxu0 0.0
    %2035 = vmatprep.subr.mxu0 0.0
    %2036 = vmatpush2.xpose.msra.mxu0 0.0
    %2037 = vmatprep.subr.mxu0 0.0
    %2038 = vmatpush2.xpose.msra.mxu0 0.0
    %2039 = vmatprep.subr.mxu0 0.0
    %2040 = vmatpush2.xpose.msra.mxu0 0.0
    %2041 = vmatprep.mubr.f32.mxu0 0.0
    %2042 = vmatmul.mubr.f32.gmra.mxu0 %v1969
    %v2043 = vpop.f32.mrf.mxu0
    %v2044 = vadd.f32 %v228, %v2043
    %v2045 = vpop.f32.mrf.mxu0
    %2046 = vmatprep.mubr.f32.mxu0 0.0
    %2047 = vmatmul.mubr.f32.gmra.mxu0 %v1971
    %v2048 = vpop.f32.mrf.mxu0
    %v2049 = vadd.f32 %v229, %v2048
    %v2050 = vpop.f32.mrf.mxu0
    %2051 = vdwg.mxu0
    %v2052 = vsel %vm424, %v2044, -inf
    %2053 = vmax.xlane.f32.xlu0 %v2052
    %v2054 = vpop.xlane.xlu0 %2053
    %v2055 = vsel %vm424, %v2049, -inf
    %2056 = vmax.xlane.f32.xlu0 %v2055
    %v2057 = vpop.xlane.xlu0 %2056
    %v2058 = vsub.f32 %v2044, %v2054
    %v2059 = vsub.f32 %v2049, %v2057
    %v2060 = vmul.f32 %v2058, 1.442695
    %v2061 = vpow.pop %v2060
    %v2062 = vmul.f32 %v2059, 1.442695
    %v2063 = vpow.pop %v2062
    %v2064 = vsel %vm424, %v2061, 0.0
    %2065 = vadd.xlane.f32.xlu0 %v2064
    %v2066 = vpop.xlane.xlu0 %2065
    %v2067 = vsel %vm424, %v2063, 0.0
    %2068 = vadd.xlane.f32.xlu0 %v2067
    %v2069 = vpop.xlane.xlu0 %2068
    %v2070 = vrcp.pop %v2066
    %v2071 = vmul.f32 %v2061, %v2070
    %v2072 = vrcp.pop %v2069
    %v2073 = vmul.f32 %v2063, %v2072
    %v2075 = vsel %vm424, %v2071, 0
    %v2078 = vsel %vm424, %v2073, 0
    %2080 = vmatprep.subr.mxu0 0.0
    %2081 = vmatpush1.msra.mxu0 0.0
    %2082 = vmatprep.subr.mxu0 0.0
    %2083 = vmatpush1.msra.mxu0 0.0
    %2084 = vmatprep.subr.mxu0 0.0
    %2085 = vmatpush1.msra.mxu0 0.0
    %2086 = vmatprep.subr.mxu0 0.0
    %2087 = vmatpush1.msra.mxu0 0.0
    %2088 = vmatprep.subr.mxu0 0.0
    %2089 = vmatpush1.msra.mxu0 0.0
    %2090 = vmatprep.subr.mxu0 0.0
    %2091 = vmatpush1.msra.mxu0 0.0
    %2092 = vmatprep.subr.mxu0 0.0
    %2093 = vmatpush1.msra.mxu0 0.0
    %2094 = vmatprep.subr.mxu0 0.0
    %2095 = vmatpush1.msra.mxu0 0.0
    %2096 = vmatprep.subr.mxu0 0.0
    %2097 = vmatpush1.msra.mxu0 0.0
    %2098 = vmatprep.subr.mxu0 0.0
    %2099 = vmatpush1.msra.mxu0 0.0
    %2100 = vmatprep.subr.mxu0 0.0
    %2101 = vmatpush1.msra.mxu0 0.0
    %2102 = vmatprep.subr.mxu0 0.0
    %2103 = vmatpush1.msra.mxu0 0.0
    %2104 = vmatprep.subr.mxu0 0.0
    %2105 = vmatpush1.msra.mxu0 0.0
    %2106 = vmatprep.subr.mxu0 0.0
    %2107 = vmatpush1.msra.mxu0 0.0
    %2108 = vmatprep.subr.mxu0 0.0
    %2109 = vmatpush1.msra.mxu0 %v1550
    %2110 = vmatprep.subr.mxu0 0.0
    %2111 = vmatpush1.msra.mxu0 %v1544
    %2112 = vmatprep.subr.mxu0 0.0
    %2113 = vmatpush2.msra.mxu0 0.0
    %2114 = vmatprep.subr.mxu0 0.0
    %2115 = vmatpush2.msra.mxu0 0.0
    %2116 = vmatprep.subr.mxu0 0.0
    %2117 = vmatpush2.msra.mxu0 0.0
    %2118 = vmatprep.subr.mxu0 0.0
    %2119 = vmatpush2.msra.mxu0 0.0
    %2120 = vmatprep.subr.mxu0 0.0
    %2121 = vmatpush2.msra.mxu0 0.0
    %2122 = vmatprep.subr.mxu0 0.0
    %2123 = vmatpush2.msra.mxu0 0.0
    %2124 = vmatprep.subr.mxu0 0.0
    %2125 = vmatpush2.msra.mxu0 0.0
    %2126 = vmatprep.subr.mxu0 0.0
    %2127 = vmatpush2.msra.mxu0 0.0
    %2128 = vmatprep.subr.mxu0 0.0
    %2129 = vmatpush2.msra.mxu0 0.0
    %2130 = vmatprep.subr.mxu0 0.0
    %2131 = vmatpush2.msra.mxu0 0.0
    %2132 = vmatprep.subr.mxu0 0.0
    %2133 = vmatpush2.msra.mxu0 0.0
    %2134 = vmatprep.subr.mxu0 0.0
    %2135 = vmatpush2.msra.mxu0 0.0
    %2136 = vmatprep.subr.mxu0 0.0
    %2137 = vmatpush2.msra.mxu0 0.0
    %2138 = vmatprep.subr.mxu0 0.0
    %2139 = vmatpush2.msra.mxu0 0.0
    %2140 = vmatprep.subr.mxu0 0.0
    %2141 = vmatpush2.msra.mxu0 0.0
    %2142 = vmatprep.subr.mxu0 0.0
    %2143 = vmatpush2.msra.mxu0 0.0
    %2144 = vmatprep.mubr.f32.mxu0 0.0
    %2145 = vmatmul.mubr.f32.gmra.mxu0 %v2075
    %v2146 = vpop.f32.mrf.mxu0
    %v2147 = vadd.f32 0.0, %v2146
    %v2148 = vpop.f32.mrf.mxu0
    %2149 = vmatprep.mubr.f32.mxu0 0.0
    %2150 = vmatmul.mubr.f32.gmra.mxu0 %v2078
    %v2151 = vpop.f32.mrf.mxu0
    %v2152 = vadd.f32 0.0, %v2151
    %v2153 = vpop.f32.mrf.mxu0
    %2154 = vdwg.mxu0
    %v2155 = vadd.f32 %v1959, %v2147
    %v2156 = vadd.f32 %v1960, %v2152
    %2157 = vrot.lane.b32.xlu0 %v1542, 104
    %v2158 = vpop.permute.xlu0 %2157
    %2159 = vrot.lane.b32.xlu0 %v1548, 104
    %v2160 = vpop.permute.xlu0 %2159
    %2161 = vrot.lane.b32.xlu0 %v1542, 72
    %v2162 = vpop.permute.xlu0 %2161
    %2163 = vrot.lane.b32.xlu0 %v1548, 72
    %v2164 = vpop.permute.xlu0 %2163
    %v2165 = vsel %vm340, %v2158, 0
    %v2167 = vsel %vm340, %v2160, 0
    %v2169 = vsel %vm340, %v2162, 0
    %v2171 = vsel %vm340, %v2164, 0
    %2173 = vmatprep.subr.mxu0 0.0
    %2174 = vmatpush1.xpose.msra.mxu0 0.0
    %2175 = vmatprep.subr.mxu0 0.0
    %2176 = vmatpush1.xpose.msra.mxu0 0.0
    %2177 = vmatprep.subr.mxu0 0.0
    %2178 = vmatpush1.xpose.msra.mxu0 0.0
    %2179 = vmatprep.subr.mxu0 0.0
    %2180 = vmatpush1.xpose.msra.mxu0 0.0
    %2181 = vmatprep.subr.mxu0 0.0
    %2182 = vmatpush1.xpose.msra.mxu0 0.0
    %2183 = vmatprep.subr.mxu0 0.0
    %2184 = vmatpush1.xpose.msra.mxu0 0.0
    %2185 = vmatprep.subr.mxu0 0.0
    %2186 = vmatpush1.xpose.msra.mxu0 0.0
    %2187 = vmatprep.subr.mxu0 0.0
    %2188 = vmatpush1.xpose.msra.mxu0 0.0
    %2189 = vmatprep.subr.mxu0 0.0
    %2190 = vmatpush1.xpose.msra.mxu0 0.0
    %2191 = vmatprep.subr.mxu0 0.0
    %2192 = vmatpush1.xpose.msra.mxu0 0.0
    %2193 = vmatprep.subr.mxu0 0.0
    %2194 = vmatpush1.xpose.msra.mxu0 0.0
    %2195 = vmatprep.subr.mxu0 0.0
    %2196 = vmatpush1.xpose.msra.mxu0 0.0
    %2197 = vmatprep.subr.mxu0 0.0
    %2198 = vmatpush1.xpose.msra.mxu0 0.0
    %2199 = vmatprep.subr.mxu0 0.0
    %2200 = vmatpush1.xpose.msra.mxu0 0.0
    %2201 = vmatprep.subr.mxu0 0.0
    %2202 = vmatpush1.xpose.msra.mxu0 %v2171
    %2203 = vmatprep.subr.mxu0 0.0
    %2204 = vmatpush1.xpose.msra.mxu0 %v2169
    %2205 = vmatprep.subr.mxu0 0.0
    %2206 = vmatpush2.xpose.msra.mxu0 0.0
    %2207 = vmatprep.subr.mxu0 0.0
    %2208 = vmatpush2.xpose.msra.mxu0 0.0
    %2209 = vmatprep.subr.mxu0 0.0
    %2210 = vmatpush2.xpose.msra.mxu0 0.0
    %2211 = vmatprep.subr.mxu0 0.0
    %2212 = vmatpush2.xpose.msra.mxu0 0.0
    %2213 = vmatprep.subr.mxu0 0.0
    %2214 = vmatpush2.xpose.msra.mxu0 0.0
    %2215 = vmatprep.subr.mxu0 0.0
    %2216 = vmatpush2.xpose.msra.mxu0 0.0
    %2217 = vmatprep.subr.mxu0 0.0
    %2218 = vmatpush2.xpose.msra.mxu0 0.0
    %2219 = vmatprep.subr.mxu0 0.0
    %2220 = vmatpush2.xpose.msra.mxu0 0.0
    %2221 = vmatprep.subr.mxu0 0.0
    %2222 = vmatpush2.xpose.msra.mxu0 0.0
    %2223 = vmatprep.subr.mxu0 0.0
    %2224 = vmatpush2.xpose.msra.mxu0 0.0
    %2225 = vmatprep.subr.mxu0 0.0
    %2226 = vmatpush2.xpose.msra.mxu0 0.0
    %2227 = vmatprep.subr.mxu0 0.0
    %2228 = vmatpush2.xpose.msra.mxu0 0.0
    %2229 = vmatprep.subr.mxu0 0.0
    %2230 = vmatpush2.xpose.msra.mxu0 0.0
    %2231 = vmatprep.subr.mxu0 0.0
    %2232 = vmatpush2.xpose.msra.mxu0 0.0
    %2233 = vmatprep.subr.mxu0 0.0
    %2234 = vmatpush2.xpose.msra.mxu0 0.0
    %2235 = vmatprep.subr.mxu0 0.0
    %2236 = vmatpush2.xpose.msra.mxu0 0.0
    %2237 = vmatprep.mubr.f32.mxu0 0.0
    %2238 = vmatmul.mubr.f32.gmra.mxu0 %v2165
    %v2239 = vpop.f32.mrf.mxu0
    %v2240 = vadd.f32 %v228, %v2239
    %v2241 = vpop.f32.mrf.mxu0
    %2242 = vmatprep.mubr.f32.mxu0 0.0
    %2243 = vmatmul.mubr.f32.gmra.mxu0 %v2167
    %v2244 = vpop.f32.mrf.mxu0
    %v2245 = vadd.f32 %v229, %v2244
    %v2246 = vpop.f32.mrf.mxu0
    %2247 = vdwg.mxu0
    %v2248 = vsel %vm424, %v2240, -inf
    %2249 = vmax.xlane.f32.xlu0 %v2248
    %v2250 = vpop.xlane.xlu0 %2249
    %v2251 = vsel %vm424, %v2245, -inf
    %2252 = vmax.xlane.f32.xlu0 %v2251
    %v2253 = vpop.xlane.xlu0 %2252
    %v2254 = vsub.f32 %v2240, %v2250
    %v2255 = vsub.f32 %v2245, %v2253
    %v2256 = vmul.f32 %v2254, 1.442695
    %v2257 = vpow.pop %v2256
    %v2258 = vmul.f32 %v2255, 1.442695
    %v2259 = vpow.pop %v2258
    %v2260 = vsel %vm424, %v2257, 0.0
    %2261 = vadd.xlane.f32.xlu0 %v2260
    %v2262 = vpop.xlane.xlu0 %2261
    %v2263 = vsel %vm424, %v2259, 0.0
    %2264 = vadd.xlane.f32.xlu0 %v2263
    %v2265 = vpop.xlane.xlu0 %2264
    %v2266 = vrcp.pop %v2262
    %v2267 = vmul.f32 %v2257, %v2266
    %v2268 = vrcp.pop %v2265
    %v2269 = vmul.f32 %v2259, %v2268
    %2272 = vrot.lane.b32.xlu0 %v1544, 96
    %v2273 = vpop.permute.xlu0 %2272
    %2274 = vrot.lane.b32.xlu0 %v1550, 96
    %v2275 = vpop.permute.xlu0 %2274
    %v2279 = vsel %vm424, %v2267, 0
    %v2282 = vsel %vm424, %v2269, 0
    %2284 = vmatprep.subr.mxu0 0.0
    %2285 = vmatpush1.msra.mxu0 0.0
    %2286 = vmatprep.subr.mxu0 0.0
    %2287 = vmatpush1.msra.mxu0 0.0
    %2288 = vmatprep.subr.mxu0 0.0
    %2289 = vmatpush1.msra.mxu0 0.0
    %2290 = vmatprep.subr.mxu0 0.0
    %2291 = vmatpush1.msra.mxu0 0.0
    %2292 = vmatprep.subr.mxu0 0.0
    %2293 = vmatpush1.msra.mxu0 0.0
    %2294 = vmatprep.subr.mxu0 0.0
    %2295 = vmatpush1.msra.mxu0 0.0
    %2296 = vmatprep.subr.mxu0 0.0
    %2297 = vmatpush1.msra.mxu0 0.0
    %2298 = vmatprep.subr.mxu0 0.0
    %2299 = vmatpush1.msra.mxu0 0.0
    %2300 = vmatprep.subr.mxu0 0.0
    %2301 = vmatpush1.msra.mxu0 0.0
    %2302 = vmatprep.subr.mxu0 0.0
    %2303 = vmatpush1.msra.mxu0 0.0
    %2304 = vmatprep.subr.mxu0 0.0
    %2305 = vmatpush1.msra.mxu0 0.0
    %2306 = vmatprep.subr.mxu0 0.0
    %2307 = vmatpush1.msra.mxu0 0.0
    %2308 = vmatprep.subr.mxu0 0.0
    %2309 = vmatpush1.msra.mxu0 0.0
    %2310 = vmatprep.subr.mxu0 0.0
    %2311 = vmatpush1.msra.mxu0 0.0
    %2312 = vmatprep.subr.mxu0 0.0
    %2313 = vmatpush1.msra.mxu0 %v2275
    %2314 = vmatprep.subr.mxu0 0.0
    %2315 = vmatpush1.msra.mxu0 %v2273
    %2316 = vmatprep.subr.mxu0 0.0
    %2317 = vmatpush2.msra.mxu0 0.0
    %2318 = vmatprep.subr.mxu0 0.0
    %2319 = vmatpush2.msra.mxu0 0.0
    %2320 = vmatprep.subr.mxu0 0.0
    %2321 = vmatpush2.msra.mxu0 0.0
    %2322 = vmatprep.subr.mxu0 0.0
    %2323 = vmatpush2.msra.mxu0 0.0
    %2324 = vmatprep.subr.mxu0 0.0
    %2325 = vmatpush2.msra.mxu0 0.0
    %2326 = vmatprep.subr.mxu0 0.0
    %2327 = vmatpush2.msra.mxu0 0.0
    %2328 = vmatprep.subr.mxu0 0.0
    %2329 = vmatpush2.msra.mxu0 0.0
    %2330 = vmatprep.subr.mxu0 0.0
    %2331 = vmatpush2.msra.mxu0 0.0
    %2332 = vmatprep.subr.mxu0 0.0
    %2333 = vmatpush2.msra.mxu0 0.0
    %2334 = vmatprep.subr.mxu0 0.0
    %2335 = vmatpush2.msra.mxu0 0.0
    %2336 = vmatprep.subr.mxu0 0.0
    %2337 = vmatpush2.msra.mxu0 0.0
    %2338 = vmatprep.subr.mxu0 0.0
    %2339 = vmatpush2.msra.mxu0 0.0
    %2340 = vmatprep.subr.mxu0 0.0
    %2341 = vmatpush2.msra.mxu0 0.0
    %2342 = vmatprep.subr.mxu0 0.0
    %2343 = vmatpush2.msra.mxu0 0.0
    %2344 = vmatprep.subr.mxu0 0.0
    %2345 = vmatpush2.msra.mxu0 0.0
    %2346 = vmatprep.subr.mxu0 0.0
    %2347 = vmatpush2.msra.mxu0 0.0
    %2348 = vmatprep.mubr.f32.mxu0 0.0
    %2349 = vmatmul.mubr.f32.gmra.mxu0 %v2279
    %v2350 = vpop.f32.mrf.mxu0
    %v2351 = vadd.f32 0.0, %v2350
    %v2352 = vpop.f32.mrf.mxu0
    %2353 = vmatprep.mubr.f32.mxu0 0.0
    %2354 = vmatmul.mubr.f32.gmra.mxu0 %v2282
    %v2355 = vpop.f32.mrf.mxu0
    %v2356 = vadd.f32 0.0, %v2355
    %v2357 = vpop.f32.mrf.mxu0
    %2358 = vdwg.mxu0
    %v2359 = vadd.f32 %v2155, %v2351
    %v2360 = vadd.f32 %v2156, %v2356
    %v2361 = vadd.f32 %v1447, %v2359
    %v2362 = vadd.f32 %v1448, %v2360
    %s2363 = scalar_lea.vmem %s17, 1
    %v2364 = vld [vmem:[%s2363] sm:$0x1]
    %s2365 = scalar_lea.vmem %s17, 2
    %v2366 = vld [vmem:[%s2365] sm:$0x1]
    %v2367 = vsel %vm184, %v2361, 0.0
    %2368 = vadd.xlane.f32.xlu0 %v2367
    %v2369 = vpop.xlane.xlu0 %2368
    %v2370 = vsel %vm184, %v2362, 0.0
    %2371 = vadd.xlane.f32.xlu0 %v2370
    %v2372 = vpop.xlane.xlu0 %2371
    %v2373 = vmul.f32 %v2369, %v191
    %v2374 = vmul.f32 %v2372, %v191
    %v2375 = vsub.f32 %v2361, %v2373
    %v2376 = vsub.f32 %v2362, %v2374
    %v2377 = vmul.f32 %v2375, %v2375
    %v2378 = vmul.f32 %v2376, %v2376
    %v2379 = vsel %vm184, %v2377, 0.0
    %2380 = vadd.xlane.f32.xlu0 %v2379
    %v2381 = vpop.xlane.xlu0 %2380
    %v2382 = vsel %vm184, %v2378, 0.0
    %2383 = vadd.xlane.f32.xlu0 %v2382
    %v2384 = vpop.xlane.xlu0 %2383
    %v2385 = vmul.f32 %v2381, %v191
    %v2386 = vmul.f32 %v2384, %v191
    %v2387 = vadd.f32 %v2385, 1e-12
    %v2388 = vadd.f32 %v2386, 1e-12
    %v2389 = vrsqrt.pop %v2387
    %v2390 = vrsqrt.pop %v2388
    %v2391 = vmul.f32 %v2375, %v2389
    %v2392 = vmul.f32 %v2376, %v2390
    %v2394 = vlaneseq
    %v2395 = vshrl.u32 %v2394, 7
    %v2396 = vsub.s32 0, %v2395
    %v2397 = vrot.slane %v2364, %v2396
    %v2399 = vmul.f32 %v2391, %v2397
    %v2400 = vmul.f32 %v2392, %v2397
    %v2402 = vlaneseq
    %v2403 = vshrl.u32 %v2402, 7
    %v2404 = vsub.s32 0, %v2403
    %v2405 = vrot.slane %v2366, %v2404
    %v2407 = vadd.f32 %v2399, %v2405
    %v2408 = vadd.f32 %v2400, %v2405
    %v2409 = vld [vmem:[%s14] sm:$0xff]
    %v2410 = vld [vmem:[%s14 + $0x8] sm:$0xff]
    %v2411 = vld [vmem:[%s14 + $0x10] sm:$0xff]
    %v2412 = vld [vmem:[%s14 + $0x18] sm:$0xff]
    %v2413 = vld [vmem:[%s15] sm:$0x1]
    %v2415 = vlaneseq
    %v2416 = vshrl.u32 %v2415, 7
    %v2417 = vsub.s32 0, %v2416
    %v2418 = vrot.slane %v2413, %v2417
    %v2421 = vsel %vm184, %v2407, 0
    %v2424 = vsel %vm184, %v2408, 0
    %2426 = vmatprep.subr.mxu0 0.0
    %2427 = vmatpush1.msra.mxu0 0.0
    %2428 = vmatprep.subr.mxu0 0.0
    %2429 = vmatpush1.msra.mxu0 0.0
    %2430 = vmatprep.subr.mxu0 0.0
    %2431 = vmatpush1.msra.mxu0 0.0
    %2432 = vmatprep.subr.mxu0 0.0
    %2433 = vmatpush1.msra.mxu0 0.0
    %2434 = vmatprep.subr.mxu0 0.0
    %2435 = vmatpush1.msra.mxu0 0.0
    %2436 = vmatprep.subr.mxu0 0.0
    %2437 = vmatpush1.msra.mxu0 0.0
    %2438 = vmatprep.subr.mxu0 0.0
    %2439 = vmatpush1.msra.mxu0 0.0
    %2440 = vmatprep.subr.mxu0 0.0
    %2441 = vmatpush1.msra.mxu0 0.0
    %2442 = vmatprep.subr.mxu0 0.0
    %2443 = vmatpush1.msra.mxu0 0.0
    %2444 = vmatprep.subr.mxu0 0.0
    %2445 = vmatpush1.msra.mxu0 0.0
    %2446 = vmatprep.subr.mxu0 0.0
    %2447 = vmatpush1.msra.mxu0 0.0
    %2448 = vmatprep.subr.mxu0 0.0
    %2449 = vmatpush1.msra.mxu0 0.0
    %2450 = vmatprep.subr.mxu0 0.0
    %2451 = vmatpush1.msra.mxu0 %v2412
    %2452 = vmatprep.subr.mxu0 0.0
    %2453 = vmatpush1.msra.mxu0 %v2411
    %2454 = vmatprep.subr.mxu0 0.0
    %2455 = vmatpush1.msra.mxu0 %v2410
    %2456 = vmatprep.subr.mxu0 0.0
    %2457 = vmatpush1.msra.mxu0 %v2409
    %2458 = vmatprep.subr.mxu0 0.0
    %2459 = vmatpush2.msra.mxu0 0.0
    %2460 = vmatprep.subr.mxu0 0.0
    %2461 = vmatpush2.msra.mxu0 0.0
    %2462 = vmatprep.subr.mxu0 0.0
    %2463 = vmatpush2.msra.mxu0 0.0
    %2464 = vmatprep.subr.mxu0 0.0
    %2465 = vmatpush2.msra.mxu0 0.0
    %2466 = vmatprep.subr.mxu0 0.0
    %2467 = vmatpush2.msra.mxu0 0.0
    %2468 = vmatprep.subr.mxu0 0.0
    %2469 = vmatpush2.msra.mxu0 0.0
    %2470 = vmatprep.subr.mxu0 0.0
    %2471 = vmatpush2.msra.mxu0 0.0
    %2472 = vmatprep.subr.mxu0 0.0
    %2473 = vmatpush2.msra.mxu0 0.0
    %2474 = vmatprep.subr.mxu0 0.0
    %2475 = vmatpush2.msra.mxu0 0.0
    %2476 = vmatprep.subr.mxu0 0.0
    %2477 = vmatpush2.msra.mxu0 0.0
    %2478 = vmatprep.subr.mxu0 0.0
    %2479 = vmatpush2.msra.mxu0 0.0
    %2480 = vmatprep.subr.mxu0 0.0
    %2481 = vmatpush2.msra.mxu0 0.0
    %2482 = vmatprep.subr.mxu0 0.0
    %2483 = vmatpush2.msra.mxu0 0.0
    %2484 = vmatprep.subr.mxu0 0.0
    %2485 = vmatpush2.msra.mxu0 0.0
    %2486 = vmatprep.subr.mxu0 0.0
    %2487 = vmatpush2.msra.mxu0 0.0
    %2488 = vmatprep.subr.mxu0 0.0
    %2489 = vmatpush2.msra.mxu0 0.0
    %2490 = vmatprep.mubr.f32.mxu0 0.0
    %2491 = vmatmul.mubr.f32.gmra.mxu0 %v2421
    %v2492 = vpop.f32.mrf.mxu0
    %v2493 = vadd.f32 %v2418, %v2492
    %v2494 = vpop.f32.mrf.mxu0
    %2495 = vmatprep.mubr.f32.mxu0 0.0
    %2496 = vmatmul.mubr.f32.gmra.mxu0 %v2424
    %v2497 = vpop.f32.mrf.mxu0
    %v2498 = vadd.f32 %v2418, %v2497
    %v2499 = vpop.f32.mrf.mxu0
    %2500 = vdwg.mxu0
    %v2501 = vmul.f32 %v2493, %v2493
    %v2502 = vmul.f32 %v2498, %v2498
    %v2503 = vmul.f32 %v2493, %v2501
    %v2504 = vmul.f32 %v2498, %v2502
    %v2505 = vmul.f32 %v2503, 0.044715
    %v2506 = vmul.f32 %v2504, 0.044715
    %v2507 = vadd.f32 %v2493, %v2505
    %v2508 = vadd.f32 %v2498, %v2506
    %v2509 = vmul.f32 %v2507, 0.7978846
    %v2510 = vmul.f32 %v2508, 0.7978846
    %v2511 = vtanh.pop %v2509
    %v2512 = vtanh.pop %v2510
    %v2513 = vadd.f32 %v2511, 1.0
    %v2514 = vadd.f32 %v2512, 1.0
    %v2515 = vmul.f32 %v2513, 0.5
    %v2516 = vmul.f32 %v2514, 0.5
    %v2517 = vmul.f32 %v2493, %v2515
    %v2518 = vmul.f32 %v2498, %v2516
    %v2519 = vld [vmem:[%s16] sm:$0xff]
    %v2520 = vld [vmem:[%s16 + $0x8] sm:$0xff]
    %v2521 = vld [vmem:[%s16 + $0x10] sm:$0xff]
    %v2522 = vld [vmem:[%s16 + $0x18] sm:$0xff]
    %v2523 = vld [vmem:[%s16 + $0x20] sm:$0xff]
    %v2524 = vld [vmem:[%s16 + $0x28] sm:$0xff]
    %v2525 = vld [vmem:[%s16 + $0x30] sm:$0xff]
    %v2526 = vld [vmem:[%s16 + $0x38] sm:$0xff]
    %v2527 = vld [vmem:[%s16 + $0x40] sm:$0xff]
    %v2528 = vld [vmem:[%s16 + $0x48] sm:$0xff]
    %v2529 = vld [vmem:[%s16 + $0x50] sm:$0xff]
    %v2530 = vld [vmem:[%s16 + $0x58] sm:$0xff]
    %v2531 = vld [vmem:[%s16 + $0x60] sm:$0xff]
    %v2532 = vld [vmem:[%s16 + $0x68] sm:$0xff]
    %v2533 = vld [vmem:[%s16 + $0x70] sm:$0xff]
    %v2534 = vld [vmem:[%s16 + $0x78] sm:$0xff]
    %s2535 = scalar_lea.vmem %s17, 3
    %v2536 = vld [vmem:[%s2535] sm:$0x1]
    %v2538 = vlaneseq
    %v2539 = vshrl.u32 %v2538, 7
    %v2540 = vsub.s32 0, %v2539
    %v2541 = vrot.slane %v2536, %v2540
    %2543 = vmatprep.subr.mxu0 0.0
    %2544 = vmatpush1.msra.mxu0 %v2534
    %2545 = vmatprep.subr.mxu0 0.0
    %2546 = vmatpush1.msra.mxu0 %v2533
    %2547 = vmatprep.subr.mxu0 0.0
    %2548 = vmatpush1.msra.mxu0 %v2532
    %2549 = vmatprep.subr.mxu0 0.0
    %2550 = vmatpush1.msra.mxu0 %v2531
    %2551 = vmatprep.subr.mxu0 0.0
    %2552 = vmatpush1.msra.mxu0 %v2530
    %2553 = vmatprep.subr.mxu0 0.0
    %2554 = vmatpush1.msra.mxu0 %v2529
    %2555 = vmatprep.subr.mxu0 0.0
    %2556 = vmatpush1.msra.mxu0 %v2528
    %2557 = vmatprep.subr.mxu0 0.0
    %2558 = vmatpush1.msra.mxu0 %v2527
    %2559 = vmatprep.subr.mxu0 0.0
    %2560 = vmatpush1.msra.mxu0 %v2526
    %2561 = vmatprep.subr.mxu0 0.0
    %2562 = vmatpush1.msra.mxu0 %v2525
    %2563 = vmatprep.subr.mxu0 0.0
    %2564 = vmatpush1.msra.mxu0 %v2524
    %2565 = vmatprep.subr.mxu0 0.0
    %2566 = vmatpush1.msra.mxu0 %v2523
    %2567 = vmatprep.subr.mxu0 0.0
    %2568 = vmatpush1.msra.mxu0 %v2522
    %2569 = vmatprep.subr.mxu0 0.0
    %2570 = vmatpush1.msra.mxu0 %v2521
    %2571 = vmatprep.subr.mxu0 0.0
    %2572 = vmatpush1.msra.mxu0 %v2520
    %2573 = vmatprep.subr.mxu0 0.0
    %2574 = vmatpush1.msra.mxu0 %v2519
    %2575 = vmatprep.subr.mxu0 0.0
    %2576 = vmatpush2.msra.mxu0 0.0
    %2577 = vmatprep.subr.mxu0 0.0
    %2578 = vmatpush2.msra.mxu0 0.0
    %2579 = vmatprep.subr.mxu0 0.0
    %2580 = vmatpush2.msra.mxu0 0.0
    %2581 = vmatprep.subr.mxu0 0.0
    %2582 = vmatpush2.msra.mxu0 0.0
    %2583 = vmatprep.subr.mxu0 0.0
    %2584 = vmatpush2.msra.mxu0 0.0
    %2585 = vmatprep.subr.mxu0 0.0
    %2586 = vmatpush2.msra.mxu0 0.0
    %2587 = vmatprep.subr.mxu0 0.0
    %2588 = vmatpush2.msra.mxu0 0.0
    %2589 = vmatprep.subr.mxu0 0.0
    %2590 = vmatpush2.msra.mxu0 0.0
    %2591 = vmatprep.subr.mxu0 0.0
    %2592 = vmatpush2.msra.mxu0 0.0
    %2593 = vmatprep.subr.mxu0 0.0
    %2594 = vmatpush2.msra.mxu0 0.0
    %2595 = vmatprep.subr.mxu0 0.0
    %2596 = vmatpush2.msra.mxu0 0.0
    %2597 = vmatprep.subr.mxu0 0.0
    %2598 = vmatpush2.msra.mxu0 0.0
    %2599 = vmatprep.subr.mxu0 0.0
    %2600 = vmatpush2.msra.mxu0 0.0
    %2601 = vmatprep.subr.mxu0 0.0
    %2602 = vmatpush2.msra.mxu0 0.0
    %2603 = vmatprep.subr.mxu0 0.0
    %2604 = vmatpush2.msra.mxu0 0.0
    %2605 = vmatprep.subr.mxu0 0.0
    %2606 = vmatpush2.msra.mxu0 0.0
    %2607 = vmatprep.mubr.f32.mxu0 0.0
    %2608 = vmatmul.mubr.f32.gmra.mxu0 %v2517
    %v2609 = vpop.f32.mrf.mxu0
    %v2610 = vadd.f32 %v2541, %v2609
    %v2611 = vpop.f32.mrf.mxu0
    %2612 = vmatprep.mubr.f32.mxu0 0.0
    %2613 = vmatmul.mubr.f32.gmra.mxu0 %v2518
    %v2614 = vpop.f32.mrf.mxu0
    %v2615 = vadd.f32 %v2541, %v2614
    %v2616 = vpop.f32.mrf.mxu0
    %2617 = vdwg.mxu0
    %v2618 = vadd.f32 %v2407, %v2610
    %v2619 = vadd.f32 %v2408, %v2615
    %s2620 = scalar_lea.vmem %s17, 4
    %v2621 = vld [vmem:[%s2620] sm:$0x1]
    %s2622 = scalar_lea.vmem %s17, 5
    %v2623 = vld [vmem:[%s2622] sm:$0x1]
    %v2624 = vsel %vm184, %v2618, 0.0
    %2625 = vadd.xlane.f32.xlu0 %v2624
    %v2626 = vpop.xlane.xlu0 %2625
    %v2627 = vsel %vm184, %v2619, 0.0
    %2628 = vadd.xlane.f32.xlu0 %v2627
    %v2629 = vpop.xlane.xlu0 %2628
    %v2630 = vmul.f32 %v2626, %v191
    %v2631 = vmul.f32 %v2629, %v191
    %v2632 = vsub.f32 %v2618, %v2630
    %v2633 = vsub.f32 %v2619, %v2631
    %v2634 = vmul.f32 %v2632, %v2632
    %v2635 = vmul.f32 %v2633, %v2633
    %v2636 = vsel %vm184, %v2634, 0.0
    %2637 = vadd.xlane.f32.xlu0 %v2636
    %v2638 = vpop.xlane.xlu0 %2637
    %v2639 = vsel %vm184, %v2635, 0.0
    %2640 = vadd.xlane.f32.xlu0 %v2639
    %v2641 = vpop.xlane.xlu0 %2640
    %v2642 = vmul.f32 %v2638, %v191
    %v2643 = vmul.f32 %v2641, %v191
    %v2644 = vadd.f32 %v2642, 1e-12
    %v2645 = vadd.f32 %v2643, 1e-12
    %v2646 = vrsqrt.pop %v2644
    %v2647 = vrsqrt.pop %v2645
    %v2648 = vmul.f32 %v2632, %v2646
    %v2649 = vmul.f32 %v2633, %v2647
    %v2651 = vlaneseq
    %v2652 = vshrl.u32 %v2651, 7
    %v2653 = vsub.s32 0, %v2652
    %v2654 = vrot.slane %v2621, %v2653
    %v2656 = vmul.f32 %v2648, %v2654
    %v2657 = vmul.f32 %v2649, %v2654
    %v2659 = vlaneseq
    %v2660 = vshrl.u32 %v2659, 7
    %v2661 = vsub.s32 0, %v2660
    %v2662 = vrot.slane %v2623, %v2661
    %v2664 = vadd.f32 %v2656, %v2662
    %v2665 = vadd.f32 %v2657, %v2662
    %v2666 = vld [vmem:[%s5] sm:$0x3]
    %v2668 = vsel %vm424, %v2666, 0
    %2670 = vmatprep.subr.mxu0 0.0
    %2671 = vmatpush1.msra.mxu0 0.0
    %2672 = vmatprep.subr.mxu0 0.0
    %2673 = vmatpush1.msra.mxu0 0.0
    %2674 = vmatprep.subr.mxu0 0.0
    %2675 = vmatpush1.msra.mxu0 0.0
    %2676 = vmatprep.subr.mxu0 0.0
    %2677 = vmatpush1.msra.mxu0 0.0
    %2678 = vmatprep.subr.mxu0 0.0
    %2679 = vmatpush1.msra.mxu0 0.0
    %2680 = vmatprep.subr.mxu0 0.0
    %2681 = vmatpush1.msra.mxu0 0.0
    %2682 = vmatprep.subr.mxu0 0.0
    %2683 = vmatpush1.msra.mxu0 0.0
    %2684 = vmatprep.subr.mxu0 0.0
    %2685 = vmatpush1.msra.mxu0 0.0
    %2686 = vmatprep.subr.mxu0 0.0
    %2687 = vmatpush1.msra.mxu0 0.0
    %2688 = vmatprep.subr.mxu0 0.0
    %2689 = vmatpush1.msra.mxu0 0.0
    %2690 = vmatprep.subr.mxu0 0.0
    %2691 = vmatpush1.msra.mxu0 0.0
    %2692 = vmatprep.subr.mxu0 0.0
    %2693 = vmatpush1.msra.mxu0 0.0
    %2694 = vmatprep.subr.mxu0 0.0
    %2695 = vmatpush1.msra.mxu0 0.0
    %2696 = vmatprep.subr.mxu0 0.0
    %2697 = vmatpush1.msra.mxu0 0.0
    %2698 = vmatprep.subr.mxu0 0.0
    %2699 = vmatpush1.msra.mxu0 %v2665
    %2700 = vmatprep.subr.mxu0 0.0
    %2701 = vmatpush1.msra.mxu0 %v2664
    %2702 = vmatprep.subr.mxu0 0.0
    %2703 = vmatpush2.msra.mxu0 0.0
    %2704 = vmatprep.subr.mxu0 0.0
    %2705 = vmatpush2.msra.mxu0 0.0
    %2706 = vmatprep.subr.mxu0 0.0
    %2707 = vmatpush2.msra.mxu0 0.0
    %2708 = vmatprep.subr.mxu0 0.0
    %2709 = vmatpush2.msra.mxu0 0.0
    %2710 = vmatprep.subr.mxu0 0.0
    %2711 = vmatpush2.msra.mxu0 0.0
    %2712 = vmatprep.subr.mxu0 0.0
    %2713 = vmatpush2.msra.mxu0 0.0
    %2714 = vmatprep.subr.mxu0 0.0
    %2715 = vmatpush2.msra.mxu0 0.0
    %2716 = vmatprep.subr.mxu0 0.0
    %2717 = vmatpush2.msra.mxu0 0.0
    %2718 = vmatprep.subr.mxu0 0.0
    %2719 = vmatpush2.msra.mxu0 0.0
    %2720 = vmatprep.subr.mxu0 0.0
    %2721 = vmatpush2.msra.mxu0 0.0
    %2722 = vmatprep.subr.mxu0 0.0
    %2723 = vmatpush2.msra.mxu0 0.0
    %2724 = vmatprep.subr.mxu0 0.0
    %2725 = vmatpush2.msra.mxu0 0.0
    %2726 = vmatprep.subr.mxu0 0.0
    %2727 = vmatpush2.msra.mxu0 0.0
    %2728 = vmatprep.subr.mxu0 0.0
    %2729 = vmatpush2.msra.mxu0 0.0
    %2730 = vmatprep.subr.mxu0 0.0
    %2731 = vmatpush2.msra.mxu0 0.0
    %2732 = vmatprep.subr.mxu0 0.0
    %2733 = vmatpush2.msra.mxu0 0.0
    %2734 = vmatprep.mubr.f32.mxu0 0.0
    %2735 = vmatmul.mubr.f32.gmra.mxu0 %v2668
    %v2736 = vpop.f32.mrf.mxu0
    %v2737 = vadd.f32 0.0, %v2736
    %v2738 = vpop.f32.mrf.mxu0
    %2739 = vdwg.mxu0
    %v2740 = vld [vmem:[%s18] sm:$0xff]
    %v2741 = vld [vmem:[%s18 + $0x8] sm:$0xff]
    %v2742 = vld [vmem:[%s18 + $0x10] sm:$0xff]
    %v2743 = vld [vmem:[%s18 + $0x18] sm:$0xff]
    %v2744 = vld [vmem:[%s19] sm:$0x1]
    %v2746 = vlaneseq
    %v2747 = vshrl.u32 %v2746, 7
    %v2748 = vsub.s32 0, %v2747
    %v2749 = vrot.slane %v2744, %v2748
    %v2752 = vsel %vm184, %v2737, 0
    %2754 = vmatprep.subr.mxu0 0.0
    %2755 = vmatpush1.msra.mxu0 0.0
    %2756 = vmatprep.subr.mxu0 0.0
    %2757 = vmatpush1.msra.mxu0 0.0
    %2758 = vmatprep.subr.mxu0 0.0
    %2759 = vmatpush1.msra.mxu0 0.0
    %2760 = vmatprep.subr.mxu0 0.0
    %2761 = vmatpush1.msra.mxu0 0.0
    %2762 = vmatprep.subr.mxu0 0.0
    %2763 = vmatpush1.msra.mxu0 0.0
    %2764 = vmatprep.subr.mxu0 0.0
    %2765 = vmatpush1.msra.mxu0 0.0
    %2766 = vmatprep.subr.mxu0 0.0
    %2767 = vmatpush1.msra.mxu0 0.0
    %2768 = vmatprep.subr.mxu0 0.0
    %2769 = vmatpush1.msra.mxu0 0.0
    %2770 = vmatprep.subr.mxu0 0.0
    %2771 = vmatpush1.msra.mxu0 0.0
    %2772 = vmatprep.subr.mxu0 0.0
    %2773 = vmatpush1.msra.mxu0 0.0
    %2774 = vmatprep.subr.mxu0 0.0
    %2775 = vmatpush1.msra.mxu0 0.0
    %2776 = vmatprep.subr.mxu0 0.0
    %2777 = vmatpush1.msra.mxu0 0.0
    %2778 = vmatprep.subr.mxu0 0.0
    %2779 = vmatpush1.msra.mxu0 %v2743
    %2780 = vmatprep.subr.mxu0 0.0
    %2781 = vmatpush1.msra.mxu0 %v2742
    %2782 = vmatprep.subr.mxu0 0.0
    %2783 = vmatpush1.msra.mxu0 %v2741
    %2784 = vmatprep.subr.mxu0 0.0
    %2785 = vmatpush1.msra.mxu0 %v2740
    %2786 = vmatprep.subr.mxu0 0.0
    %2787 = vmatpush2.msra.mxu0 0.0
    %2788 = vmatprep.subr.mxu0 0.0
    %2789 = vmatpush2.msra.mxu0 0.0
    %2790 = vmatprep.subr.mxu0 0.0
    %2791 = vmatpush2.msra.mxu0 0.0
    %2792 = vmatprep.subr.mxu0 0.0
    %2793 = vmatpush2.msra.mxu0 0.0
    %2794 = vmatprep.subr.mxu0 0.0
    %2795 = vmatpush2.msra.mxu0 0.0
    %2796 = vmatprep.subr.mxu0 0.0
    %2797 = vmatpush2.msra.mxu0 0.0
    %2798 = vmatprep.subr.mxu0 0.0
    %2799 = vmatpush2.msra.mxu0 0.0
    %2800 = vmatprep.subr.mxu0 0.0
    %2801 = vmatpush2.msra.mxu0 0.0
    %2802 = vmatprep.subr.mxu0 0.0
    %2803 = vmatpush2.msra.mxu0 0.0
    %2804 = vmatprep.subr.mxu0 0.0
    %2805 = vmatpush2.msra.mxu0 0.0
    %2806 = vmatprep.subr.mxu0 0.0
    %2807 = vmatpush2.msra.mxu0 0.0
    %2808 = vmatprep.subr.mxu0 0.0
    %2809 = vmatpush2.msra.mxu0 0.0
    %2810 = vmatprep.subr.mxu0 0.0
    %2811 = vmatpush2.msra.mxu0 0.0
    %2812 = vmatprep.subr.mxu0 0.0
    %2813 = vmatpush2.msra.mxu0 0.0
    %2814 = vmatprep.subr.mxu0 0.0
    %2815 = vmatpush2.msra.mxu0 0.0
    %2816 = vmatprep.subr.mxu0 0.0
    %2817 = vmatpush2.msra.mxu0 0.0
    %2818 = vmatprep.mubr.f32.mxu0 0.0
    %2819 = vmatmul.mubr.f32.gmra.mxu0 %v2752
    %v2820 = vpop.f32.mrf.mxu0
    %v2821 = vadd.f32 %v2749, %v2820
    %v2822 = vpop.f32.mrf.mxu0
    %2823 = vdwg.mxu0
    %v2824 = vmul.f32 %v2821, 0.1
    %v2825 = vmax.f32 %v2821, %v2824
    %v2826 = vld [vmem:[%s20] sm:$0xff]
    %v2827 = vld [vmem:[%s20 + $0x8] sm:$0xff]
    %v2828 = vld [vmem:[%s20 + $0x10] sm:$0xff]
    %v2829 = vld [vmem:[%s20 + $0x18] sm:$0xff]
    %v2830 = vld [vmem:[%s21] sm:$0x1]
    %v2832 = vlaneseq
    %v2833 = vshrl.u32 %v2832, 7
    %v2834 = vsub.s32 0, %v2833
    %v2835 = vrot.slane %v2830, %v2834
    %v2838 = vsel %vm184, %v2825, 0
    %2840 = vmatprep.subr.mxu0 0.0
    %2841 = vmatpush1.msra.mxu0 0.0
    %2842 = vmatprep.subr.mxu0 0.0
    %2843 = vmatpush1.msra.mxu0 0.0
    %2844 = vmatprep.subr.mxu0 0.0
    %2845 = vmatpush1.msra.mxu0 0.0
    %2846 = vmatprep.subr.mxu0 0.0
    %2847 = vmatpush1.msra.mxu0 0.0
    %2848 = vmatprep.subr.mxu0 0.0
    %2849 = vmatpush1.msra.mxu0 0.0
    %2850 = vmatprep.subr.mxu0 0.0
    %2851 = vmatpush1.msra.mxu0 0.0
    %2852 = vmatprep.subr.mxu0 0.0
    %2853 = vmatpush1.msra.mxu0 0.0
    %2854 = vmatprep.subr.mxu0 0.0
    %2855 = vmatpush1.msra.mxu0 0.0
    %2856 = vmatprep.subr.mxu0 0.0
    %2857 = vmatpush1.msra.mxu0 0.0
    %2858 = vmatprep.subr.mxu0 0.0
    %2859 = vmatpush1.msra.mxu0 0.0
    %2860 = vmatprep.subr.mxu0 0.0
    %2861 = vmatpush1.msra.mxu0 0.0
    %2862 = vmatprep.subr.mxu0 0.0
    %2863 = vmatpush1.msra.mxu0 0.0
    %2864 = vmatprep.subr.mxu0 0.0
    %2865 = vmatpush1.msra.mxu0 %v2829
    %2866 = vmatprep.subr.mxu0 0.0
    %2867 = vmatpush1.msra.mxu0 %v2828
    %2868 = vmatprep.subr.mxu0 0.0
    %2869 = vmatpush1.msra.mxu0 %v2827
    %2870 = vmatprep.subr.mxu0 0.0
    %2871 = vmatpush1.msra.mxu0 %v2826
    %2872 = vmatprep.subr.mxu0 0.0
    %2873 = vmatpush2.msra.mxu0 0.0
    %2874 = vmatprep.subr.mxu0 0.0
    %2875 = vmatpush2.msra.mxu0 0.0
    %2876 = vmatprep.subr.mxu0 0.0
    %2877 = vmatpush2.msra.mxu0 0.0
    %2878 = vmatprep.subr.mxu0 0.0
    %2879 = vmatpush2.msra.mxu0 0.0
    %2880 = vmatprep.subr.mxu0 0.0
    %2881 = vmatpush2.msra.mxu0 0.0
    %2882 = vmatprep.subr.mxu0 0.0
    %2883 = vmatpush2.msra.mxu0 0.0
    %2884 = vmatprep.subr.mxu0 0.0
    %2885 = vmatpush2.msra.mxu0 0.0
    %2886 = vmatprep.subr.mxu0 0.0
    %2887 = vmatpush2.msra.mxu0 0.0
    %2888 = vmatprep.subr.mxu0 0.0
    %2889 = vmatpush2.msra.mxu0 0.0
    %2890 = vmatprep.subr.mxu0 0.0
    %2891 = vmatpush2.msra.mxu0 0.0
    %2892 = vmatprep.subr.mxu0 0.0
    %2893 = vmatpush2.msra.mxu0 0.0
    %2894 = vmatprep.subr.mxu0 0.0
    %2895 = vmatpush2.msra.mxu0 0.0
    %2896 = vmatprep.subr.mxu0 0.0
    %2897 = vmatpush2.msra.mxu0 0.0
    %2898 = vmatprep.subr.mxu0 0.0
    %2899 = vmatpush2.msra.mxu0 0.0
    %2900 = vmatprep.subr.mxu0 0.0
    %2901 = vmatpush2.msra.mxu0 0.0
    %2902 = vmatprep.subr.mxu0 0.0
    %2903 = vmatpush2.msra.mxu0 0.0
    %2904 = vmatprep.mubr.f32.mxu0 0.0
    %2905 = vmatmul.mubr.f32.gmra.mxu0 %v2838
    %v2906 = vpop.f32.mrf.mxu0
    %v2907 = vadd.f32 %v2835, %v2906
    %v2908 = vpop.f32.mrf.mxu0
    %2909 = vdwg.mxu0
    %2910 = vst [vmem:[#allocation2] sm:$0x3] %v2907
    // Predicated region
    $region90: #{tpu_custom_call.1} parent=1 // pred_check
      _
    $region91: #{tpu_custom_call.1} parent=1 // pred_check_branch
      %2912 = sbr.rel (0) target = $region93
    $region92: #{tpu_custom_call.1} parent=1 // pred_region
      %s2914 = ssub.s32 32, 32
      %2915 = vsyncadd [#allocation3], %s2914
      %s2917 = sshll.u32 [#allocation2], 4
      %s2918 = int_to_ptr.vmem [resolvable:$true] %s2917
      %2920 = dma.vmem_to_hbm [thread:$0]  %s2918, 32, %s22, [#allocation3]
    $region93: #{tpu_custom_call.1} parent=1 // pred_fallthru
      _
    // Predicated region
    $region94: #{tpu_custom_call.1} parent=1 // pred_check
      _
    $region95: #{tpu_custom_call.1} parent=1 // pred_check_branch
      %2922 = sbr.rel (0) target = $region97
    $region96: #{tpu_custom_call.1} parent=1 // pred_region
      %2923 = dma.done [#allocation3], 32
    $region97: #{tpu_custom_call.1} parent=1 // pred_fallthru
      _
    %2924 = vsyncpa [#allocation3], 1

</llo_original>
